<compile_context>
chip_gen: v6e
topology: v6e:2x2x1
jax: 0.10.0
libtpu: 0.0.40
codegen_flags: <defaults>
</compile_context>

<pallas_src>
import jax
import jax.numpy as jnp
from jax.experimental import pallas as pl
from jax.experimental.pallas import tpu as pltpu


# --------------------------------------------------------------------------
# Kernel A:  fused  BN1 -> ReLU -> 1x1 conv  (+ BN2 partial statistics)
#   x_ref      : (TR, Cin)        channels-last, flat (N*H*W) input rows
#   scale/shift: (1, Cin)         folded BN1 affine
#   w1_ref     : (Cin, Cinner)    1x1 conv weight (bf16)
#   t_ref      : (TR, Cinner)     stage-1 output (bf16)
#   stats_ref  : (1, 2, Cinner)   per-block [sum(t); sum(t*t)] of the bf16 t
# --------------------------------------------------------------------------
def bn1_relu_conv1x1_kernel(x_ref, scale_ref, shift_ref, w1_ref, t_ref, stats_ref):
    y = jnp.maximum(x_ref[...] * scale_ref[...] + shift_ref[...], 0.0)    # VPU f32
    t = jnp.dot(y.astype(jnp.bfloat16), w1_ref[...],
                preferred_element_type=jnp.float32)                       # MXU
    tb = t.astype(jnp.bfloat16)
    t_ref[...] = tb
    # BN2 partials from the bf16-rounded t (what stage 2 normalizes), stored
    # with a single (2, Cinner) write.
    tf = tb.astype(jnp.float32)
    stats_ref[0] = jnp.concatenate(
        [jnp.sum(tf, axis=0, keepdims=True),
         jnp.sum(tf * tf, axis=0, keepdims=True)], axis=0)


# --------------------------------------------------------------------------
# Kernel B:  fused  BN2 -> ReLU -> 3x3 conv (pad=1), row-tiled with halo.
#   tb_ref     : (1, TH, W, C)    body rows of t for this strip (bf16)
#   tt_ref     : (1, 1, W, C)     row above the strip (clamped; masked at r=0)
#   tbt_ref    : (1, 1, W, C)     row below the strip (clamped; masked at last)
#   scale/shift: (1, C)           folded BN2 affine
#   w2_ref     : (9, G, C)        3x3 weight per tap, k = dy*3 + dx
#   o_ref      : (1, G, TH*W)     residual output strip (channel-major, f32)
#   zs_ref     : (TH+2, W, C)     BN+ReLU'd halo'd strip scratch (bf16)
# --------------------------------------------------------------------------
def bn2_relu_conv3x3_kernel(tb_ref, tt_ref, tbt_ref, scale_ref, shift_ref,
                            w2_ref, o_ref, zs_ref):
    TH = tb_ref.shape[1]
    W = tb_ref.shape[2]
    C = tb_ref.shape[3]
    G = w2_ref.shape[1]
    THW = TH * W

    r = pl.program_id(1)
    nr = pl.num_programs(1)

    s = scale_ref[...]                                   # (1, C)
    b = shift_ref[...]

    # BN2 + ReLU in f32.  Halo rows outside the image must be the conv's zero
    # padding: the clamped halo blocks hold valid-but-wrong rows there, so
    # multiply them away with a scalar 0/1 mask.
    body = jnp.maximum(tb_ref[0].astype(jnp.float32) * s + b, 0.0)        # (TH, W, C)
    top = jnp.maximum(tt_ref[0, 0].astype(jnp.float32) * s + b, 0.0)      # (W, C)
    bot = jnp.maximum(tbt_ref[0, 0].astype(jnp.float32) * s + b, 0.0)     # (W, C)
    top = top * (r > 0).astype(jnp.float32)
    bot = bot * (r < nr - 1).astype(jnp.float32)

    # Every row of the scratch is written each step (no stale data, no
    # re-zeroing); stores are full (W, C) slabs at free leading-dim offsets.
    zs_ref[0, :, :] = top.astype(jnp.bfloat16)
    zs_ref[1:TH + 1, :, :] = body.astype(jnp.bfloat16)
    zs_ref[TH + 1, :, :] = bot.astype(jnp.bfloat16)

    # Column-boundary masks for the dx taps (hoisted out of the tap loop).
    xpos = jax.lax.broadcasted_iota(jnp.int32, (1, TH, W), 2).reshape(1, THW)
    not_left = xpos != 0
    not_right = xpos != (W - 1)

    # 3x3 conv as 9 accumulating (G, C) x (TH*W, C)^T matmuls.  dy is a free
    # leading-dim offset; dx becomes a lane roll of the (G, TH*W) partial with
    # boundary-column masking (no W padding, no im2col slab).
    acc = jnp.zeros((G, THW), jnp.float32)
    for dy in range(3):
        rhs = zs_ref[dy:dy + TH, :, :].reshape(THW, C)                    # bf16
        for dx in range(3):
            p = jax.lax.dot_general(
                w2_ref[3 * dy + dx], rhs,
                dimension_numbers=(((1,), (1,)), ((), ())),
                preferred_element_type=jnp.float32)                       # (G, THW)
            if dx == 0:
                p = jnp.where(not_left, pltpu.roll(p, 1, axis=1), 0.0)
            elif dx == 2:
                p = jnp.where(not_right, pltpu.roll(p, THW - 1, axis=1), 0.0)
            acc = acc + p

    o_ref[0] = acc                       # lane-dense, channel-major (NCHW order)


# --------------------------------------------------------------------------
# Tiling / VMEM helpers
# --------------------------------------------------------------------------
def _row_block(total_rows, bytes_per_row, target_bytes=4 << 20):
    """Largest sublane-aligned row count <= target bytes that divides total."""
    cap = max(8, min(total_rows, target_bytes // max(bytes_per_row, 1)))
    if cap >= total_rows:
        return total_rows
    cap = int(cap) - int(cap) % 8
    for t in range(cap, 7, -8):
        if total_rows % t == 0:
            return t
    return total_rows


def _stage2_row_tile(h, w, min_lanes=512):
    """Row-strip height: divides H, TH*W a multiple of 128 (lane-dense out)."""
    cands = [th for th in range(1, h + 1)
             if h % th == 0 and (th * w) % 128 == 0]
    if not cands:
        return h                          # whole-image fallback (always legal)
    for th in cands:
        if th * w >= min_lanes:
            return th
    return cands[0]


def _vmem_limit(per_step_bytes):
    """Footprint-derived scoped-VMEM limit, clamped to v7x's 64 MiB ceiling."""
    return int(min(max(3 * per_step_bytes, 8 << 20), 64 << 20))


# --------------------------------------------------------------------------
# Glue
# --------------------------------------------------------------------------
@jax.jit
def bottleneck_forward(x_nchw, params):
    eps = 1e-5
    x_nchw = x_nchw.astype(jnp.float32)
    N, Cin, H, W = x_nchw.shape
    HW = H * W

    w1 = params["w1"].astype(jnp.bfloat16)                  # (Cin, Cinner)
    w2_hwio = params["w2"]                                   # (3, 3, Cinner, G)
    Cinner = w1.shape[1]
    G = w2_hwio.shape[3]
    # per-tap weights: (9, G, Cinner), tap k = dy*3 + dx
    w2k = jnp.transpose(w2_hwio, (0, 1, 3, 2)).reshape(9, G, Cinner)
    w2k = w2k.astype(jnp.bfloat16)

    # Layout plumbing in the wrapper: channels-last flat rows for the matmuls.
    # NOTE: production configs should keep Cinner (and ideally Cin) a multiple
    # of 128 so every kernel store stays lane-dense.
    x_cl = jnp.transpose(x_nchw, (0, 2, 3, 1)).reshape(N * HW, Cin)

    # BN1 (training mode, biased variance) folded to per-channel scale/shift.
    m1 = jnp.mean(x_cl, axis=0)
    v1 = jnp.mean(jnp.square(x_cl), axis=0) - jnp.square(m1)
    s1 = params["g1"] * jax.lax.rsqrt(v1 + eps)
    b1 = params["b1"] - m1 * s1

    # ---- stage 1: BN1 + ReLU + 1x1 conv  (+ BN2 partial stats) ----
    TR = _row_block(N * HW, bytes_per_row=4 * Cin + 2 * Cinner)
    NR = (N * HW) // TR
    s1_step = 2 * (TR * Cin * 4 + TR * Cinner * 2 + 2 * Cinner * 4
                   + 2 * Cin * 4 + Cin * Cinner * 2)

    t, stats = pl.pallas_call(
        bn1_relu_conv1x1_kernel,
        grid=(NR,),
        in_specs=[
            pl.BlockSpec((TR, Cin), lambda i: (i, 0)),
            pl.BlockSpec((1, Cin), lambda i: (0, 0)),
            pl.BlockSpec((1, Cin), lambda i: (0, 0)),
            pl.BlockSpec((Cin, Cinner), lambda i: (0, 0)),
        ],
        out_specs=(
            pl.BlockSpec((TR, Cinner), lambda i: (i, 0)),
            pl.BlockSpec((1, 2, Cinner), lambda i: (i, 0, 0)),
        ),
        out_shape=(
            jax.ShapeDtypeStruct((N * HW, Cinner), jnp.bfloat16),
            jax.ShapeDtypeStruct((NR, 2, Cinner), jnp.float32),
        ),
        compiler_params=pltpu.CompilerParams(
            dimension_semantics=("parallel",),
            vmem_limit_bytes=_vmem_limit(s1_step)),
    )(x_cl, s1.reshape(1, Cin), b1.reshape(1, Cin), w1)

    # BN2 scale/shift from the stage-1 partial sums (no extra pass over t).
    cnt = float(N * HW)
    m2 = jnp.sum(stats[:, 0, :], axis=0) / cnt
    v2 = jnp.sum(stats[:, 1, :], axis=0) / cnt - jnp.square(m2)
    s2 = params["g2"] * jax.lax.rsqrt(v2 + eps)
    b2 = params["b2"] - m2 * s2

    # ---- stage 2: BN2 + ReLU + 3x3 conv (pad=1), row-tiled with halo ----
    TH = _stage2_row_tile(H, W)
    RB = H // TH
    t4 = t.reshape(N, H, W, Cinner)                         # free reshape

    strip = (TH + 2) * W * Cinner
    s2_step = (2 * (TH * W * Cinner * 2 + 2 * W * Cinner * 2
                    + 2 * Cinner * 4 + 9 * G * Cinner * 2
                    + G * TH * W * 4)
               + strip * 2 + 8 * strip * 4)                 # f32 temp headroom

    res = pl.pallas_call(
        bn2_relu_conv3x3_kernel,
        grid=(N, RB),
        in_specs=[
            # strip body
            pl.BlockSpec((1, TH, W, Cinner), lambda n, r: (n, r, 0, 0)),
            # 1-row halos; clamped to a valid row, masked in-kernel at edges
            pl.BlockSpec((1, 1, W, Cinner),
                         lambda n, r: (n, jnp.maximum(r * TH - 1, 0), 0, 0)),
            pl.BlockSpec((1, 1, W, Cinner),
                         lambda n, r: (n, jnp.minimum(r * TH + TH, H - 1), 0, 0)),
            pl.BlockSpec((1, Cinner), lambda n, r: (0, 0)),
            pl.BlockSpec((1, Cinner), lambda n, r: (0, 0)),
            pl.BlockSpec((9, G, Cinner), lambda n, r: (0, 0, 0)),
        ],
        out_specs=pl.BlockSpec((1, G, TH * W), lambda n, r: (n, 0, r)),
        out_shape=jax.ShapeDtypeStruct((N, G, HW), jnp.float32),
        scratch_shapes=[pltpu.VMEM((TH + 2, W, Cinner), jnp.bfloat16)],
        compiler_params=pltpu.CompilerParams(
            dimension_semantics=("parallel", "parallel"),
            vmem_limit_bytes=_vmem_limit(s2_step)),
    )(t4, t4, t4, s2.reshape(1, Cinner), b2.reshape(1, Cinner), w2k)

    # Concat with the original x in XLA (kernel no longer copies x through).
    out_res = res.reshape(N, G, H, W)
    return jnp.concatenate([out_res, x_nchw], axis=1)


# --------------------------------------------------------------------------
# Pure-JAX f32 reference (verification only)
# --------------------------------------------------------------------------
def reference_forward(x_nchw, params, eps=1e-5):
    def bn(x, g, b):
        m = x.mean(axis=(0, 2, 3), keepdims=True)
        v = jnp.square(x - m).mean(axis=(0, 2, 3), keepdims=True)
        return (x - m) * jax.lax.rsqrt(v + eps) * g.reshape(1, -1, 1, 1) \
               + b.reshape(1, -1, 1, 1)

    x = x_nchw.astype(jnp.float32)
    y = jnp.maximum(bn(x, params["g1"], params["b1"]), 0.0)
    w1_oihw = jnp.transpose(params["w1"], (1, 0))[:, :, None, None]
    t = jax.lax.conv_general_dilated(
        y, w1_oihw, (1, 1), "VALID",
        dimension_numbers=("NCHW", "OIHW", "NCHW"))
    z = jnp.maximum(bn(t, params["g2"], params["b2"]), 0.0)
    w2_oihw = jnp.transpose(params["w2"], (3, 2, 0, 1))
    r = jax.lax.conv_general_dilated(
        z, w2_oihw, (1, 1), ((1, 1), (1, 1)),
        dimension_numbers=("NCHW", "OIHW", "NCHW"))
    return jnp.concatenate([r, x], axis=1)


# --------------------------------------------------------------------------
if __name__ == "__main__":
    # Bottleneck(in_channels=16, growth_rate=8) -> inner_channels = 32
    N, Cin, H, W = 2, 16, 16, 16
    growth = 8
    Cinner = 4 * growth

    key = jax.random.PRNGKey(0)
    k_x, k_w1, k_w2, k_g1, k_b1, k_g2, k_b2 = jax.random.split(key, 7)

    x = jax.random.normal(k_x, (N, Cin, H, W), jnp.float32)

    params = {
        # conv weights stored in kernel-friendly layouts (f32 masters)
        "w1": 0.1 * jax.random.normal(k_w1, (Cin, Cinner), jnp.float32),
        "w2": 0.1 * jax.random.normal(k_w2, (3, 3, Cinner, growth), jnp.float32),
        # BN affine parameters (non-trivial, deterministic)
        "g1": 1.0 + 0.1 * jax.random.normal(k_g1, (Cin,), jnp.float32),
        "b1": 0.1 * jax.random.normal(k_b1, (Cin,), jnp.float32),
        "g2": 1.0 + 0.1 * jax.random.normal(k_g2, (Cinner,), jnp.float32),
        "b2": 0.1 * jax.random.normal(k_b2, (Cinner,), jnp.float32),
    }

    out = jax.block_until_ready(bottleneck_forward(x, params))
    ref = jax.block_until_ready(reference_forward(x, params))

    assert out.shape == (N, growth + Cin, H, W), out.shape
    # bf16 matmul operands (f32 accumulation) => looser tolerance than pure f32
    max_err = float(jnp.max(jnp.abs(out - ref)))
    assert jnp.allclose(out, ref, atol=5e-2, rtol=5e-2), max_err

    print("KERNEL_OK")
</pallas_src>

<mosaic_0001>
module attributes {stable_mosaic.version = 11 : i64} {
  func.func @bn1_relu_conv1x1_kernel(%arg0: i32, %arg1: memref<512x16xf32, #tpu.memory_space<vmem>>, %arg2: memref<1x16xf32, #tpu.memory_space<vmem>>, %arg3: memref<1x16xf32, #tpu.memory_space<vmem>>, %arg4: memref<16x32xbf16, #tpu.memory_space<vmem>>, %arg5: memref<512x32xbf16, #tpu.memory_space<vmem>>, %arg6: memref<1x2x32xf32, #tpu.memory_space<vmem>>) attributes {dimension_semantics = [#tpu.dimension_semantics<parallel>], iteration_bounds = array<i64: 1>, scalar_prefetch = 0 : i64, scratch_operands = 0 : i64, tpu.core_type = #tpu.core_type<tc>, window_params = [{transform_indices = @transform_0, window_bounds = array<i64: 512, 16>}, {pipeline_mode = #tpu.pipeline_mode<synchronous>, transform_indices = @transform_1, window_bounds = array<i64: 1, 16>}, {pipeline_mode = #tpu.pipeline_mode<synchronous>, transform_indices = @transform_2, window_bounds = array<i64: 1, 16>}, {pipeline_mode = #tpu.pipeline_mode<synchronous>, transform_indices = @transform_3, window_bounds = array<i64: 16, 32>}, {transform_indices = @transform_4, window_bounds = array<i64: 512, 32>}, {transform_indices = @transform_5, window_bounds = array<i64: 1, 2, 32>}]} {
    %c0 = arith.constant 0 : index
    %c0_0 = arith.constant 0 : index
    %0 = vector.load %arg1[%c0, %c0_0] : memref<512x16xf32, #tpu.memory_space<vmem>>, vector<512x16xf32>
    %c0_1 = arith.constant 0 : index
    %c0_2 = arith.constant 0 : index
    %1 = vector.load %arg2[%c0_1, %c0_2] : memref<1x16xf32, #tpu.memory_space<vmem>>, vector<1x16xf32>
    %2 = vector.broadcast %1 : vector<1x16xf32> to vector<512x16xf32>
    %3 = arith.mulf %0, %2 : vector<512x16xf32>
    %c0_3 = arith.constant 0 : index
    %c0_4 = arith.constant 0 : index
    %4 = vector.load %arg3[%c0_3, %c0_4] : memref<1x16xf32, #tpu.memory_space<vmem>>, vector<1x16xf32>
    %5 = vector.broadcast %4 : vector<1x16xf32> to vector<512x16xf32>
    %6 = arith.addf %3, %5 : vector<512x16xf32>
    %cst = arith.constant 0.000000e+00 : f32
    %7 = vector.broadcast %cst : f32 to vector<512x16xf32>
    %8 = arith.maximumf %6, %7 : vector<512x16xf32>
    %9 = arith.truncf %8 : vector<512x16xf32> to vector<512x16xbf16>
    %c0_5 = arith.constant 0 : index
    %c0_6 = arith.constant 0 : index
    %10 = vector.load %arg4[%c0_5, %c0_6] : memref<16x32xbf16, #tpu.memory_space<vmem>>, vector<16x32xbf16>
    %cst_7 = arith.constant dense<0.000000e+00> : vector<512x32xf32>
    %11 = tpu.matmul %9, %10, %cst_7 {dimension_numbers = #tpu.dot_dimension_numbers<[1], [0], [0], [1], [0, 0, 1, 1], [], []>} : vector<512x16xbf16>, vector<16x32xbf16>, vector<512x32xf32> -> vector<512x32xf32>
    %12 = arith.truncf %11 : vector<512x32xf32> to vector<512x32xbf16>
    %c0_8 = arith.constant 0 : index
    %c0_9 = arith.constant 0 : index
    %13 = vector.load %arg5[%c0_8, %c0_9] : memref<512x32xbf16, #tpu.memory_space<vmem>>, vector<512x32xbf16>
    tpu.vector_store %arg5[%c0_8, %c0_9], %12 {strides = array<i32>} : memref<512x32xbf16, #tpu.memory_space<vmem>>, vector<512x32xbf16>,
    %14 = arith.extf %12 : vector<512x32xbf16> to vector<512x32xf32>
    %cst_10 = arith.constant dense<0.000000e+00> : vector<32xf32>
    %15 = vector.multi_reduction <add>, %14, %cst_10 [0] : vector<512x32xf32> to vector<32xf32>
    %16 = vector.shape_cast %15 : vector<32xf32> to vector<1x32xf32>
    %17 = arith.mulf %14, %14 : vector<512x32xf32>
    %cst_11 = arith.constant dense<0.000000e+00> : vector<32xf32>
    %18 = vector.multi_reduction <add>, %17, %cst_11 [0] : vector<512x32xf32> to vector<32xf32>
    %19 = vector.shape_cast %18 : vector<32xf32> to vector<1x32xf32>
    %20 = tpu.concatenate %16, %19 in 0 : vector<1x32xf32>, vector<1x32xf32> -> vector<2x32xf32>
    %c0_12 = arith.constant 0 : index
    %c0_13 = arith.constant 0 : index
    %c0_14 = arith.constant 0 : index
    %21 = vector.load %arg6[%c0_12, %c0_13, %c0_14] : memref<1x2x32xf32, #tpu.memory_space<vmem>>, vector<1x2x32xf32>
    %22 = vector.shape_cast %21 : vector<1x2x32xf32> to vector<2x32xf32>
    %23 = vector.shape_cast %20 : vector<2x32xf32> to vector<1x2x32xf32>
    tpu.vector_store %arg6[%c0_12, %c0_13, %c0_14], %23 {strides = array<i32>} : memref<1x2x32xf32, #tpu.memory_space<vmem>>, vector<1x2x32xf32>,
    return
  }
  func.func @transform_0(%arg0: i32) -> (i32, i32) {
    %c0_i32 = arith.constant 0 : i32
    %c0_i32_0 = arith.constant 0 : i32
    return %arg0, %c0_i32 : i32, i32
  }
  func.func @transform_1(%arg0: i32) -> (i32, i32) {
    %c0_i32 = arith.constant 0 : i32
    %c0_i32_0 = arith.constant 0 : i32
    %c0_i32_1 = arith.constant 0 : i32
    return %c0_i32, %c0_i32_0 : i32, i32
  }
  func.func @transform_2(%arg0: i32) -> (i32, i32) {
    %c0_i32 = arith.constant 0 : i32
    %c0_i32_0 = arith.constant 0 : i32
    %c0_i32_1 = arith.constant 0 : i32
    return %c0_i32, %c0_i32_0 : i32, i32
  }
  func.func @transform_3(%arg0: i32) -> (i32, i32) {
    %c0_i32 = arith.constant 0 : i32
    %c0_i32_0 = arith.constant 0 : i32
    %c0_i32_1 = arith.constant 0 : i32
    return %c0_i32, %c0_i32_0 : i32, i32
  }
  func.func @transform_4(%arg0: i32) -> (i32, i32) {
    %c0_i32 = arith.constant 0 : i32
    %c0_i32_0 = arith.constant 0 : i32
    return %arg0, %c0_i32 : i32, i32
  }
  func.func @transform_5(%arg0: i32) -> (i32, i32, i32) {
    %c0_i32 = arith.constant 0 : i32
    %c0_i32_0 = arith.constant 0 : i32
    %c0_i32_1 = arith.constant 0 : i32
    return %arg0, %c0_i32, %c0_i32_0 : i32, i32, i32
  }
}

module attributes {stable_mosaic.version = 11 : i64} {
  func.func @bn2_relu_conv3x3_kernel(%arg0: i32, %arg1: i32, %arg2: memref<1x8x16x32xbf16, #tpu.memory_space<vmem>>, %arg3: memref<1x1x16x32xbf16, #tpu.memory_space<vmem>>, %arg4: memref<1x1x16x32xbf16, #tpu.memory_space<vmem>>, %arg5: memref<1x32xf32, #tpu.memory_space<vmem>>, %arg6: memref<1x32xf32, #tpu.memory_space<vmem>>, %arg7: memref<9x8x32xbf16, #tpu.memory_space<vmem>>, %arg8: memref<1x8x128xf32, #tpu.memory_space<vmem>>, %arg9: memref<10x16x32xbf16, #tpu.memory_space<vmem>>) attributes {dimension_semantics = [#tpu.dimension_semantics<parallel>, #tpu.dimension_semantics<parallel>], iteration_bounds = array<i64: 2, 2>, scalar_prefetch = 0 : i64, scratch_operands = 1 : i64, tpu.core_type = #tpu.core_type<tc>, window_params = [{transform_indices = @transform_0, window_bounds = array<i64: 1, 8, 16, 32>}, {transform_indices = @transform_1, window_bounds = array<i64: 1, 1, 16, 32>}, {transform_indices = @transform_2, window_bounds = array<i64: 1, 1, 16, 32>}, {pipeline_mode = #tpu.pipeline_mode<synchronous>, transform_indices = @transform_3, window_bounds = array<i64: 1, 32>}, {pipeline_mode = #tpu.pipeline_mode<synchronous>, transform_indices = @transform_4, window_bounds = array<i64: 1, 32>}, {pipeline_mode = #tpu.pipeline_mode<synchronous>, transform_indices = @transform_5, window_bounds = array<i64: 9, 8, 32>}, {transform_indices = @transform_6, window_bounds = array<i64: 1, 8, 128>}]} {
    %c0 = arith.constant 0 : index
    %c0_0 = arith.constant 0 : index
    %0 = vector.load %arg5[%c0, %c0_0] : memref<1x32xf32, #tpu.memory_space<vmem>>, vector<1x32xf32>
    %c0_1 = arith.constant 0 : index
    %c0_2 = arith.constant 0 : index
    %1 = vector.load %arg6[%c0_1, %c0_2] : memref<1x32xf32, #tpu.memory_space<vmem>>, vector<1x32xf32>
    %c0_3 = arith.constant 0 : index
    %c0_4 = arith.constant 0 : index
    %c0_5 = arith.constant 0 : index
    %c0_6 = arith.constant 0 : index
    %2 = vector.load %arg2[%c0_3, %c0_4, %c0_5, %c0_6] : memref<1x8x16x32xbf16, #tpu.memory_space<vmem>>, vector<1x8x16x32xbf16>
    %3 = vector.shape_cast %2 : vector<1x8x16x32xbf16> to vector<8x16x32xbf16>
    %4 = arith.extf %3 : vector<8x16x32xbf16> to vector<8x16x32xf32>
    %5 = vector.shape_cast %0 : vector<1x32xf32> to vector<1x1x32xf32>
    %6 = vector.broadcast %5 : vector<1x1x32xf32> to vector<8x16x32xf32>
    %7 = arith.mulf %4, %6 : vector<8x16x32xf32>
    %8 = vector.shape_cast %1 : vector<1x32xf32> to vector<1x1x32xf32>
    %9 = vector.broadcast %8 : vector<1x1x32xf32> to vector<8x16x32xf32>
    %10 = arith.addf %7, %9 : vector<8x16x32xf32>
    %cst = arith.constant 0.000000e+00 : f32
    %11 = vector.broadcast %cst : f32 to vector<8x16x32xf32>
    %12 = arith.maximumf %10, %11 : vector<8x16x32xf32>
    %c0_7 = arith.constant 0 : index
    %c0_8 = arith.constant 0 : index
    %c0_9 = arith.constant 0 : index
    %c0_10 = arith.constant 0 : index
    %13 = vector.load %arg3[%c0_7, %c0_8, %c0_9, %c0_10] : memref<1x1x16x32xbf16, #tpu.memory_space<vmem>>, vector<1x1x16x32xbf16>
    %14 = vector.shape_cast %13 : vector<1x1x16x32xbf16> to vector<16x32xbf16>
    %15 = arith.extf %14 : vector<16x32xbf16> to vector<16x32xf32>
    %16 = vector.broadcast %0 : vector<1x32xf32> to vector<16x32xf32>
    %17 = arith.mulf %15, %16 : vector<16x32xf32>
    %18 = vector.broadcast %1 : vector<1x32xf32> to vector<16x32xf32>
    %19 = arith.addf %17, %18 : vector<16x32xf32>
    %cst_11 = arith.constant 0.000000e+00 : f32
    %20 = vector.broadcast %cst_11 : f32 to vector<16x32xf32>
    %21 = arith.maximumf %19, %20 : vector<16x32xf32>
    %c0_12 = arith.constant 0 : index
    %c0_13 = arith.constant 0 : index
    %c0_14 = arith.constant 0 : index
    %c0_15 = arith.constant 0 : index
    %22 = vector.load %arg4[%c0_12, %c0_13, %c0_14, %c0_15] : memref<1x1x16x32xbf16, #tpu.memory_space<vmem>>, vector<1x1x16x32xbf16>
    %23 = vector.shape_cast %22 : vector<1x1x16x32xbf16> to vector<16x32xbf16>
    %24 = arith.extf %23 : vector<16x32xbf16> to vector<16x32xf32>
    %25 = vector.broadcast %0 : vector<1x32xf32> to vector<16x32xf32>
    %26 = arith.mulf %24, %25 : vector<16x32xf32>
    %27 = vector.broadcast %1 : vector<1x32xf32> to vector<16x32xf32>
    %28 = arith.addf %26, %27 : vector<16x32xf32>
    %cst_16 = arith.constant 0.000000e+00 : f32
    %29 = vector.broadcast %cst_16 : f32 to vector<16x32xf32>
    %30 = arith.maximumf %28, %29 : vector<16x32xf32>
    %c0_i32 = arith.constant 0 : i32
    %31 = arith.cmpi sgt, %arg1, %c0_i32 : i32
    %32 = arith.extui %31 : i1 to i32
    %33 = arith.sitofp %32 : i32 to f32
    %34 = vector.broadcast %33 : f32 to vector<16x32xf32>
    %35 = arith.mulf %21, %34 : vector<16x32xf32>
    %c1_i32 = arith.constant 1 : i32
    %36 = arith.cmpi slt, %arg1, %c1_i32 : i32
    %37 = arith.extui %36 : i1 to i32
    %38 = arith.sitofp %37 : i32 to f32
    %39 = vector.broadcast %38 : f32 to vector<16x32xf32>
    %40 = arith.mulf %30, %39 : vector<16x32xf32>
    %41 = arith.truncf %35 : vector<16x32xf32> to vector<16x32xbf16>
    %c0_17 = arith.constant 0 : index
    %c0_18 = arith.constant 0 : index
    %c0_19 = arith.constant 0 : index
    %42 = vector.load %arg9[%c0_17, %c0_18, %c0_19] : memref<10x16x32xbf16, #tpu.memory_space<vmem>>, vector<1x16x32xbf16>
    %43 = vector.shape_cast %42 : vector<1x16x32xbf16> to vector<16x32xbf16>
    %44 = vector.shape_cast %41 : vector<16x32xbf16> to vector<1x16x32xbf16>
    tpu.vector_store %arg9[%c0_17, %c0_18, %c0_19], %44 {strides = array<i32>} : memref<10x16x32xbf16, #tpu.memory_space<vmem>>, vector<1x16x32xbf16>,
    %45 = arith.truncf %12 : vector<8x16x32xf32> to vector<8x16x32xbf16>
    %c1 = arith.constant 1 : index
    %c0_20 = arith.constant 0 : index
    %c0_21 = arith.constant 0 : index
    %46 = vector.load %arg9[%c1, %c0_20, %c0_21] : memref<10x16x32xbf16, #tpu.memory_space<vmem>>, vector<8x16x32xbf16>
    tpu.vector_store %arg9[%c1, %c0_20, %c0_21], %45 {strides = array<i32>} : memref<10x16x32xbf16, #tpu.memory_space<vmem>>, vector<8x16x32xbf16>,
    %47 = arith.truncf %40 : vector<16x32xf32> to vector<16x32xbf16>
    %c9 = arith.constant 9 : index
    %c0_22 = arith.constant 0 : index
    %c0_23 = arith.constant 0 : index
    %48 = vector.load %arg9[%c9, %c0_22, %c0_23] : memref<10x16x32xbf16, #tpu.memory_space<vmem>>, vector<1x16x32xbf16>
    %49 = vector.shape_cast %48 : vector<1x16x32xbf16> to vector<16x32xbf16>
    %50 = vector.shape_cast %47 : vector<16x32xbf16> to vector<1x16x32xbf16>
    tpu.vector_store %arg9[%c9, %c0_22, %c0_23], %50 {strides = array<i32>} : memref<10x16x32xbf16, #tpu.memory_space<vmem>>, vector<1x16x32xbf16>,
    %51 = tpu.iota {dimensions = array<i32: 2>} : vector<1x8x16xi32>
    %52 = vector.shape_cast %51 : vector<1x8x16xi32> to vector<1x128xi32>
    %c0_i32_24 = arith.constant 0 : i32
    %53 = vector.broadcast %c0_i32_24 : i32 to vector<1x128xi32>
    %54 = arith.cmpi ne, %52, %53 : vector<1x128xi32>
    %c15_i32 = arith.constant 15 : i32
    %55 = vector.broadcast %c15_i32 : i32 to vector<1x128xi32>
    %56 = arith.cmpi ne, %52, %55 : vector<1x128xi32>
    %cst_25 = arith.constant 0.000000e+00 : f32
    %57 = vector.broadcast %cst_25 : f32 to vector<8x128xf32>
    %c0_26 = arith.constant 0 : index
    %c0_27 = arith.constant 0 : index
    %c0_28 = arith.constant 0 : index
    %58 = vector.load %arg9[%c0_26, %c0_27, %c0_28] : memref<10x16x32xbf16, #tpu.memory_space<vmem>>, vector<8x16x32xbf16>
    %59 = vector.shape_cast %58 : vector<8x16x32xbf16> to vector<128x32xbf16>
    %c0_29 = arith.constant 0 : index
    %c0_30 = arith.constant 0 : index
    %c0_31 = arith.constant 0 : index
    %60 = vector.load %arg7[%c0_29, %c0_30, %c0_31] : memref<9x8x32xbf16, #tpu.memory_space<vmem>>, vector<1x8x32xbf16>
    %61 = vector.shape_cast %60 : vector<1x8x32xbf16> to vector<8x32xbf16>
    %cst_32 = arith.constant dense<0.000000e+00> : vector<8x128xf32>
    %62 = tpu.matmul %61, %59, %cst_32 {dimension_numbers = #tpu.dot_dimension_numbers<[1], [1], [0], [0], [0, 0, 1, 0], [], []>} : vector<8x32xbf16>, vector<128x32xbf16>, vector<8x128xf32> -> vector<8x128xf32>
    %c1_i32_33 = arith.constant 1 : i32
    %63 = tpu.dynamic_rotate %62 by %c1_i32_33 dim 1 : vector<8x128xf32>, i32 -> vector<8x128xf32>
    %cst_34 = arith.constant 0.000000e+00 : f32
    %64 = vector.shape_cast %54 : vector<1x128xi1> to vector<1x128xi1>
    %65 = vector.broadcast %64 : vector<1x128xi1> to vector<8x128xi1>
    %66 = vector.broadcast %cst_34 : f32 to vector<8x128xf32>
    %67 = arith.select %65, %63, %66 : vector<8x128xi1>, vector<8x128xf32>
    %68 = arith.addf %57, %67 : vector<8x128xf32>
    %c1_35 = arith.constant 1 : index
    %c0_36 = arith.constant 0 : index
    %c0_37 = arith.constant 0 : index
    %69 = vector.load %arg7[%c1_35, %c0_36, %c0_37] : memref<9x8x32xbf16, #tpu.memory_space<vmem>>, vector<1x8x32xbf16>
    %70 = vector.shape_cast %69 : vector<1x8x32xbf16> to vector<8x32xbf16>
    %cst_38 = arith.constant dense<0.000000e+00> : vector<8x128xf32>
    %71 = tpu.matmul %70, %59, %cst_38 {dimension_numbers = #tpu.dot_dimension_numbers<[1], [1], [0], [0], [0, 0, 1, 0], [], []>} : vector<8x32xbf16>, vector<128x32xbf16>, vector<8x128xf32> -> vector<8x128xf32>
    %72 = arith.addf %68, %71 : vector<8x128xf32>
    %c2 = arith.constant 2 : index
    %c0_39 = arith.constant 0 : index
    %c0_40 = arith.constant 0 : index
    %73 = vector.load %arg7[%c2, %c0_39, %c0_40] : memref<9x8x32xbf16, #tpu.memory_space<vmem>>, vector<1x8x32xbf16>
    %74 = vector.shape_cast %73 : vector<1x8x32xbf16> to vector<8x32xbf16>
    %cst_41 = arith.constant dense<0.000000e+00> : vector<8x128xf32>
    %75 = tpu.matmul %74, %59, %cst_41 {dimension_numbers = #tpu.dot_dimension_numbers<[1], [1], [0], [0], [0, 0, 1, 0], [], []>} : vector<8x32xbf16>, vector<128x32xbf16>, vector<8x128xf32> -> vector<8x128xf32>
    %c127_i32 = arith.constant 127 : i32
    %76 = tpu.dynamic_rotate %75 by %c127_i32 dim 1 : vector<8x128xf32>, i32 -> vector<8x128xf32>
    %cst_42 = arith.constant 0.000000e+00 : f32
    %77 = vector.shape_cast %56 : vector<1x128xi1> to vector<1x128xi1>
    %78 = vector.broadcast %77 : vector<1x128xi1> to vector<8x128xi1>
    %79 = vector.broadcast %cst_42 : f32 to vector<8x128xf32>
    %80 = arith.select %78, %76, %79 : vector<8x128xi1>, vector<8x128xf32>
    %81 = arith.addf %72, %80 : vector<8x128xf32>
    %c1_43 = arith.constant 1 : index
    %c0_44 = arith.constant 0 : index
    %c0_45 = arith.constant 0 : index
    %82 = vector.load %arg9[%c1_43, %c0_44, %c0_45] : memref<10x16x32xbf16, #tpu.memory_space<vmem>>, vector<8x16x32xbf16>
    %83 = vector.shape_cast %82 : vector<8x16x32xbf16> to vector<128x32xbf16>
    %c3 = arith.constant 3 : index
    %c0_46 = arith.constant 0 : index
    %c0_47 = arith.constant 0 : index
    %84 = vector.load %arg7[%c3, %c0_46, %c0_47] : memref<9x8x32xbf16, #tpu.memory_space<vmem>>, vector<1x8x32xbf16>
    %85 = vector.shape_cast %84 : vector<1x8x32xbf16> to vector<8x32xbf16>
    %cst_48 = arith.constant dense<0.000000e+00> : vector<8x128xf32>
    %86 = tpu.matmul %85, %83, %cst_48 {dimension_numbers = #tpu.dot_dimension_numbers<[1], [1], [0], [0], [0, 0, 1, 0], [], []>} : vector<8x32xbf16>, vector<128x32xbf16>, vector<8x128xf32> -> vector<8x128xf32>
    %c1_i32_49 = arith.constant 1 : i32
    %87 = tpu.dynamic_rotate %86 by %c1_i32_49 dim 1 : vector<8x128xf32>, i32 -> vector<8x128xf32>
    %cst_50 = arith.constant 0.000000e+00 : f32
    %88 = vector.shape_cast %54 : vector<1x128xi1> to vector<1x128xi1>
    %89 = vector.broadcast %88 : vector<1x128xi1> to vector<8x128xi1>
    %90 = vector.broadcast %cst_50 : f32 to vector<8x128xf32>
    %91 = arith.select %89, %87, %90 : vector<8x128xi1>, vector<8x128xf32>
    %92 = arith.addf %81, %91 : vector<8x128xf32>
    %c4 = arith.constant 4 : index
    %c0_51 = arith.constant 0 : index
    %c0_52 = arith.constant 0 : index
    %93 = vector.load %arg7[%c4, %c0_51, %c0_52] : memref<9x8x32xbf16, #tpu.memory_space<vmem>>, vector<1x8x32xbf16>
    %94 = vector.shape_cast %93 : vector<1x8x32xbf16> to vector<8x32xbf16>
    %cst_53 = arith.constant dense<0.000000e+00> : vector<8x128xf32>
    %95 = tpu.matmul %94, %83, %cst_53 {dimension_numbers = #tpu.dot_dimension_numbers<[1], [1], [0], [0], [0, 0, 1, 0], [], []>} : vector<8x32xbf16>, vector<128x32xbf16>, vector<8x128xf32> -> vector<8x128xf32>
    %96 = arith.addf %92, %95 : vector<8x128xf32>
    %c5 = arith.constant 5 : index
    %c0_54 = arith.constant 0 : index
    %c0_55 = arith.constant 0 : index
    %97 = vector.load %arg7[%c5, %c0_54, %c0_55] : memref<9x8x32xbf16, #tpu.memory_space<vmem>>, vector<1x8x32xbf16>
    %98 = vector.shape_cast %97 : vector<1x8x32xbf16> to vector<8x32xbf16>
    %cst_56 = arith.constant dense<0.000000e+00> : vector<8x128xf32>
    %99 = tpu.matmul %98, %83, %cst_56 {dimension_numbers = #tpu.dot_dimension_numbers<[1], [1], [0], [0], [0, 0, 1, 0], [], []>} : vector<8x32xbf16>, vector<128x32xbf16>, vector<8x128xf32> -> vector<8x128xf32>
    %c127_i32_57 = arith.constant 127 : i32
    %100 = tpu.dynamic_rotate %99 by %c127_i32_57 dim 1 : vector<8x128xf32>, i32 -> vector<8x128xf32>
    %cst_58 = arith.constant 0.000000e+00 : f32
    %101 = vector.shape_cast %56 : vector<1x128xi1> to vector<1x128xi1>
    %102 = vector.broadcast %101 : vector<1x128xi1> to vector<8x128xi1>
    %103 = vector.broadcast %cst_58 : f32 to vector<8x128xf32>
    %104 = arith.select %102, %100, %103 : vector<8x128xi1>, vector<8x128xf32>
    %105 = arith.addf %96, %104 : vector<8x128xf32>
    %c2_59 = arith.constant 2 : index
    %c0_60 = arith.constant 0 : index
    %c0_61 = arith.constant 0 : index
    %106 = vector.load %arg9[%c2_59, %c0_60, %c0_61] : memref<10x16x32xbf16, #tpu.memory_space<vmem>>, vector<8x16x32xbf16>
    %107 = vector.shape_cast %106 : vector<8x16x32xbf16> to vector<128x32xbf16>
    %c6 = arith.constant 6 : index
    %c0_62 = arith.constant 0 : index
    %c0_63 = arith.constant 0 : index
    %108 = vector.load %arg7[%c6, %c0_62, %c0_63] : memref<9x8x32xbf16, #tpu.memory_space<vmem>>, vector<1x8x32xbf16>
    %109 = vector.shape_cast %108 : vector<1x8x32xbf16> to vector<8x32xbf16>
    %cst_64 = arith.constant dense<0.000000e+00> : vector<8x128xf32>
    %110 = tpu.matmul %109, %107, %cst_64 {dimension_numbers = #tpu.dot_dimension_numbers<[1], [1], [0], [0], [0, 0, 1, 0], [], []>} : vector<8x32xbf16>, vector<128x32xbf16>, vector<8x128xf32> -> vector<8x128xf32>
    %c1_i32_65 = arith.constant 1 : i32
    %111 = tpu.dynamic_rotate %110 by %c1_i32_65 dim 1 : vector<8x128xf32>, i32 -> vector<8x128xf32>
    %cst_66 = arith.constant 0.000000e+00 : f32
    %112 = vector.shape_cast %54 : vector<1x128xi1> to vector<1x128xi1>
    %113 = vector.broadcast %112 : vector<1x128xi1> to vector<8x128xi1>
    %114 = vector.broadcast %cst_66 : f32 to vector<8x128xf32>
    %115 = arith.select %113, %111, %114 : vector<8x128xi1>, vector<8x128xf32>
    %116 = arith.addf %105, %115 : vector<8x128xf32>
    %c7 = arith.constant 7 : index
    %c0_67 = arith.constant 0 : index
    %c0_68 = arith.constant 0 : index
    %117 = vector.load %arg7[%c7, %c0_67, %c0_68] : memref<9x8x32xbf16, #tpu.memory_space<vmem>>, vector<1x8x32xbf16>
    %118 = vector.shape_cast %117 : vector<1x8x32xbf16> to vector<8x32xbf16>
    %cst_69 = arith.constant dense<0.000000e+00> : vector<8x128xf32>
    %119 = tpu.matmul %118, %107, %cst_69 {dimension_numbers = #tpu.dot_dimension_numbers<[1], [1], [0], [0], [0, 0, 1, 0], [], []>} : vector<8x32xbf16>, vector<128x32xbf16>, vector<8x128xf32> -> vector<8x128xf32>
    %120 = arith.addf %116, %119 : vector<8x128xf32>
    %c8 = arith.constant 8 : index
    %c0_70 = arith.constant 0 : index
    %c0_71 = arith.constant 0 : index
    %121 = vector.load %arg7[%c8, %c0_70, %c0_71] : memref<9x8x32xbf16, #tpu.memory_space<vmem>>, vector<1x8x32xbf16>
    %122 = vector.shape_cast %121 : vector<1x8x32xbf16> to vector<8x32xbf16>
    %cst_72 = arith.constant dense<0.000000e+00> : vector<8x128xf32>
    %123 = tpu.matmul %122, %107, %cst_72 {dimension_numbers = #tpu.dot_dimension_numbers<[1], [1], [0], [0], [0, 0, 1, 0], [], []>} : vector<8x32xbf16>, vector<128x32xbf16>, vector<8x128xf32> -> vector<8x128xf32>
    %c127_i32_73 = arith.constant 127 : i32
    %124 = tpu.dynamic_rotate %123 by %c127_i32_73 dim 1 : vector<8x128xf32>, i32 -> vector<8x128xf32>
    %cst_74 = arith.constant 0.000000e+00 : f32
    %125 = vector.shape_cast %56 : vector<1x128xi1> to vector<1x128xi1>
    %126 = vector.broadcast %125 : vector<1x128xi1> to vector<8x128xi1>
    %127 = vector.broadcast %cst_74 : f32 to vector<8x128xf32>
    %128 = arith.select %126, %124, %127 : vector<8x128xi1>, vector<8x128xf32>
    %129 = arith.addf %120, %128 : vector<8x128xf32>
    %c0_75 = arith.constant 0 : index
    %c0_76 = arith.constant 0 : index
    %c0_77 = arith.constant 0 : index
    %130 = vector.load %arg8[%c0_75, %c0_76, %c0_77] : memref<1x8x128xf32, #tpu.memory_space<vmem>>, vector<1x8x128xf32>
    %131 = vector.shape_cast %130 : vector<1x8x128xf32> to vector<8x128xf32>
    %132 = vector.shape_cast %129 : vector<8x128xf32> to vector<1x8x128xf32>
    tpu.vector_store %arg8[%c0_75, %c0_76, %c0_77], %132 {strides = array<i32>} : memref<1x8x128xf32, #tpu.memory_space<vmem>>, vector<1x8x128xf32>,
    return
  }
  func.func @transform_0(%arg0: i32, %arg1: i32) -> (i32, i32, i32, i32) {
    %c0_i32 = arith.constant 0 : i32
    %c0_i32_0 = arith.constant 0 : i32
    %c0_i32_1 = arith.constant 0 : i32
    return %arg0, %arg1, %c0_i32, %c0_i32_0 : i32, i32, i32, i32
  }
  func.func @transform_1(%arg0: i32, %arg1: i32) -> (i32, i32, i32, i32) {
    %c8_i32 = arith.constant 8 : i32
    %0 = arith.muli %arg1, %c8_i32 : i32
    %c1_i32 = arith.constant 1 : i32
    %1 = arith.subi %0, %c1_i32 : i32
    %c0_i32 = arith.constant 0 : i32
    %2 = arith.maxsi %1, %c0_i32 : i32
    %c0_i32_0 = arith.constant 0 : i32
    %c0_i32_1 = arith.constant 0 : i32
    %c0_i32_2 = arith.constant 0 : i32
    return %arg0, %2, %c0_i32_0, %c0_i32_1 : i32, i32, i32, i32
  }
  func.func @transform_2(%arg0: i32, %arg1: i32) -> (i32, i32, i32, i32) {
    %c8_i32 = arith.constant 8 : i32
    %0 = arith.muli %arg1, %c8_i32 : i32
    %c8_i32_0 = arith.constant 8 : i32
    %1 = arith.addi %0, %c8_i32_0 : i32
    %c15_i32 = arith.constant 15 : i32
    %2 = arith.minsi %1, %c15_i32 : i32
    %c0_i32 = arith.constant 0 : i32
    %c0_i32_1 = arith.constant 0 : i32
    %c0_i32_2 = arith.constant 0 : i32
    return %arg0, %2, %c0_i32, %c0_i32_1 : i32, i32, i32, i32
  }
  func.func @transform_3(%arg0: i32, %arg1: i32) -> (i32, i32) {
    %c0_i32 = arith.constant 0 : i32
    %c0_i32_0 = arith.constant 0 : i32
    %c0_i32_1 = arith.constant 0 : i32
    return %c0_i32, %c0_i32_0 : i32, i32
  }
  func.func @transform_4(%arg0: i32, %arg1: i32) -> (i32, i32) {
    %c0_i32 = arith.constant 0 : i32
    %c0_i32_0 = arith.constant 0 : i32
    %c0_i32_1 = arith.constant 0 : i32
    return %c0_i32, %c0_i32_0 : i32, i32
  }
  func.func @transform_5(%arg0: i32, %arg1: i32) -> (i32, i32, i32) {
    %c0_i32 = arith.constant 0 : i32
    %c0_i32_0 = arith.constant 0 : i32
    %c0_i32_1 = arith.constant 0 : i32
    %c0_i32_2 = arith.constant 0 : i32
    return %c0_i32, %c0_i32_0, %c0_i32_1 : i32, i32, i32
  }
  func.func @transform_6(%arg0: i32, %arg1: i32) -> (i32, i32, i32) {
    %c0_i32 = arith.constant 0 : i32
    %c0_i32_0 = arith.constant 0 : i32
    return %arg0, %c0_i32, %arg1 : i32, i32, i32
  }
}

</mosaic_0001>

<llo_original>
// kernel: bottleneck_forward.2
$region0: #{bottleneck_forward.2}
  #allocation0 [shape = 'u32[]', space=smem, size = 0x4, offset = 0x4, fixed_abs, tag = 'smem constant byte address 0x4 - core index']
  #allocation1 [shape = 'u32[144,128]{1,0:T(1,128)}', space=vmem, size = 0x12000, scoped, tag = 'internal scratch']
  %s0 = inlined_call_operand.vmem [shape: f32[512,16], index: 0, kind: input, shape index: {}]
  %s1 = inlined_call_operand.vmem [shape: f32[1,16], index: 1, kind: input, shape index: {}]
  %s2 = inlined_call_operand.vmem [shape: f32[1,16], index: 2, kind: input, shape index: {}]
  %s3 = inlined_call_operand.vmem [shape: bf16[16,32], index: 3, kind: input, shape index: {}]
  %s4 = inlined_call_operand.vmem [shape: bf16[512,32], index: 4, kind: output, shape index: {0}]
  %s5 = inlined_call_operand.vmem [shape: f32[1,2,32], index: 5, kind: output, shape index: {1}]
  %6 = xla_tuple %s4, %s5
  %s7 = sld [smem:[#allocation0]]
  $region34: #{bottleneck_forward.2} parent=0
    _
  %s9 = ssub.s32 1, %s7
  %s10 = scalar_select 0, %s9, %s7
  // Predicated region
  $region2: #{bottleneck_forward.2} parent=0 // pred_check
    _
  $region3: #{bottleneck_forward.2} parent=0 // pred_check_branch
    %12 = sbr.rel (0) target = $region5
  $region4: #{bottleneck_forward.2} parent=0 // pred_region
    _
  $region5: #{bottleneck_forward.2} parent=0 // pred_fallthru
    _
  // Predicated region
  $region6: #{bottleneck_forward.2} parent=0 // pred_check
    _
  $region7: #{bottleneck_forward.2} parent=0 // pred_check_branch
    %14 = sbr.rel (0) target = $region9
  $region8: #{bottleneck_forward.2} parent=0 // pred_region
    _
  $region9: #{bottleneck_forward.2} parent=0 // pred_fallthru
    _
  // Predicated region
  $region10: #{bottleneck_forward.2} parent=0 // pred_check
    _
  $region11: #{bottleneck_forward.2} parent=0 // pred_check_branch
    %16 = sbr.rel (0) target = $region13
  $region12: #{bottleneck_forward.2} parent=0 // pred_region
    _
  $region13: #{bottleneck_forward.2} parent=0 // pred_fallthru
    _
  // Predicated region
  $region14: #{bottleneck_forward.2} parent=0 // pred_check
    _
  $region15: #{bottleneck_forward.2} parent=0 // pred_check_branch
    %18 = sbr.rel (0) target = $region17
  $region16: #{bottleneck_forward.2} parent=0 // pred_region
    _
  $region17: #{bottleneck_forward.2} parent=0 // pred_fallthru
    _
  %v20 = vld [vmem:[%s0] sm:$0xff]
  %v21 = vld [vmem:[%s0 + $0x8] sm:$0xff]
  %v22 = vld [vmem:[%s0 + $0x10] sm:$0xff]
  %v23 = vld [vmem:[%s0 + $0x18] sm:$0xff]
  %v24 = vld [vmem:[%s0 + $0x20] sm:$0xff]
  %v25 = vld [vmem:[%s0 + $0x28] sm:$0xff]
  %v26 = vld [vmem:[%s0 + $0x30] sm:$0xff]
  %v27 = vld [vmem:[%s0 + $0x38] sm:$0xff]
  %v28 = vld [vmem:[%s0 + $0x40] sm:$0xff]
  %v29 = vld [vmem:[%s0 + $0x48] sm:$0xff]
  %v30 = vld [vmem:[%s0 + $0x50] sm:$0xff]
  %v31 = vld [vmem:[%s0 + $0x58] sm:$0xff]
  %v32 = vld [vmem:[%s0 + $0x60] sm:$0xff]
  %v33 = vld [vmem:[%s0 + $0x68] sm:$0xff]
  %v34 = vld [vmem:[%s0 + $0x70] sm:$0xff]
  %v35 = vld [vmem:[%s0 + $0x78] sm:$0xff]
  %v36 = vld [vmem:[%s0 + $0x80] sm:$0xff]
  %v37 = vld [vmem:[%s0 + $0x88] sm:$0xff]
  %v38 = vld [vmem:[%s0 + $0x90] sm:$0xff]
  %v39 = vld [vmem:[%s0 + $0x98] sm:$0xff]
  %v40 = vld [vmem:[%s0 + $0xa0] sm:$0xff]
  %v41 = vld [vmem:[%s0 + $0xa8] sm:$0xff]
  %v42 = vld [vmem:[%s0 + $0xb0] sm:$0xff]
  %v43 = vld [vmem:[%s0 + $0xb8] sm:$0xff]
  %v44 = vld [vmem:[%s0 + $0xc0] sm:$0xff]
  %v45 = vld [vmem:[%s0 + $0xc8] sm:$0xff]
  %v46 = vld [vmem:[%s0 + $0xd0] sm:$0xff]
  %v47 = vld [vmem:[%s0 + $0xd8] sm:$0xff]
  %v48 = vld [vmem:[%s0 + $0xe0] sm:$0xff]
  %v49 = vld [vmem:[%s0 + $0xe8] sm:$0xff]
  %v50 = vld [vmem:[%s0 + $0xf0] sm:$0xff]
  %v51 = vld [vmem:[%s0 + $0xf8] sm:$0xff]
  %v52 = vld [vmem:[%s0 + $0x100] sm:$0xff]
  %v53 = vld [vmem:[%s0 + $0x108] sm:$0xff]
  %v54 = vld [vmem:[%s0 + $0x110] sm:$0xff]
  %v55 = vld [vmem:[%s0 + $0x118] sm:$0xff]
  %v56 = vld [vmem:[%s0 + $0x120] sm:$0xff]
  %v57 = vld [vmem:[%s0 + $0x128] sm:$0xff]
  %v58 = vld [vmem:[%s0 + $0x130] sm:$0xff]
  %v59 = vld [vmem:[%s0 + $0x138] sm:$0xff]
  %v60 = vld [vmem:[%s0 + $0x140] sm:$0xff]
  %v61 = vld [vmem:[%s0 + $0x148] sm:$0xff]
  %v62 = vld [vmem:[%s0 + $0x150] sm:$0xff]
  %v63 = vld [vmem:[%s0 + $0x158] sm:$0xff]
  %v64 = vld [vmem:[%s0 + $0x160] sm:$0xff]
  %v65 = vld [vmem:[%s0 + $0x168] sm:$0xff]
  %v66 = vld [vmem:[%s0 + $0x170] sm:$0xff]
  %v67 = vld [vmem:[%s0 + $0x178] sm:$0xff]
  %v68 = vld [vmem:[%s0 + $0x180] sm:$0xff]
  %v69 = vld [vmem:[%s0 + $0x188] sm:$0xff]
  %v70 = vld [vmem:[%s0 + $0x190] sm:$0xff]
  %v71 = vld [vmem:[%s0 + $0x198] sm:$0xff]
  %v72 = vld [vmem:[%s0 + $0x1a0] sm:$0xff]
  %v73 = vld [vmem:[%s0 + $0x1a8] sm:$0xff]
  %v74 = vld [vmem:[%s0 + $0x1b0] sm:$0xff]
  %v75 = vld [vmem:[%s0 + $0x1b8] sm:$0xff]
  %v76 = vld [vmem:[%s0 + $0x1c0] sm:$0xff]
  %v77 = vld [vmem:[%s0 + $0x1c8] sm:$0xff]
  %v78 = vld [vmem:[%s0 + $0x1d0] sm:$0xff]
  %v79 = vld [vmem:[%s0 + $0x1d8] sm:$0xff]
  %v80 = vld [vmem:[%s0 + $0x1e0] sm:$0xff]
  %v81 = vld [vmem:[%s0 + $0x1e8] sm:$0xff]
  %v82 = vld [vmem:[%s0 + $0x1f0] sm:$0xff]
  %v83 = vld [vmem:[%s0 + $0x1f8] sm:$0xff]
  %v84 = vld [vmem:[%s1] sm:$0x1]
  %v86 = vlaneseq
  %v87 = vshrl.u32 %v86, 7
  %v88 = vsub.s32 0, %v87
  %v89 = vrot.slane %v84, %v88
  %v91 = vmul.f32 %v20, %v89
  %v92 = vmul.f32 %v21, %v89
  %v93 = vmul.f32 %v22, %v89
  %v94 = vmul.f32 %v23, %v89
  %v95 = vmul.f32 %v24, %v89
  %v96 = vmul.f32 %v25, %v89
  %v97 = vmul.f32 %v26, %v89
  %v98 = vmul.f32 %v27, %v89
  %v99 = vmul.f32 %v28, %v89
  %v100 = vmul.f32 %v29, %v89
  %v101 = vmul.f32 %v30, %v89
  %v102 = vmul.f32 %v31, %v89
  %v103 = vmul.f32 %v32, %v89
  %v104 = vmul.f32 %v33, %v89
  %v105 = vmul.f32 %v34, %v89
  %v106 = vmul.f32 %v35, %v89
  %v107 = vmul.f32 %v36, %v89
  %v108 = vmul.f32 %v37, %v89
  %v109 = vmul.f32 %v38, %v89
  %v110 = vmul.f32 %v39, %v89
  %v111 = vmul.f32 %v40, %v89
  %v112 = vmul.f32 %v41, %v89
  %v113 = vmul.f32 %v42, %v89
  %v114 = vmul.f32 %v43, %v89
  %v115 = vmul.f32 %v44, %v89
  %v116 = vmul.f32 %v45, %v89
  %v117 = vmul.f32 %v46, %v89
  %v118 = vmul.f32 %v47, %v89
  %v119 = vmul.f32 %v48, %v89
  %v120 = vmul.f32 %v49, %v89
  %v121 = vmul.f32 %v50, %v89
  %v122 = vmul.f32 %v51, %v89
  %v123 = vmul.f32 %v52, %v89
  %v124 = vmul.f32 %v53, %v89
  %v125 = vmul.f32 %v54, %v89
  %v126 = vmul.f32 %v55, %v89
  %v127 = vmul.f32 %v56, %v89
  %v128 = vmul.f32 %v57, %v89
  %v129 = vmul.f32 %v58, %v89
  %v130 = vmul.f32 %v59, %v89
  %v131 = vmul.f32 %v60, %v89
  %v132 = vmul.f32 %v61, %v89
  %v133 = vmul.f32 %v62, %v89
  %v134 = vmul.f32 %v63, %v89
  %v135 = vmul.f32 %v64, %v89
  %v136 = vmul.f32 %v65, %v89
  %v137 = vmul.f32 %v66, %v89
  %v138 = vmul.f32 %v67, %v89
  %v139 = vmul.f32 %v68, %v89
  %v140 = vmul.f32 %v69, %v89
  %v141 = vmul.f32 %v70, %v89
  %v142 = vmul.f32 %v71, %v89
  %v143 = vmul.f32 %v72, %v89
  %v144 = vmul.f32 %v73, %v89
  %v145 = vmul.f32 %v74, %v89
  %v146 = vmul.f32 %v75, %v89
  %v147 = vmul.f32 %v76, %v89
  %v148 = vmul.f32 %v77, %v89
  %v149 = vmul.f32 %v78, %v89
  %v150 = vmul.f32 %v79, %v89
  %v151 = vmul.f32 %v80, %v89
  %v152 = vmul.f32 %v81, %v89
  %v153 = vmul.f32 %v82, %v89
  %v154 = vmul.f32 %v83, %v89
  %v155 = vld [vmem:[%s2] sm:$0x1]
  %v157 = vlaneseq
  %v158 = vshrl.u32 %v157, 7
  %v159 = vsub.s32 0, %v158
  %v160 = vrot.slane %v155, %v159
  %v162 = vadd.f32 %v91, %v160
  %v163 = vadd.f32 %v92, %v160
  %v164 = vadd.f32 %v93, %v160
  %v165 = vadd.f32 %v94, %v160
  %v166 = vadd.f32 %v95, %v160
  %v167 = vadd.f32 %v96, %v160
  %v168 = vadd.f32 %v97, %v160
  %v169 = vadd.f32 %v98, %v160
  %v170 = vadd.f32 %v99, %v160
  %v171 = vadd.f32 %v100, %v160
  %v172 = vadd.f32 %v101, %v160
  %v173 = vadd.f32 %v102, %v160
  %v174 = vadd.f32 %v103, %v160
  %v175 = vadd.f32 %v104, %v160
  %v176 = vadd.f32 %v105, %v160
  %v177 = vadd.f32 %v106, %v160
  %v178 = vadd.f32 %v107, %v160
  %v179 = vadd.f32 %v108, %v160
  %v180 = vadd.f32 %v109, %v160
  %v181 = vadd.f32 %v110, %v160
  %v182 = vadd.f32 %v111, %v160
  %v183 = vadd.f32 %v112, %v160
  %v184 = vadd.f32 %v113, %v160
  %v185 = vadd.f32 %v114, %v160
  %v186 = vadd.f32 %v115, %v160
  %v187 = vadd.f32 %v116, %v160
  %v188 = vadd.f32 %v117, %v160
  %v189 = vadd.f32 %v118, %v160
  %v190 = vadd.f32 %v119, %v160
  %v191 = vadd.f32 %v120, %v160
  %v192 = vadd.f32 %v121, %v160
  %v193 = vadd.f32 %v122, %v160
  %v194 = vadd.f32 %v123, %v160
  %v195 = vadd.f32 %v124, %v160
  %v196 = vadd.f32 %v125, %v160
  %v197 = vadd.f32 %v126, %v160
  %v198 = vadd.f32 %v127, %v160
  %v199 = vadd.f32 %v128, %v160
  %v200 = vadd.f32 %v129, %v160
  %v201 = vadd.f32 %v130, %v160
  %v202 = vadd.f32 %v131, %v160
  %v203 = vadd.f32 %v132, %v160
  %v204 = vadd.f32 %v133, %v160
  %v205 = vadd.f32 %v134, %v160
  %v206 = vadd.f32 %v135, %v160
  %v207 = vadd.f32 %v136, %v160
  %v208 = vadd.f32 %v137, %v160
  %v209 = vadd.f32 %v138, %v160
  %v210 = vadd.f32 %v139, %v160
  %v211 = vadd.f32 %v140, %v160
  %v212 = vadd.f32 %v141, %v160
  %v213 = vadd.f32 %v142, %v160
  %v214 = vadd.f32 %v143, %v160
  %v215 = vadd.f32 %v144, %v160
  %v216 = vadd.f32 %v145, %v160
  %v217 = vadd.f32 %v146, %v160
  %v218 = vadd.f32 %v147, %v160
  %v219 = vadd.f32 %v148, %v160
  %v220 = vadd.f32 %v149, %v160
  %v221 = vadd.f32 %v150, %v160
  %v222 = vadd.f32 %v151, %v160
  %v223 = vadd.f32 %v152, %v160
  %v224 = vadd.f32 %v153, %v160
  %v225 = vadd.f32 %v154, %v160
  %v226 = vmax.f32 %v162, 0.0
  %v227 = vmax.f32 %v163, 0.0
  %v228 = vmax.f32 %v164, 0.0
  %v229 = vmax.f32 %v165, 0.0
  %v230 = vmax.f32 %v166, 0.0
  %v231 = vmax.f32 %v167, 0.0
  %v232 = vmax.f32 %v168, 0.0
  %v233 = vmax.f32 %v169, 0.0
  %v234 = vmax.f32 %v170, 0.0
  %v235 = vmax.f32 %v171, 0.0
  %v236 = vmax.f32 %v172, 0.0
  %v237 = vmax.f32 %v173, 0.0
  %v238 = vmax.f32 %v174, 0.0
  %v239 = vmax.f32 %v175, 0.0
  %v240 = vmax.f32 %v176, 0.0
  %v241 = vmax.f32 %v177, 0.0
  %v242 = vmax.f32 %v178, 0.0
  %v243 = vmax.f32 %v179, 0.0
  %v244 = vmax.f32 %v180, 0.0
  %v245 = vmax.f32 %v181, 0.0
  %v246 = vmax.f32 %v182, 0.0
  %v247 = vmax.f32 %v183, 0.0
  %v248 = vmax.f32 %v184, 0.0
  %v249 = vmax.f32 %v185, 0.0
  %v250 = vmax.f32 %v186, 0.0
  %v251 = vmax.f32 %v187, 0.0
  %v252 = vmax.f32 %v188, 0.0
  %v253 = vmax.f32 %v189, 0.0
  %v254 = vmax.f32 %v190, 0.0
  %v255 = vmax.f32 %v191, 0.0
  %v256 = vmax.f32 %v192, 0.0
  %v257 = vmax.f32 %v193, 0.0
  %v258 = vmax.f32 %v194, 0.0
  %v259 = vmax.f32 %v195, 0.0
  %v260 = vmax.f32 %v196, 0.0
  %v261 = vmax.f32 %v197, 0.0
  %v262 = vmax.f32 %v198, 0.0
  %v263 = vmax.f32 %v199, 0.0
  %v264 = vmax.f32 %v200, 0.0
  %v265 = vmax.f32 %v201, 0.0
  %v266 = vmax.f32 %v202, 0.0
  %v267 = vmax.f32 %v203, 0.0
  %v268 = vmax.f32 %v204, 0.0
  %v269 = vmax.f32 %v205, 0.0
  %v270 = vmax.f32 %v206, 0.0
  %v271 = vmax.f32 %v207, 0.0
  %v272 = vmax.f32 %v208, 0.0
  %v273 = vmax.f32 %v209, 0.0
  %v274 = vmax.f32 %v210, 0.0
  %v275 = vmax.f32 %v211, 0.0
  %v276 = vmax.f32 %v212, 0.0
  %v277 = vmax.f32 %v213, 0.0
  %v278 = vmax.f32 %v214, 0.0
  %v279 = vmax.f32 %v215, 0.0
  %v280 = vmax.f32 %v216, 0.0
  %v281 = vmax.f32 %v217, 0.0
  %v282 = vmax.f32 %v218, 0.0
  %v283 = vmax.f32 %v219, 0.0
  %v284 = vmax.f32 %v220, 0.0
  %v285 = vmax.f32 %v221, 0.0
  %v286 = vmax.f32 %v222, 0.0
  %v287 = vmax.f32 %v223, 0.0
  %v288 = vmax.f32 %v224, 0.0
  %v289 = vmax.f32 %v225, 0.0
  %v290 = vpack.c.bf16 %v227, %v226
  %v291 = vpack.c.bf16 %v229, %v228
  %v292 = vpack.c.bf16 %v231, %v230
  %v293 = vpack.c.bf16 %v233, %v232
  %v294 = vpack.c.bf16 %v235, %v234
  %v295 = vpack.c.bf16 %v237, %v236
  %v296 = vpack.c.bf16 %v239, %v238
  %v297 = vpack.c.bf16 %v241, %v240
  %v298 = vpack.c.bf16 %v243, %v242
  %v299 = vpack.c.bf16 %v245, %v244
  %v300 = vpack.c.bf16 %v247, %v246
  %v301 = vpack.c.bf16 %v249, %v248
  %v302 = vpack.c.bf16 %v251, %v250
  %v303 = vpack.c.bf16 %v253, %v252
  %v304 = vpack.c.bf16 %v255, %v254
  %v305 = vpack.c.bf16 %v257, %v256
  %v306 = vpack.c.bf16 %v259, %v258
  %v307 = vpack.c.bf16 %v261, %v260
  %v308 = vpack.c.bf16 %v263, %v262
  %v309 = vpack.c.bf16 %v265, %v264
  %v310 = vpack.c.bf16 %v267, %v266
  %v311 = vpack.c.bf16 %v269, %v268
  %v312 = vpack.c.bf16 %v271, %v270
  %v313 = vpack.c.bf16 %v273, %v272
  %v314 = vpack.c.bf16 %v275, %v274
  %v315 = vpack.c.bf16 %v277, %v276
  %v316 = vpack.c.bf16 %v279, %v278
  %v317 = vpack.c.bf16 %v281, %v280
  %v318 = vpack.c.bf16 %v283, %v282
  %v319 = vpack.c.bf16 %v285, %v284
  %v320 = vpack.c.bf16 %v287, %v286
  %v321 = vpack.c.bf16 %v289, %v288
  %v322 = vld [vmem:[%s3] sm:$0xf]
  %v323 = vld [vmem:[%s3 + $0x4] sm:$0xf]
  %v326 = vunpack.c.l.b16 %v322
  %v327 = vunpack.c.l.b16 %v323
  %v328 = vpack.c.b16 %v327, %v326
  %vm330 = vcmask 130048
  %v332 = vsel %vm330, %v290, 0
  %v335 = vsel %vm330, %v291, 0
  %v338 = vsel %vm330, %v292, 0
  %v341 = vsel %vm330, %v293, 0
  %v344 = vsel %vm330, %v294, 0
  %v347 = vsel %vm330, %v295, 0
  %v350 = vsel %vm330, %v296, 0
  %v353 = vsel %vm330, %v297, 0
  %v356 = vsel %vm330, %v298, 0
  %v359 = vsel %vm330, %v299, 0
  %v362 = vsel %vm330, %v300, 0
  %v365 = vsel %vm330, %v301, 0
  %v368 = vsel %vm330, %v302, 0
  %v371 = vsel %vm330, %v303, 0
  %v374 = vsel %vm330, %v304, 0
  %v377 = vsel %vm330, %v305, 0
  %v380 = vsel %vm330, %v306, 0
  %v383 = vsel %vm330, %v307, 0
  %v386 = vsel %vm330, %v308, 0
  %v389 = vsel %vm330, %v309, 0
  %v392 = vsel %vm330, %v310, 0
  %v395 = vsel %vm330, %v311, 0
  %v398 = vsel %vm330, %v312, 0
  %v401 = vsel %vm330, %v313, 0
  %v404 = vsel %vm330, %v314, 0
  %v407 = vsel %vm330, %v315, 0
  %v410 = vsel %vm330, %v316, 0
  %v413 = vsel %vm330, %v317, 0
  %v416 = vsel %vm330, %v318, 0
  %v419 = vsel %vm330, %v319, 0
  %v422 = vsel %vm330, %v320, 0
  %v425 = vsel %vm330, %v321, 0
  %427 = vmatprep.subr.bf16.mxu0 0
  %428 = vmatpush1.bf16.msra.mxu0 0
  %429 = vmatprep.subr.bf16.mxu0 0
  %430 = vmatpush1.bf16.msra.mxu0 0
  %431 = vmatprep.subr.bf16.mxu0 0
  %432 = vmatpush1.bf16.msra.mxu0 0
  %433 = vmatprep.subr.bf16.mxu0 0
  %434 = vmatpush1.bf16.msra.mxu0 0
  %435 = vmatprep.subr.bf16.mxu0 0
  %436 = vmatpush1.bf16.msra.mxu0 0
  %437 = vmatprep.subr.bf16.mxu0 0
  %438 = vmatpush1.bf16.msra.mxu0 0
  %439 = vmatprep.subr.bf16.mxu0 0
  %440 = vmatpush1.bf16.msra.mxu0 0
  %441 = vmatprep.subr.bf16.mxu0 0
  %442 = vmatpush1.bf16.msra.mxu0 %v328
  %443 = vmatprep.subr.bf16.mxu0 0
  %444 = vmatpush2.bf16.msra.mxu0 0
  %445 = vmatprep.subr.bf16.mxu0 0
  %446 = vmatpush2.bf16.msra.mxu0 0
  %447 = vmatprep.subr.bf16.mxu0 0
  %448 = vmatpush2.bf16.msra.mxu0 0
  %449 = vmatprep.subr.bf16.mxu0 0
  %450 = vmatpush2.bf16.msra.mxu0 0
  %451 = vmatprep.subr.bf16.mxu0 0
  %452 = vmatpush2.bf16.msra.mxu0 0
  %453 = vmatprep.subr.bf16.mxu0 0
  %454 = vmatpush2.bf16.msra.mxu0 0
  %455 = vmatprep.subr.bf16.mxu0 0
  %456 = vmatpush2.bf16.msra.mxu0 0
  %457 = vmatprep.subr.bf16.mxu0 0
  %458 = vmatpush2.bf16.msra.mxu0 0
  %459 = vmatprep.mubr.bf16.mxu0 0
  %460 = vmatmul.mubr.bf16.gmra.mxu0 %v332
  %v461 = vpop.f32.mrf.mxu0
  %v462 = vadd.f32 0.0, %v461
  %v463 = vpop.f32.mrf.mxu0
  %v464 = vpop.f32.mrf.mxu0
  %v465 = vadd.f32 0.0, %v464
  %v466 = vpop.f32.mrf.mxu0
  %467 = vmatprep.mubr.bf16.mxu0 0
  %468 = vmatmul.mubr.bf16.gmra.mxu0 %v335
  %v469 = vpop.f32.mrf.mxu0
  %v470 = vadd.f32 0.0, %v469
  %v471 = vpop.f32.mrf.mxu0
  %v472 = vpop.f32.mrf.mxu0
  %v473 = vadd.f32 0.0, %v472
  %v474 = vpop.f32.mrf.mxu0
  %475 = vmatprep.mubr.bf16.mxu0 0
  %476 = vmatmul.mubr.bf16.gmra.mxu0 %v338
  %v477 = vpop.f32.mrf.mxu0
  %v478 = vadd.f32 0.0, %v477
  %v479 = vpop.f32.mrf.mxu0
  %v480 = vpop.f32.mrf.mxu0
  %v481 = vadd.f32 0.0, %v480
  %v482 = vpop.f32.mrf.mxu0
  %483 = vmatprep.mubr.bf16.mxu0 0
  %484 = vmatmul.mubr.bf16.gmra.mxu0 %v341
  %v485 = vpop.f32.mrf.mxu0
  %v486 = vadd.f32 0.0, %v485
  %v487 = vpop.f32.mrf.mxu0
  %v488 = vpop.f32.mrf.mxu0
  %v489 = vadd.f32 0.0, %v488
  %v490 = vpop.f32.mrf.mxu0
  %491 = vmatprep.mubr.bf16.mxu0 0
  %492 = vmatmul.mubr.bf16.gmra.mxu0 %v344
  %v493 = vpop.f32.mrf.mxu0
  %v494 = vadd.f32 0.0, %v493
  %v495 = vpop.f32.mrf.mxu0
  %v496 = vpop.f32.mrf.mxu0
  %v497 = vadd.f32 0.0, %v496
  %v498 = vpop.f32.mrf.mxu0
  %499 = vmatprep.mubr.bf16.mxu0 0
  %500 = vmatmul.mubr.bf16.gmra.mxu0 %v347
  %v501 = vpop.f32.mrf.mxu0
  %v502 = vadd.f32 0.0, %v501
  %v503 = vpop.f32.mrf.mxu0
  %v504 = vpop.f32.mrf.mxu0
  %v505 = vadd.f32 0.0, %v504
  %v506 = vpop.f32.mrf.mxu0
  %507 = vmatprep.mubr.bf16.mxu0 0
  %508 = vmatmul.mubr.bf16.gmra.mxu0 %v350
  %v509 = vpop.f32.mrf.mxu0
  %v510 = vadd.f32 0.0, %v509
  %v511 = vpop.f32.mrf.mxu0
  %v512 = vpop.f32.mrf.mxu0
  %v513 = vadd.f32 0.0, %v512
  %v514 = vpop.f32.mrf.mxu0
  %515 = vmatprep.mubr.bf16.mxu0 0
  %516 = vmatmul.mubr.bf16.gmra.mxu0 %v353
  %v517 = vpop.f32.mrf.mxu0
  %v518 = vadd.f32 0.0, %v517
  %v519 = vpop.f32.mrf.mxu0
  %v520 = vpop.f32.mrf.mxu0
  %v521 = vadd.f32 0.0, %v520
  %v522 = vpop.f32.mrf.mxu0
  %523 = vmatprep.mubr.bf16.mxu0 0
  %524 = vmatmul.mubr.bf16.gmra.mxu0 %v356
  %v525 = vpop.f32.mrf.mxu0
  %v526 = vadd.f32 0.0, %v525
  %v527 = vpop.f32.mrf.mxu0
  %v528 = vpop.f32.mrf.mxu0
  %v529 = vadd.f32 0.0, %v528
  %v530 = vpop.f32.mrf.mxu0
  %531 = vmatprep.mubr.bf16.mxu0 0
  %532 = vmatmul.mubr.bf16.gmra.mxu0 %v359
  %v533 = vpop.f32.mrf.mxu0
  %v534 = vadd.f32 0.0, %v533
  %v535 = vpop.f32.mrf.mxu0
  %v536 = vpop.f32.mrf.mxu0
  %v537 = vadd.f32 0.0, %v536
  %v538 = vpop.f32.mrf.mxu0
  %539 = vmatprep.mubr.bf16.mxu0 0
  %540 = vmatmul.mubr.bf16.gmra.mxu0 %v362
  %v541 = vpop.f32.mrf.mxu0
  %v542 = vadd.f32 0.0, %v541
  %v543 = vpop.f32.mrf.mxu0
  %v544 = vpop.f32.mrf.mxu0
  %v545 = vadd.f32 0.0, %v544
  %v546 = vpop.f32.mrf.mxu0
  %547 = vmatprep.mubr.bf16.mxu0 0
  %548 = vmatmul.mubr.bf16.gmra.mxu0 %v365
  %v549 = vpop.f32.mrf.mxu0
  %v550 = vadd.f32 0.0, %v549
  %v551 = vpop.f32.mrf.mxu0
  %v552 = vpop.f32.mrf.mxu0
  %v553 = vadd.f32 0.0, %v552
  %v554 = vpop.f32.mrf.mxu0
  %555 = vmatprep.mubr.bf16.mxu0 0
  %556 = vmatmul.mubr.bf16.gmra.mxu0 %v368
  %v557 = vpop.f32.mrf.mxu0
  %v558 = vadd.f32 0.0, %v557
  %v559 = vpop.f32.mrf.mxu0
  %v560 = vpop.f32.mrf.mxu0
  %v561 = vadd.f32 0.0, %v560
  %v562 = vpop.f32.mrf.mxu0
  %563 = vmatprep.mubr.bf16.mxu0 0
  %564 = vmatmul.mubr.bf16.gmra.mxu0 %v371
  %v565 = vpop.f32.mrf.mxu0
  %v566 = vadd.f32 0.0, %v565
  %v567 = vpop.f32.mrf.mxu0
  %v568 = vpop.f32.mrf.mxu0
  %v569 = vadd.f32 0.0, %v568
  %v570 = vpop.f32.mrf.mxu0
  %571 = vmatprep.mubr.bf16.mxu0 0
  %572 = vmatmul.mubr.bf16.gmra.mxu0 %v374
  %v573 = vpop.f32.mrf.mxu0
  %v574 = vadd.f32 0.0, %v573
  %v575 = vpop.f32.mrf.mxu0
  %v576 = vpop.f32.mrf.mxu0
  %v577 = vadd.f32 0.0, %v576
  %v578 = vpop.f32.mrf.mxu0
  %579 = vmatprep.mubr.bf16.mxu0 0
  %580 = vmatmul.mubr.bf16.gmra.mxu0 %v377
  %v581 = vpop.f32.mrf.mxu0
  %v582 = vadd.f32 0.0, %v581
  %v583 = vpop.f32.mrf.mxu0
  %v584 = vpop.f32.mrf.mxu0
  %v585 = vadd.f32 0.0, %v584
  %v586 = vpop.f32.mrf.mxu0
  %587 = vmatprep.mubr.bf16.mxu0 0
  %588 = vmatmul.mubr.bf16.gmra.mxu0 %v380
  %v589 = vpop.f32.mrf.mxu0
  %v590 = vadd.f32 0.0, %v589
  %v591 = vpop.f32.mrf.mxu0
  %v592 = vpop.f32.mrf.mxu0
  %v593 = vadd.f32 0.0, %v592
  %v594 = vpop.f32.mrf.mxu0
  %595 = vmatprep.mubr.bf16.mxu0 0
  %596 = vmatmul.mubr.bf16.gmra.mxu0 %v383
  %v597 = vpop.f32.mrf.mxu0
  %v598 = vadd.f32 0.0, %v597
  %v599 = vpop.f32.mrf.mxu0
  %v600 = vpop.f32.mrf.mxu0
  %v601 = vadd.f32 0.0, %v600
  %v602 = vpop.f32.mrf.mxu0
  %603 = vmatprep.mubr.bf16.mxu0 0
  %604 = vmatmul.mubr.bf16.gmra.mxu0 %v386
  %v605 = vpop.f32.mrf.mxu0
  %v606 = vadd.f32 0.0, %v605
  %v607 = vpop.f32.mrf.mxu0
  %v608 = vpop.f32.mrf.mxu0
  %v609 = vadd.f32 0.0, %v608
  %v610 = vpop.f32.mrf.mxu0
  %611 = vmatprep.mubr.bf16.mxu0 0
  %612 = vmatmul.mubr.bf16.gmra.mxu0 %v389
  %v613 = vpop.f32.mrf.mxu0
  %v614 = vadd.f32 0.0, %v613
  %v615 = vpop.f32.mrf.mxu0
  %v616 = vpop.f32.mrf.mxu0
  %v617 = vadd.f32 0.0, %v616
  %v618 = vpop.f32.mrf.mxu0
  %619 = vmatprep.mubr.bf16.mxu0 0
  %620 = vmatmul.mubr.bf16.gmra.mxu0 %v392
  %v621 = vpop.f32.mrf.mxu0
  %v622 = vadd.f32 0.0, %v621
  %v623 = vpop.f32.mrf.mxu0
  %v624 = vpop.f32.mrf.mxu0
  %v625 = vadd.f32 0.0, %v624
  %v626 = vpop.f32.mrf.mxu0
  %627 = vmatprep.mubr.bf16.mxu0 0
  %628 = vmatmul.mubr.bf16.gmra.mxu0 %v395
  %v629 = vpop.f32.mrf.mxu0
  %v630 = vadd.f32 0.0, %v629
  %v631 = vpop.f32.mrf.mxu0
  %v632 = vpop.f32.mrf.mxu0
  %v633 = vadd.f32 0.0, %v632
  %v634 = vpop.f32.mrf.mxu0
  %635 = vmatprep.mubr.bf16.mxu0 0
  %636 = vmatmul.mubr.bf16.gmra.mxu0 %v398
  %v637 = vpop.f32.mrf.mxu0
  %v638 = vadd.f32 0.0, %v637
  %v639 = vpop.f32.mrf.mxu0
  %v640 = vpop.f32.mrf.mxu0
  %v641 = vadd.f32 0.0, %v640
  %v642 = vpop.f32.mrf.mxu0
  %643 = vmatprep.mubr.bf16.mxu0 0
  %644 = vmatmul.mubr.bf16.gmra.mxu0 %v401
  %v645 = vpop.f32.mrf.mxu0
  %v646 = vadd.f32 0.0, %v645
  %v647 = vpop.f32.mrf.mxu0
  %v648 = vpop.f32.mrf.mxu0
  %v649 = vadd.f32 0.0, %v648
  %v650 = vpop.f32.mrf.mxu0
  %651 = vmatprep.mubr.bf16.mxu0 0
  %652 = vmatmul.mubr.bf16.gmra.mxu0 %v404
  %v653 = vpop.f32.mrf.mxu0
  %v654 = vadd.f32 0.0, %v653
  %v655 = vpop.f32.mrf.mxu0
  %v656 = vpop.f32.mrf.mxu0
  %v657 = vadd.f32 0.0, %v656
  %v658 = vpop.f32.mrf.mxu0
  %659 = vmatprep.mubr.bf16.mxu0 0
  %660 = vmatmul.mubr.bf16.gmra.mxu0 %v407
  %v661 = vpop.f32.mrf.mxu0
  %v662 = vadd.f32 0.0, %v661
  %v663 = vpop.f32.mrf.mxu0
  %v664 = vpop.f32.mrf.mxu0
  %v665 = vadd.f32 0.0, %v664
  %v666 = vpop.f32.mrf.mxu0
  %667 = vmatprep.mubr.bf16.mxu0 0
  %668 = vmatmul.mubr.bf16.gmra.mxu0 %v410
  %v669 = vpop.f32.mrf.mxu0
  %v670 = vadd.f32 0.0, %v669
  %v671 = vpop.f32.mrf.mxu0
  %v672 = vpop.f32.mrf.mxu0
  %v673 = vadd.f32 0.0, %v672
  %v674 = vpop.f32.mrf.mxu0
  %675 = vmatprep.mubr.bf16.mxu0 0
  %676 = vmatmul.mubr.bf16.gmra.mxu0 %v413
  %v677 = vpop.f32.mrf.mxu0
  %v678 = vadd.f32 0.0, %v677
  %v679 = vpop.f32.mrf.mxu0
  %v680 = vpop.f32.mrf.mxu0
  %v681 = vadd.f32 0.0, %v680
  %v682 = vpop.f32.mrf.mxu0
  %683 = vmatprep.mubr.bf16.mxu0 0
  %684 = vmatmul.mubr.bf16.gmra.mxu0 %v416
  %v685 = vpop.f32.mrf.mxu0
  %v686 = vadd.f32 0.0, %v685
  %v687 = vpop.f32.mrf.mxu0
  %v688 = vpop.f32.mrf.mxu0
  %v689 = vadd.f32 0.0, %v688
  %v690 = vpop.f32.mrf.mxu0
  %691 = vmatprep.mubr.bf16.mxu0 0
  %692 = vmatmul.mubr.bf16.gmra.mxu0 %v419
  %v693 = vpop.f32.mrf.mxu0
  %v694 = vadd.f32 0.0, %v693
  %v695 = vpop.f32.mrf.mxu0
  %v696 = vpop.f32.mrf.mxu0
  %v697 = vadd.f32 0.0, %v696
  %v698 = vpop.f32.mrf.mxu0
  %699 = vmatprep.mubr.bf16.mxu0 0
  %700 = vmatmul.mubr.bf16.gmra.mxu0 %v422
  %v701 = vpop.f32.mrf.mxu0
  %v702 = vadd.f32 0.0, %v701
  %v703 = vpop.f32.mrf.mxu0
  %v704 = vpop.f32.mrf.mxu0
  %v705 = vadd.f32 0.0, %v704
  %v706 = vpop.f32.mrf.mxu0
  %707 = vmatprep.mubr.bf16.mxu0 0
  %708 = vmatmul.mubr.bf16.gmra.mxu0 %v425
  %v709 = vpop.f32.mrf.mxu0
  %v710 = vadd.f32 0.0, %v709
  %v711 = vpop.f32.mrf.mxu0
  %v712 = vpop.f32.mrf.mxu0
  %v713 = vadd.f32 0.0, %v712
  %v714 = vpop.f32.mrf.mxu0
  %715 = vdwg.mxu0
  %v716 = vpack.c.bf16 %v465, %v462
  %v717 = vpack.c.bf16 %v473, %v470
  %v718 = vpack.c.bf16 %v481, %v478
  %v719 = vpack.c.bf16 %v489, %v486
  %v720 = vpack.c.bf16 %v497, %v494
  %v721 = vpack.c.bf16 %v505, %v502
  %v722 = vpack.c.bf16 %v513, %v510
  %v723 = vpack.c.bf16 %v521, %v518
  %v724 = vpack.c.bf16 %v529, %v526
  %v725 = vpack.c.bf16 %v537, %v534
  %v726 = vpack.c.bf16 %v545, %v542
  %v727 = vpack.c.bf16 %v553, %v550
  %v728 = vpack.c.bf16 %v561, %v558
  %v729 = vpack.c.bf16 %v569, %v566
  %v730 = vpack.c.bf16 %v577, %v574
  %v731 = vpack.c.bf16 %v585, %v582
  %v732 = vpack.c.bf16 %v593, %v590
  %v733 = vpack.c.bf16 %v601, %v598
  %v734 = vpack.c.bf16 %v609, %v606
  %v735 = vpack.c.bf16 %v617, %v614
  %v736 = vpack.c.bf16 %v625, %v622
  %v737 = vpack.c.bf16 %v633, %v630
  %v738 = vpack.c.bf16 %v641, %v638
  %v739 = vpack.c.bf16 %v649, %v646
  %v740 = vpack.c.bf16 %v657, %v654
  %v741 = vpack.c.bf16 %v665, %v662
  %v742 = vpack.c.bf16 %v673, %v670
  %v743 = vpack.c.bf16 %v681, %v678
  %v744 = vpack.c.bf16 %v689, %v686
  %v745 = vpack.c.bf16 %v697, %v694
  %v746 = vpack.c.bf16 %v705, %v702
  %v747 = vpack.c.bf16 %v713, %v710
  %v780 = vunpack.c.l.b16 %v716
  %v781 = vunpack.c.h.b16 %v716
  %v782 = vunpack.c.l.b16 %v717
  %v783 = vunpack.c.h.b16 %v717
  %v784 = vunpack.c.l.b16 %v718
  %v785 = vunpack.c.h.b16 %v718
  %v786 = vunpack.c.l.b16 %v719
  %v787 = vunpack.c.h.b16 %v719
  %v788 = vunpack.c.l.b16 %v720
  %v789 = vunpack.c.h.b16 %v720
  %v790 = vunpack.c.l.b16 %v721
  %v791 = vunpack.c.h.b16 %v721
  %v792 = vunpack.c.l.b16 %v722
  %v793 = vunpack.c.h.b16 %v722
  %v794 = vunpack.c.l.b16 %v723
  %v795 = vunpack.c.h.b16 %v723
  %v796 = vunpack.c.l.b16 %v724
  %v797 = vunpack.c.h.b16 %v724
  %v798 = vunpack.c.l.b16 %v725
  %v799 = vunpack.c.h.b16 %v725
  %v800 = vunpack.c.l.b16 %v726
  %v801 = vunpack.c.h.b16 %v726
  %v802 = vunpack.c.l.b16 %v727
  %v803 = vunpack.c.h.b16 %v727
  %v804 = vunpack.c.l.b16 %v728
  %v805 = vunpack.c.h.b16 %v728
  %v806 = vunpack.c.l.b16 %v729
  %v807 = vunpack.c.h.b16 %v729
  %v808 = vunpack.c.l.b16 %v730
  %v809 = vunpack.c.h.b16 %v730
  %v810 = vunpack.c.l.b16 %v731
  %v811 = vunpack.c.h.b16 %v731
  %v812 = vunpack.c.l.b16 %v732
  %v813 = vunpack.c.h.b16 %v732
  %v814 = vunpack.c.l.b16 %v733
  %v815 = vunpack.c.h.b16 %v733
  %v816 = vunpack.c.l.b16 %v734
  %v817 = vunpack.c.h.b16 %v734
  %v818 = vunpack.c.l.b16 %v735
  %v819 = vunpack.c.h.b16 %v735
  %v820 = vunpack.c.l.b16 %v736
  %v821 = vunpack.c.h.b16 %v736
  %v822 = vunpack.c.l.b16 %v737
  %v823 = vunpack.c.h.b16 %v737
  %v824 = vunpack.c.l.b16 %v738
  %v825 = vunpack.c.h.b16 %v738
  %v826 = vunpack.c.l.b16 %v739
  %v827 = vunpack.c.h.b16 %v739
  %v828 = vunpack.c.l.b16 %v740
  %v829 = vunpack.c.h.b16 %v740
  %v830 = vunpack.c.l.b16 %v741
  %v831 = vunpack.c.h.b16 %v741
  %v832 = vunpack.c.l.b16 %v742
  %v833 = vunpack.c.h.b16 %v742
  %v834 = vunpack.c.l.b16 %v743
  %v835 = vunpack.c.h.b16 %v743
  %v836 = vunpack.c.l.b16 %v744
  %v837 = vunpack.c.h.b16 %v744
  %v838 = vunpack.c.l.b16 %v745
  %v839 = vunpack.c.h.b16 %v745
  %v840 = vunpack.c.l.b16 %v746
  %v841 = vunpack.c.h.b16 %v746
  %v842 = vunpack.c.l.b16 %v747
  %v843 = vunpack.c.h.b16 %v747
  %v844 = vpack.c.b16 %v780, %v780
  %v845 = vpack.c.b16 %v781, %v781
  %v846 = vpack.c.b16 %v782, %v782
  %v847 = vpack.c.b16 %v783, %v783
  %v848 = vpack.c.b16 %v784, %v784
  %v849 = vpack.c.b16 %v785, %v785
  %v850 = vpack.c.b16 %v786, %v786
  %v851 = vpack.c.b16 %v787, %v787
  %v852 = vpack.c.b16 %v788, %v788
  %v853 = vpack.c.b16 %v789, %v789
  %v854 = vpack.c.b16 %v790, %v790
  %v855 = vpack.c.b16 %v791, %v791
  %v856 = vpack.c.b16 %v792, %v792
  %v857 = vpack.c.b16 %v793, %v793
  %v858 = vpack.c.b16 %v794, %v794
  %v859 = vpack.c.b16 %v795, %v795
  %v860 = vpack.c.b16 %v796, %v796
  %v861 = vpack.c.b16 %v797, %v797
  %v862 = vpack.c.b16 %v798, %v798
  %v863 = vpack.c.b16 %v799, %v799
  %v864 = vpack.c.b16 %v800, %v800
  %v865 = vpack.c.b16 %v801, %v801
  %v866 = vpack.c.b16 %v802, %v802
  %v867 = vpack.c.b16 %v803, %v803
  %v868 = vpack.c.b16 %v804, %v804
  %v869 = vpack.c.b16 %v805, %v805
  %v870 = vpack.c.b16 %v806, %v806
  %v871 = vpack.c.b16 %v807, %v807
  %v872 = vpack.c.b16 %v808, %v808
  %v873 = vpack.c.b16 %v809, %v809
  %v874 = vpack.c.b16 %v810, %v810
  %v875 = vpack.c.b16 %v811, %v811
  %v876 = vpack.c.b16 %v812, %v812
  %v877 = vpack.c.b16 %v813, %v813
  %v878 = vpack.c.b16 %v814, %v814
  %v879 = vpack.c.b16 %v815, %v815
  %v880 = vpack.c.b16 %v816, %v816
  %v881 = vpack.c.b16 %v817, %v817
  %v882 = vpack.c.b16 %v818, %v818
  %v883 = vpack.c.b16 %v819, %v819
  %v884 = vpack.c.b16 %v820, %v820
  %v885 = vpack.c.b16 %v821, %v821
  %v886 = vpack.c.b16 %v822, %v822
  %v887 = vpack.c.b16 %v823, %v823
  %v888 = vpack.c.b16 %v824, %v824
  %v889 = vpack.c.b16 %v825, %v825
  %v890 = vpack.c.b16 %v826, %v826
  %v891 = vpack.c.b16 %v827, %v827
  %v892 = vpack.c.b16 %v828, %v828
  %v893 = vpack.c.b16 %v829, %v829
  %v894 = vpack.c.b16 %v830, %v830
  %v895 = vpack.c.b16 %v831, %v831
  %v896 = vpack.c.b16 %v832, %v832
  %v897 = vpack.c.b16 %v833, %v833
  %v898 = vpack.c.b16 %v834, %v834
  %v899 = vpack.c.b16 %v835, %v835
  %v900 = vpack.c.b16 %v836, %v836
  %v901 = vpack.c.b16 %v837, %v837
  %v902 = vpack.c.b16 %v838, %v838
  %v903 = vpack.c.b16 %v839, %v839
  %v904 = vpack.c.b16 %v840, %v840
  %v905 = vpack.c.b16 %v841, %v841
  %v906 = vpack.c.b16 %v842, %v842
  %v907 = vpack.c.b16 %v843, %v843
  %vm972 = vcmask 257024
  %973 = vst.msk [vmem:[%s4] sm:$0xf] %vm972, %v844
  %974 = vst.msk [vmem:[%s4 + $0x4] sm:$0xf] %vm972, %v845
  %975 = vst.msk [vmem:[%s4 + $0x8] sm:$0xf] %vm972, %v846
  %976 = vst.msk [vmem:[%s4 + $0xc] sm:$0xf] %vm972, %v847
  %977 = vst.msk [vmem:[%s4 + $0x10] sm:$0xf] %vm972, %v848
  %978 = vst.msk [vmem:[%s4 + $0x14] sm:$0xf] %vm972, %v849
  %979 = vst.msk [vmem:[%s4 + $0x18] sm:$0xf] %vm972, %v850
  %980 = vst.msk [vmem:[%s4 + $0x1c] sm:$0xf] %vm972, %v851
  %981 = vst.msk [vmem:[%s4 + $0x20] sm:$0xf] %vm972, %v852
  %982 = vst.msk [vmem:[%s4 + $0x24] sm:$0xf] %vm972, %v853
  %983 = vst.msk [vmem:[%s4 + $0x28] sm:$0xf] %vm972, %v854
  %984 = vst.msk [vmem:[%s4 + $0x2c] sm:$0xf] %vm972, %v855
  %985 = vst.msk [vmem:[%s4 + $0x30] sm:$0xf] %vm972, %v856
  %986 = vst.msk [vmem:[%s4 + $0x34] sm:$0xf] %vm972, %v857
  %987 = vst.msk [vmem:[%s4 + $0x38] sm:$0xf] %vm972, %v858
  %988 = vst.msk [vmem:[%s4 + $0x3c] sm:$0xf] %vm972, %v859
  %989 = vst.msk [vmem:[%s4 + $0x40] sm:$0xf] %vm972, %v860
  %990 = vst.msk [vmem:[%s4 + $0x44] sm:$0xf] %vm972, %v861
  %991 = vst.msk [vmem:[%s4 + $0x48] sm:$0xf] %vm972, %v862
  %992 = vst.msk [vmem:[%s4 + $0x4c] sm:$0xf] %vm972, %v863
  %993 = vst.msk [vmem:[%s4 + $0x50] sm:$0xf] %vm972, %v864
  %994 = vst.msk [vmem:[%s4 + $0x54] sm:$0xf] %vm972, %v865
  %995 = vst.msk [vmem:[%s4 + $0x58] sm:$0xf] %vm972, %v866
  %996 = vst.msk [vmem:[%s4 + $0x5c] sm:$0xf] %vm972, %v867
  %997 = vst.msk [vmem:[%s4 + $0x60] sm:$0xf] %vm972, %v868
  %998 = vst.msk [vmem:[%s4 + $0x64] sm:$0xf] %vm972, %v869
  %999 = vst.msk [vmem:[%s4 + $0x68] sm:$0xf] %vm972, %v870
  %1000 = vst.msk [vmem:[%s4 + $0x6c] sm:$0xf] %vm972, %v871
  %1001 = vst.msk [vmem:[%s4 + $0x70] sm:$0xf] %vm972, %v872
  %1002 = vst.msk [vmem:[%s4 + $0x74] sm:$0xf] %vm972, %v873
  %1003 = vst.msk [vmem:[%s4 + $0x78] sm:$0xf] %vm972, %v874
  %1004 = vst.msk [vmem:[%s4 + $0x7c] sm:$0xf] %vm972, %v875
  %1005 = vst.msk [vmem:[%s4 + $0x80] sm:$0xf] %vm972, %v876
  %1006 = vst.msk [vmem:[%s4 + $0x84] sm:$0xf] %vm972, %v877
  %1007 = vst.msk [vmem:[%s4 + $0x88] sm:$0xf] %vm972, %v878
  %1008 = vst.msk [vmem:[%s4 + $0x8c] sm:$0xf] %vm972, %v879
  %1009 = vst.msk [vmem:[%s4 + $0x90] sm:$0xf] %vm972, %v880
  %1010 = vst.msk [vmem:[%s4 + $0x94] sm:$0xf] %vm972, %v881
  %1011 = vst.msk [vmem:[%s4 + $0x98] sm:$0xf] %vm972, %v882
  %1012 = vst.msk [vmem:[%s4 + $0x9c] sm:$0xf] %vm972, %v883
  %1013 = vst.msk [vmem:[%s4 + $0xa0] sm:$0xf] %vm972, %v884
  %1014 = vst.msk [vmem:[%s4 + $0xa4] sm:$0xf] %vm972, %v885
  %1015 = vst.msk [vmem:[%s4 + $0xa8] sm:$0xf] %vm972, %v886
  %1016 = vst.msk [vmem:[%s4 + $0xac] sm:$0xf] %vm972, %v887
  %1017 = vst.msk [vmem:[%s4 + $0xb0] sm:$0xf] %vm972, %v888
  %1018 = vst.msk [vmem:[%s4 + $0xb4] sm:$0xf] %vm972, %v889
  %1019 = vst.msk [vmem:[%s4 + $0xb8] sm:$0xf] %vm972, %v890
  %1020 = vst.msk [vmem:[%s4 + $0xbc] sm:$0xf] %vm972, %v891
  %1021 = vst.msk [vmem:[%s4 + $0xc0] sm:$0xf] %vm972, %v892
  %1022 = vst.msk [vmem:[%s4 + $0xc4] sm:$0xf] %vm972, %v893
  %1023 = vst.msk [vmem:[%s4 + $0xc8] sm:$0xf] %vm972, %v894
  %1024 = vst.msk [vmem:[%s4 + $0xcc] sm:$0xf] %vm972, %v895
  %1025 = vst.msk [vmem:[%s4 + $0xd0] sm:$0xf] %vm972, %v896
  %1026 = vst.msk [vmem:[%s4 + $0xd4] sm:$0xf] %vm972, %v897
  %1027 = vst.msk [vmem:[%s4 + $0xd8] sm:$0xf] %vm972, %v898
  %1028 = vst.msk [vmem:[%s4 + $0xdc] sm:$0xf] %vm972, %v899
  %1029 = vst.msk [vmem:[%s4 + $0xe0] sm:$0xf] %vm972, %v900
  %1030 = vst.msk [vmem:[%s4 + $0xe4] sm:$0xf] %vm972, %v901
  %1031 = vst.msk [vmem:[%s4 + $0xe8] sm:$0xf] %vm972, %v902
  %1032 = vst.msk [vmem:[%s4 + $0xec] sm:$0xf] %vm972, %v903
  %1033 = vst.msk [vmem:[%s4 + $0xf0] sm:$0xf] %vm972, %v904
  %1034 = vst.msk [vmem:[%s4 + $0xf4] sm:$0xf] %vm972, %v905
  %1035 = vst.msk [vmem:[%s4 + $0xf8] sm:$0xf] %vm972, %v906
  %1036 = vst.msk [vmem:[%s4 + $0xfc] sm:$0xf] %vm972, %v907
  %v1037 = vunpack.c.l.bf16 %v716
  %v1038 = vunpack.c.h.bf16 %v716
  %v1039 = vunpack.c.l.bf16 %v717
  %v1040 = vunpack.c.h.bf16 %v717
  %v1041 = vunpack.c.l.bf16 %v718
  %v1042 = vunpack.c.h.bf16 %v718
  %v1043 = vunpack.c.l.bf16 %v719
  %v1044 = vunpack.c.h.bf16 %v719
  %v1045 = vunpack.c.l.bf16 %v720
  %v1046 = vunpack.c.h.bf16 %v720
  %v1047 = vunpack.c.l.bf16 %v721
  %v1048 = vunpack.c.h.bf16 %v721
  %v1049 = vunpack.c.l.bf16 %v722
  %v1050 = vunpack.c.h.bf16 %v722
  %v1051 = vunpack.c.l.bf16 %v723
  %v1052 = vunpack.c.h.bf16 %v723
  %v1053 = vunpack.c.l.bf16 %v724
  %v1054 = vunpack.c.h.bf16 %v724
  %v1055 = vunpack.c.l.bf16 %v725
  %v1056 = vunpack.c.h.bf16 %v725
  %v1057 = vunpack.c.l.bf16 %v726
  %v1058 = vunpack.c.h.bf16 %v726
  %v1059 = vunpack.c.l.bf16 %v727
  %v1060 = vunpack.c.h.bf16 %v727
  %v1061 = vunpack.c.l.bf16 %v728
  %v1062 = vunpack.c.h.bf16 %v728
  %v1063 = vunpack.c.l.bf16 %v729
  %v1064 = vunpack.c.h.bf16 %v729
  %v1065 = vunpack.c.l.bf16 %v730
  %v1066 = vunpack.c.h.bf16 %v730
  %v1067 = vunpack.c.l.bf16 %v731
  %v1068 = vunpack.c.h.bf16 %v731
  %v1069 = vunpack.c.l.bf16 %v732
  %v1070 = vunpack.c.h.bf16 %v732
  %v1071 = vunpack.c.l.bf16 %v733
  %v1072 = vunpack.c.h.bf16 %v733
  %v1073 = vunpack.c.l.bf16 %v734
  %v1074 = vunpack.c.h.bf16 %v734
  %v1075 = vunpack.c.l.bf16 %v735
  %v1076 = vunpack.c.h.bf16 %v735
  %v1077 = vunpack.c.l.bf16 %v736
  %v1078 = vunpack.c.h.bf16 %v736
  %v1079 = vunpack.c.l.bf16 %v737
  %v1080 = vunpack.c.h.bf16 %v737
  %v1081 = vunpack.c.l.bf16 %v738
  %v1082 = vunpack.c.h.bf16 %v738
  %v1083 = vunpack.c.l.bf16 %v739
  %v1084 = vunpack.c.h.bf16 %v739
  %v1085 = vunpack.c.l.bf16 %v740
  %v1086 = vunpack.c.h.bf16 %v740
  %v1087 = vunpack.c.l.bf16 %v741
  %v1088 = vunpack.c.h.bf16 %v741
  %v1089 = vunpack.c.l.bf16 %v742
  %v1090 = vunpack.c.h.bf16 %v742
  %v1091 = vunpack.c.l.bf16 %v743
  %v1092 = vunpack.c.h.bf16 %v743
  %v1093 = vunpack.c.l.bf16 %v744
  %v1094 = vunpack.c.h.bf16 %v744
  %v1095 = vunpack.c.l.bf16 %v745
  %v1096 = vunpack.c.h.bf16 %v745
  %v1097 = vunpack.c.l.bf16 %v746
  %v1098 = vunpack.c.h.bf16 %v746
  %v1099 = vunpack.c.l.bf16 %v747
  %v1100 = vunpack.c.h.bf16 %v747
  %vm1101 = vcmask 261120
  %v1102 = vsel %vm1101, %v1037, 0.0
  %v1103 = vsel %vm1101, %v1038, 0.0
  %v1104 = vadd.f32 %v1102, %v1103
  %v1105 = vsel %vm1101, %v1039, 0.0
  %v1106 = vadd.f32 %v1104, %v1105
  %v1107 = vsel %vm1101, %v1040, 0.0
  %v1108 = vadd.f32 %v1106, %v1107
  %v1109 = vsel %vm1101, %v1041, 0.0
  %v1110 = vadd.f32 %v1108, %v1109
  %v1111 = vsel %vm1101, %v1042, 0.0
  %v1112 = vadd.f32 %v1110, %v1111
  %v1113 = vsel %vm1101, %v1043, 0.0
  %v1114 = vadd.f32 %v1112, %v1113
  %v1115 = vsel %vm1101, %v1044, 0.0
  %v1116 = vadd.f32 %v1114, %v1115
  %v1117 = vsel %vm1101, %v1045, 0.0
  %v1118 = vadd.f32 %v1116, %v1117
  %v1119 = vsel %vm1101, %v1046, 0.0
  %v1120 = vadd.f32 %v1118, %v1119
  %v1121 = vsel %vm1101, %v1047, 0.0
  %v1122 = vadd.f32 %v1120, %v1121
  %v1123 = vsel %vm1101, %v1048, 0.0
  %v1124 = vadd.f32 %v1122, %v1123
  %v1125 = vsel %vm1101, %v1049, 0.0
  %v1126 = vadd.f32 %v1124, %v1125
  %v1127 = vsel %vm1101, %v1050, 0.0
  %v1128 = vadd.f32 %v1126, %v1127
  %v1129 = vsel %vm1101, %v1051, 0.0
  %v1130 = vadd.f32 %v1128, %v1129
  %v1131 = vsel %vm1101, %v1052, 0.0
  %v1132 = vadd.f32 %v1130, %v1131
  %v1133 = vsel %vm1101, %v1053, 0.0
  %v1134 = vadd.f32 %v1132, %v1133
  %v1135 = vsel %vm1101, %v1054, 0.0
  %v1136 = vadd.f32 %v1134, %v1135
  %v1137 = vsel %vm1101, %v1055, 0.0
  %v1138 = vadd.f32 %v1136, %v1137
  %v1139 = vsel %vm1101, %v1056, 0.0
  %v1140 = vadd.f32 %v1138, %v1139
  %v1141 = vsel %vm1101, %v1057, 0.0
  %v1142 = vadd.f32 %v1140, %v1141
  %v1143 = vsel %vm1101, %v1058, 0.0
  %v1144 = vadd.f32 %v1142, %v1143
  %v1145 = vsel %vm1101, %v1059, 0.0
  %v1146 = vadd.f32 %v1144, %v1145
  %v1147 = vsel %vm1101, %v1060, 0.0
  %v1148 = vadd.f32 %v1146, %v1147
  %v1149 = vsel %vm1101, %v1061, 0.0
  %v1150 = vadd.f32 %v1148, %v1149
  %v1151 = vsel %vm1101, %v1062, 0.0
  %v1152 = vadd.f32 %v1150, %v1151
  %v1153 = vsel %vm1101, %v1063, 0.0
  %v1154 = vadd.f32 %v1152, %v1153
  %v1155 = vsel %vm1101, %v1064, 0.0
  %v1156 = vadd.f32 %v1154, %v1155
  %v1157 = vsel %vm1101, %v1065, 0.0
  %v1158 = vadd.f32 %v1156, %v1157
  %v1159 = vsel %vm1101, %v1066, 0.0
  %v1160 = vadd.f32 %v1158, %v1159
  %v1161 = vsel %vm1101, %v1067, 0.0
  %v1162 = vadd.f32 %v1160, %v1161
  %v1163 = vsel %vm1101, %v1068, 0.0
  %v1164 = vadd.f32 %v1162, %v1163
  %v1165 = vsel %vm1101, %v1069, 0.0
  %v1166 = vadd.f32 %v1164, %v1165
  %v1167 = vsel %vm1101, %v1070, 0.0
  %v1168 = vadd.f32 %v1166, %v1167
  %v1169 = vsel %vm1101, %v1071, 0.0
  %v1170 = vadd.f32 %v1168, %v1169
  %v1171 = vsel %vm1101, %v1072, 0.0
  %v1172 = vadd.f32 %v1170, %v1171
  %v1173 = vsel %vm1101, %v1073, 0.0
  %v1174 = vadd.f32 %v1172, %v1173
  %v1175 = vsel %vm1101, %v1074, 0.0
  %v1176 = vadd.f32 %v1174, %v1175
  %v1177 = vsel %vm1101, %v1075, 0.0
  %v1178 = vadd.f32 %v1176, %v1177
  %v1179 = vsel %vm1101, %v1076, 0.0
  %v1180 = vadd.f32 %v1178, %v1179
  %v1181 = vsel %vm1101, %v1077, 0.0
  %v1182 = vadd.f32 %v1180, %v1181
  %v1183 = vsel %vm1101, %v1078, 0.0
  %v1184 = vadd.f32 %v1182, %v1183
  %v1185 = vsel %vm1101, %v1079, 0.0
  %v1186 = vadd.f32 %v1184, %v1185
  %v1187 = vsel %vm1101, %v1080, 0.0
  %v1188 = vadd.f32 %v1186, %v1187
  %v1189 = vsel %vm1101, %v1081, 0.0
  %v1190 = vadd.f32 %v1188, %v1189
  %v1191 = vsel %vm1101, %v1082, 0.0
  %v1192 = vadd.f32 %v1190, %v1191
  %v1193 = vsel %vm1101, %v1083, 0.0
  %v1194 = vadd.f32 %v1192, %v1193
  %v1195 = vsel %vm1101, %v1084, 0.0
  %v1196 = vadd.f32 %v1194, %v1195
  %v1197 = vsel %vm1101, %v1085, 0.0
  %v1198 = vadd.f32 %v1196, %v1197
  %v1199 = vsel %vm1101, %v1086, 0.0
  %v1200 = vadd.f32 %v1198, %v1199
  %v1201 = vsel %vm1101, %v1087, 0.0
  %v1202 = vadd.f32 %v1200, %v1201
  %v1203 = vsel %vm1101, %v1088, 0.0
  %v1204 = vadd.f32 %v1202, %v1203
  %v1205 = vsel %vm1101, %v1089, 0.0
  %v1206 = vadd.f32 %v1204, %v1205
  %v1207 = vsel %vm1101, %v1090, 0.0
  %v1208 = vadd.f32 %v1206, %v1207
  %v1209 = vsel %vm1101, %v1091, 0.0
  %v1210 = vadd.f32 %v1208, %v1209
  %v1211 = vsel %vm1101, %v1092, 0.0
  %v1212 = vadd.f32 %v1210, %v1211
  %v1213 = vsel %vm1101, %v1093, 0.0
  %v1214 = vadd.f32 %v1212, %v1213
  %v1215 = vsel %vm1101, %v1094, 0.0
  %v1216 = vadd.f32 %v1214, %v1215
  %v1217 = vsel %vm1101, %v1095, 0.0
  %v1218 = vadd.f32 %v1216, %v1217
  %v1219 = vsel %vm1101, %v1096, 0.0
  %v1220 = vadd.f32 %v1218, %v1219
  %v1221 = vsel %vm1101, %v1097, 0.0
  %v1222 = vadd.f32 %v1220, %v1221
  %v1223 = vsel %vm1101, %v1098, 0.0
  %v1224 = vadd.f32 %v1222, %v1223
  %v1225 = vsel %vm1101, %v1099, 0.0
  %v1226 = vadd.f32 %v1224, %v1225
  %v1227 = vsel %vm1101, %v1100, 0.0
  %v1228 = vadd.f32 %v1226, %v1227
  %v1229 = vrot.slane %v1228, 4
  %v1230 = vadd.f32 %v1228, %v1229
  %v1231 = vrot.slane %v1230, 2
  %v1232 = vadd.f32 %v1230, %v1231
  %v1233 = vrot.slane %v1232, 1
  %v1234 = vadd.f32 %v1232, %v1233
  %v1235 = vmul.f32 %v1037, %v1037
  %v1236 = vmul.f32 %v1038, %v1038
  %v1237 = vmul.f32 %v1039, %v1039
  %v1238 = vmul.f32 %v1040, %v1040
  %v1239 = vmul.f32 %v1041, %v1041
  %v1240 = vmul.f32 %v1042, %v1042
  %v1241 = vmul.f32 %v1043, %v1043
  %v1242 = vmul.f32 %v1044, %v1044
  %v1243 = vmul.f32 %v1045, %v1045
  %v1244 = vmul.f32 %v1046, %v1046
  %v1245 = vmul.f32 %v1047, %v1047
  %v1246 = vmul.f32 %v1048, %v1048
  %v1247 = vmul.f32 %v1049, %v1049
  %v1248 = vmul.f32 %v1050, %v1050
  %v1249 = vmul.f32 %v1051, %v1051
  %v1250 = vmul.f32 %v1052, %v1052
  %v1251 = vmul.f32 %v1053, %v1053
  %v1252 = vmul.f32 %v1054, %v1054
  %v1253 = vmul.f32 %v1055, %v1055
  %v1254 = vmul.f32 %v1056, %v1056
  %v1255 = vmul.f32 %v1057, %v1057
  %v1256 = vmul.f32 %v1058, %v1058
  %v1257 = vmul.f32 %v1059, %v1059
  %v1258 = vmul.f32 %v1060, %v1060
  %v1259 = vmul.f32 %v1061, %v1061
  %v1260 = vmul.f32 %v1062, %v1062
  %v1261 = vmul.f32 %v1063, %v1063
  %v1262 = vmul.f32 %v1064, %v1064
  %v1263 = vmul.f32 %v1065, %v1065
  %v1264 = vmul.f32 %v1066, %v1066
  %v1265 = vmul.f32 %v1067, %v1067
  %v1266 = vmul.f32 %v1068, %v1068
  %v1267 = vmul.f32 %v1069, %v1069
  %v1268 = vmul.f32 %v1070, %v1070
  %v1269 = vmul.f32 %v1071, %v1071
  %v1270 = vmul.f32 %v1072, %v1072
  %v1271 = vmul.f32 %v1073, %v1073
  %v1272 = vmul.f32 %v1074, %v1074
  %v1273 = vmul.f32 %v1075, %v1075
  %v1274 = vmul.f32 %v1076, %v1076
  %v1275 = vmul.f32 %v1077, %v1077
  %v1276 = vmul.f32 %v1078, %v1078
  %v1277 = vmul.f32 %v1079, %v1079
  %v1278 = vmul.f32 %v1080, %v1080
  %v1279 = vmul.f32 %v1081, %v1081
  %v1280 = vmul.f32 %v1082, %v1082
  %v1281 = vmul.f32 %v1083, %v1083
  %v1282 = vmul.f32 %v1084, %v1084
  %v1283 = vmul.f32 %v1085, %v1085
  %v1284 = vmul.f32 %v1086, %v1086
  %v1285 = vmul.f32 %v1087, %v1087
  %v1286 = vmul.f32 %v1088, %v1088
  %v1287 = vmul.f32 %v1089, %v1089
  %v1288 = vmul.f32 %v1090, %v1090
  %v1289 = vmul.f32 %v1091, %v1091
  %v1290 = vmul.f32 %v1092, %v1092
  %v1291 = vmul.f32 %v1093, %v1093
  %v1292 = vmul.f32 %v1094, %v1094
  %v1293 = vmul.f32 %v1095, %v1095
  %v1294 = vmul.f32 %v1096, %v1096
  %v1295 = vmul.f32 %v1097, %v1097
  %v1296 = vmul.f32 %v1098, %v1098
  %v1297 = vmul.f32 %v1099, %v1099
  %v1298 = vmul.f32 %v1100, %v1100
  %v1299 = vsel %vm1101, %v1235, 0.0
  %v1300 = vsel %vm1101, %v1236, 0.0
  %v1301 = vadd.f32 %v1299, %v1300
  %v1302 = vsel %vm1101, %v1237, 0.0
  %v1303 = vadd.f32 %v1301, %v1302
  %v1304 = vsel %vm1101, %v1238, 0.0
  %v1305 = vadd.f32 %v1303, %v1304
  %v1306 = vsel %vm1101, %v1239, 0.0
  %v1307 = vadd.f32 %v1305, %v1306
  %v1308 = vsel %vm1101, %v1240, 0.0
  %v1309 = vadd.f32 %v1307, %v1308
  %v1310 = vsel %vm1101, %v1241, 0.0
  %v1311 = vadd.f32 %v1309, %v1310
  %v1312 = vsel %vm1101, %v1242, 0.0
  %v1313 = vadd.f32 %v1311, %v1312
  %v1314 = vsel %vm1101, %v1243, 0.0
  %v1315 = vadd.f32 %v1313, %v1314
  %v1316 = vsel %vm1101, %v1244, 0.0
  %v1317 = vadd.f32 %v1315, %v1316
  %v1318 = vsel %vm1101, %v1245, 0.0
  %v1319 = vadd.f32 %v1317, %v1318
  %v1320 = vsel %vm1101, %v1246, 0.0
  %v1321 = vadd.f32 %v1319, %v1320
  %v1322 = vsel %vm1101, %v1247, 0.0
  %v1323 = vadd.f32 %v1321, %v1322
  %v1324 = vsel %vm1101, %v1248, 0.0
  %v1325 = vadd.f32 %v1323, %v1324
  %v1326 = vsel %vm1101, %v1249, 0.0
  %v1327 = vadd.f32 %v1325, %v1326
  %v1328 = vsel %vm1101, %v1250, 0.0
  %v1329 = vadd.f32 %v1327, %v1328
  %v1330 = vsel %vm1101, %v1251, 0.0
  %v1331 = vadd.f32 %v1329, %v1330
  %v1332 = vsel %vm1101, %v1252, 0.0
  %v1333 = vadd.f32 %v1331, %v1332
  %v1334 = vsel %vm1101, %v1253, 0.0
  %v1335 = vadd.f32 %v1333, %v1334
  %v1336 = vsel %vm1101, %v1254, 0.0
  %v1337 = vadd.f32 %v1335, %v1336
  %v1338 = vsel %vm1101, %v1255, 0.0
  %v1339 = vadd.f32 %v1337, %v1338
  %v1340 = vsel %vm1101, %v1256, 0.0
  %v1341 = vadd.f32 %v1339, %v1340
  %v1342 = vsel %vm1101, %v1257, 0.0
  %v1343 = vadd.f32 %v1341, %v1342
  %v1344 = vsel %vm1101, %v1258, 0.0
  %v1345 = vadd.f32 %v1343, %v1344
  %v1346 = vsel %vm1101, %v1259, 0.0
  %v1347 = vadd.f32 %v1345, %v1346
  %v1348 = vsel %vm1101, %v1260, 0.0
  %v1349 = vadd.f32 %v1347, %v1348
  %v1350 = vsel %vm1101, %v1261, 0.0
  %v1351 = vadd.f32 %v1349, %v1350
  %v1352 = vsel %vm1101, %v1262, 0.0
  %v1353 = vadd.f32 %v1351, %v1352
  %v1354 = vsel %vm1101, %v1263, 0.0
  %v1355 = vadd.f32 %v1353, %v1354
  %v1356 = vsel %vm1101, %v1264, 0.0
  %v1357 = vadd.f32 %v1355, %v1356
  %v1358 = vsel %vm1101, %v1265, 0.0
  %v1359 = vadd.f32 %v1357, %v1358
  %v1360 = vsel %vm1101, %v1266, 0.0
  %v1361 = vadd.f32 %v1359, %v1360
  %v1362 = vsel %vm1101, %v1267, 0.0
  %v1363 = vadd.f32 %v1361, %v1362
  %v1364 = vsel %vm1101, %v1268, 0.0
  %v1365 = vadd.f32 %v1363, %v1364
  %v1366 = vsel %vm1101, %v1269, 0.0
  %v1367 = vadd.f32 %v1365, %v1366
  %v1368 = vsel %vm1101, %v1270, 0.0
  %v1369 = vadd.f32 %v1367, %v1368
  %v1370 = vsel %vm1101, %v1271, 0.0
  %v1371 = vadd.f32 %v1369, %v1370
  %v1372 = vsel %vm1101, %v1272, 0.0
  %v1373 = vadd.f32 %v1371, %v1372
  %v1374 = vsel %vm1101, %v1273, 0.0
  %v1375 = vadd.f32 %v1373, %v1374
  %v1376 = vsel %vm1101, %v1274, 0.0
  %v1377 = vadd.f32 %v1375, %v1376
  %v1378 = vsel %vm1101, %v1275, 0.0
  %v1379 = vadd.f32 %v1377, %v1378
  %v1380 = vsel %vm1101, %v1276, 0.0
  %v1381 = vadd.f32 %v1379, %v1380
  %v1382 = vsel %vm1101, %v1277, 0.0
  %v1383 = vadd.f32 %v1381, %v1382
  %v1384 = vsel %vm1101, %v1278, 0.0
  %v1385 = vadd.f32 %v1383, %v1384
  %v1386 = vsel %vm1101, %v1279, 0.0
  %v1387 = vadd.f32 %v1385, %v1386
  %v1388 = vsel %vm1101, %v1280, 0.0
  %v1389 = vadd.f32 %v1387, %v1388
  %v1390 = vsel %vm1101, %v1281, 0.0
  %v1391 = vadd.f32 %v1389, %v1390
  %v1392 = vsel %vm1101, %v1282, 0.0
  %v1393 = vadd.f32 %v1391, %v1392
  %v1394 = vsel %vm1101, %v1283, 0.0
  %v1395 = vadd.f32 %v1393, %v1394
  %v1396 = vsel %vm1101, %v1284, 0.0
  %v1397 = vadd.f32 %v1395, %v1396
  %v1398 = vsel %vm1101, %v1285, 0.0
  %v1399 = vadd.f32 %v1397, %v1398
  %v1400 = vsel %vm1101, %v1286, 0.0
  %v1401 = vadd.f32 %v1399, %v1400
  %v1402 = vsel %vm1101, %v1287, 0.0
  %v1403 = vadd.f32 %v1401, %v1402
  %v1404 = vsel %vm1101, %v1288, 0.0
  %v1405 = vadd.f32 %v1403, %v1404
  %v1406 = vsel %vm1101, %v1289, 0.0
  %v1407 = vadd.f32 %v1405, %v1406
  %v1408 = vsel %vm1101, %v1290, 0.0
  %v1409 = vadd.f32 %v1407, %v1408
  %v1410 = vsel %vm1101, %v1291, 0.0
  %v1411 = vadd.f32 %v1409, %v1410
  %v1412 = vsel %vm1101, %v1292, 0.0
  %v1413 = vadd.f32 %v1411, %v1412
  %v1414 = vsel %vm1101, %v1293, 0.0
  %v1415 = vadd.f32 %v1413, %v1414
  %v1416 = vsel %vm1101, %v1294, 0.0
  %v1417 = vadd.f32 %v1415, %v1416
  %v1418 = vsel %vm1101, %v1295, 0.0
  %v1419 = vadd.f32 %v1417, %v1418
  %v1420 = vsel %vm1101, %v1296, 0.0
  %v1421 = vadd.f32 %v1419, %v1420
  %v1422 = vsel %vm1101, %v1297, 0.0
  %v1423 = vadd.f32 %v1421, %v1422
  %v1424 = vsel %vm1101, %v1298, 0.0
  %v1425 = vadd.f32 %v1423, %v1424
  %v1426 = vrot.slane %v1425, 4
  %v1427 = vadd.f32 %v1425, %v1426
  %v1428 = vrot.slane %v1427, 2
  %v1429 = vadd.f32 %v1427, %v1428
  %v1430 = vrot.slane %v1429, 1
  %v1431 = vadd.f32 %v1429, %v1430
  %vm1432 = vcmask 1040384
  %v1433 = vsel %vm1432, %v1234, %v1431
  %vm1434 = vcmask 254976
  %1435 = vst.msk [vmem:[%s5] sm:$0x3] %vm1434, %v1433
  // Predicated region
  $region18: #{bottleneck_forward.2} parent=0 // pred_check
    _
  $region19: #{bottleneck_forward.2} parent=0 // pred_check_branch
    %1437 = sbr.rel (0) target = $region21
  $region20: #{bottleneck_forward.2} parent=0 // pred_region
    _
  $region21: #{bottleneck_forward.2} parent=0 // pred_fallthru
    _
  // Predicated region
  $region22: #{bottleneck_forward.2} parent=0 // pred_check
    _
  $region23: #{bottleneck_forward.2} parent=0 // pred_check_branch
    %1439 = sbr.rel (0) target = $region25
  $region24: #{bottleneck_forward.2} parent=0 // pred_region
    _
  $region25: #{bottleneck_forward.2} parent=0 // pred_fallthru
    _
  // Predicated region
  $region26: #{bottleneck_forward.2} parent=0 // pred_check
    _
  $region27: #{bottleneck_forward.2} parent=0 // pred_check_branch
    %1441 = sbr.rel (0) target = $region29
  $region28: #{bottleneck_forward.2} parent=0 // pred_region
    _
  $region29: #{bottleneck_forward.2} parent=0 // pred_fallthru
    _
  // Predicated region
  $region30: #{bottleneck_forward.2} parent=0 // pred_check
    _
  $region31: #{bottleneck_forward.2} parent=0 // pred_check_branch
    %1443 = sbr.rel (0) target = $region33
  $region32: #{bottleneck_forward.2} parent=0 // pred_region
    _
  $region33: #{bottleneck_forward.2} parent=0 // pred_fallthru
    _

// kernel: bottleneck_forward.3
$region0: #{bottleneck_forward.3}
  #allocation0 [shape = 'u32[]', space=smem, size = 0x4, offset = 0x4, fixed_abs, tag = 'smem constant byte address 0x4 - core index']
  #allocation1 [shape = 'u32[144,128]{1,0:T(1,128)}', space=vmem, size = 0x12000, scoped, tag = 'internal scratch']
  #allocation2 [shape = 'bf16[10,16,32]{2,1,0:T(8,128)(2,1)}', space=vmem, size = 0xa000, scoped, tag = 'scratch operand']
  %s0 = inlined_call_operand.vmem [shape: bf16[2,16,16,32], index: 0, kind: input, shape index: {}, may-alias: {0,1,2}]
  %s1 = inlined_call_operand.vmem [shape: bf16[2,16,16,32], index: 1, kind: input, shape index: {}, may-alias: {0,1,2}]
  %s2 = inlined_call_operand.vmem [shape: bf16[2,16,16,32], index: 2, kind: input, shape index: {}, may-alias: {0,1,2}]
  %s3 = inlined_call_operand.vmem [shape: f32[1,32], index: 3, kind: input, shape index: {}]
  %s4 = inlined_call_operand.vmem [shape: f32[1,32], index: 4, kind: input, shape index: {}]
  %s5 = inlined_call_operand.vmem [shape: bf16[9,8,32], index: 5, kind: input, shape index: {}]
  %s6 = inlined_call_operand.vmem [shape: f32[2,8,256], index: 6, kind: output, shape index: {}]
  %s7 = sld [smem:[#allocation0]]
  $region57: #{bottleneck_forward.3} parent=0
    _
  %s9 = ssub.s32 1, %s7
  %s10 = scalar_select 0, %s9, %s7
  loop: start=0, step=1, limit=6
  $region2: #{bottleneck_forward.3} parent=0 // loop_pre_header
    _
  $region3: #{bottleneck_forward.3} parent=0 // loop_header
    %s12 = sphi 0, %s16
    %p13 = scmp.ge.s32.totalorder %s12, 6
    %s19 = sphi 0, %s31
    %s20 = sphi 0, %s27
    %s21 = sphi 0, %s19
    %s22 = sphi 0, %s20
    %s23 = sphi 0, %s21
    %s24 = sphi 0, %s22
    %s36 = sphi 0, %s38
    %s39 = sphi 0, %s36
    %s40 = sphi 0, %s39
    %s56 = sphi 0, %s40
    %s72 = sphi 0, %s74
    %s75 = sphi 0, %s72
    %s76 = sphi 0, %s75
    %s92 = sphi 0, %s76
    %s108 = sphi 0, %s110
    %s111 = sphi 0, %s108
    %s112 = sphi 0, %s111
    %s128 = sphi 0, %s112
    %s132 = sphi 0, %s132
    %s134 = sphi 0, %s132
    %s135 = sphi 0, %s134
    %s149 = sphi 0, %s135
    %s153 = sphi 0, %s153
    %s155 = sphi 0, %s153
    %s156 = sphi 0, %s155
    %s170 = sphi 0, %s156
    %s174 = sphi 0, %s174
    %s176 = sphi 0, %s174
    %s177 = sphi 0, %s176
    %s191 = sphi 0, %s177
    %s199 = sphi 0, %s201
    %s202 = sphi 0, %s199
    %s203 = sphi 0, %s202
    %s219 = sphi 0, %s203
  $region4: #{bottleneck_forward.3} parent=0 // loop_header_branch
    %15 = sbr.rel (%p13) target = $region8
  $region5: #{bottleneck_forward.3} parent=0 // loop_body
    %s17 = ssub.s32 %s12, 1
    %s18 = ssub.s32 %s12, 2
    %s25 = sadd.s32 1, %s20
    %p26 = scmp.ge.s32.totalorder %s25, 2
    %s27 = scalar_select %p26, 0, %s25
    %s28 = sadd.s32 1, %s19
    %s29 = scalar_select %p26, %s28, %s19
    %p30 = scmp.ge.s32.totalorder %s29, 2
    %s31 = scalar_select %p30, 0, %s29
    %s32 = ssub.s32 %s19, %s31
    %s33 = ssub.s32 %s20, %s27
    %s34 = sor.u32 %s32, %s33
    %p35 = scmp.eq.s32.totalorder %s34, 0
    %s37 = sadd.s32 %s36, 1
    %s38 = scalar_select %p35, %s36, %s37
    %p41 = pneg %p35
    %p42 = scmp.eq.s32.totalorder %s12, 3
    %p43 = por %p41, %p42
    %p44 = scmp.ne.s32.totalorder %s36, %s39
    %p45 = scmp.eq.s32.totalorder %s12, 0
    %p46 = por %p44, %p45
    %p47 = scmp.ne.s32.totalorder %s36, %s39
    %p48 = scmp.eq.s32.totalorder %s17, 3
    %p49 = por %p47, %p48
    %p50 = scmp.ne.s32.totalorder %s39, %s40
    %p51 = scmp.eq.s32.totalorder %s17, 0
    %p52 = por %p50, %p51
    %p53 = scmp.ne.s32.totalorder %s39, %s40
    %p54 = scmp.eq.s32.totalorder %s18, 3
    %p55 = por %p53, %p54
    %p57 = scmp.ne.s32.totalorder %s40, %s56
    %p58 = scmp.eq.s32.totalorder %s18, 0
    %p59 = por %p57, %p58
    %s60 = smul.u32 %s20, 8
    %s61 = ssub.s32 %s60, 1
    %p62 = scmp.gt.s32.totalorder %s61, 0
    %s63 = scalar_select %p62, %s61, 0
    %s64 = smul.u32 %s27, 8
    %s65 = ssub.s32 %s64, 1
    %p66 = scmp.gt.s32.totalorder %s65, 0
    %s67 = scalar_select %p66, %s65, 0
    %s68 = ssub.s32 %s19, %s31
    %s69 = ssub.s32 %s63, %s67
    %s70 = sor.u32 %s68, %s69
    %p71 = scmp.eq.s32.totalorder %s70, 0
    %s73 = sadd.s32 %s72, 1
    %s74 = scalar_select %p71, %s72, %s73
    %p77 = pneg %p71
    %p78 = scmp.eq.s32.totalorder %s12, 3
    %p79 = por %p77, %p78
    %p80 = scmp.ne.s32.totalorder %s72, %s75
    %p81 = scmp.eq.s32.totalorder %s12, 0
    %p82 = por %p80, %p81
    %p83 = scmp.ne.s32.totalorder %s72, %s75
    %p84 = scmp.eq.s32.totalorder %s17, 3
    %p85 = por %p83, %p84
    %p86 = scmp.ne.s32.totalorder %s75, %s76
    %p87 = scmp.eq.s32.totalorder %s17, 0
    %p88 = por %p86, %p87
    %p89 = scmp.ne.s32.totalorder %s75, %s76
    %p90 = scmp.eq.s32.totalorder %s18, 3
    %p91 = por %p89, %p90
    %p93 = scmp.ne.s32.totalorder %s76, %s92
    %p94 = scmp.eq.s32.totalorder %s18, 0
    %p95 = por %p93, %p94
    %s96 = smul.u32 %s20, 8
    %s97 = sadd.s32 %s96, 8
    %p98 = scmp.lt.s32.totalorder %s97, 15
    %s99 = scalar_select %p98, %s97, 15
    %s100 = smul.u32 %s27, 8
    %s101 = sadd.s32 %s100, 8
    %p102 = scmp.lt.s32.totalorder %s101, 15
    %s103 = scalar_select %p102, %s101, 15
    %s104 = ssub.s32 %s19, %s31
    %s105 = ssub.s32 %s99, %s103
    %s106 = sor.u32 %s104, %s105
    %p107 = scmp.eq.s32.totalorder %s106, 0
    %s109 = sadd.s32 %s108, 1
    %s110 = scalar_select %p107, %s108, %s109
    %p113 = pneg %p107
    %p114 = scmp.eq.s32.totalorder %s12, 3
    %p115 = por %p113, %p114
    %p116 = scmp.ne.s32.totalorder %s108, %s111
    %p117 = scmp.eq.s32.totalorder %s12, 0
    %p118 = por %p116, %p117
    %p119 = scmp.ne.s32.totalorder %s108, %s111
    %p120 = scmp.eq.s32.totalorder %s17, 3
    %p121 = por %p119, %p120
    %p122 = scmp.ne.s32.totalorder %s111, %s112
    %p123 = scmp.eq.s32.totalorder %s17, 0
    %p124 = por %p122, %p123
    %p125 = scmp.ne.s32.totalorder %s111, %s112
    %p126 = scmp.eq.s32.totalorder %s18, 3
    %p127 = por %p125, %p126
    %p129 = scmp.ne.s32.totalorder %s112, %s128
    %p130 = scmp.eq.s32.totalorder %s18, 0
    %p131 = por %p129, %p130
    %s133 = sadd.s32 %s132, 1
    %p136 = scmp.eq.s32.totalorder %s12, 3
    %p137 = scmp.ne.s32.totalorder %s132, %s134
    %p138 = scmp.eq.s32.totalorder %s12, 0
    %p139 = por %p137, %p138
    %p140 = scmp.ne.s32.totalorder %s132, %s134
    %p141 = scmp.eq.s32.totalorder %s17, 3
    %p142 = por %p140, %p141
    %p143 = scmp.ne.s32.totalorder %s134, %s135
    %p144 = scmp.eq.s32.totalorder %s17, 0
    %p145 = por %p143, %p144
    %p146 = scmp.ne.s32.totalorder %s134, %s135
    %p147 = scmp.eq.s32.totalorder %s18, 3
    %p148 = por %p146, %p147
    %p150 = scmp.ne.s32.totalorder %s135, %s149
    %p151 = scmp.eq.s32.totalorder %s18, 0
    %p152 = por %p150, %p151
    %s154 = sadd.s32 %s153, 1
    %p157 = scmp.eq.s32.totalorder %s12, 3
    %p158 = scmp.ne.s32.totalorder %s153, %s155
    %p159 = scmp.eq.s32.totalorder %s12, 0
    %p160 = por %p158, %p159
    %p161 = scmp.ne.s32.totalorder %s153, %s155
    %p162 = scmp.eq.s32.totalorder %s17, 3
    %p163 = por %p161, %p162
    %p164 = scmp.ne.s32.totalorder %s155, %s156
    %p165 = scmp.eq.s32.totalorder %s17, 0
    %p166 = por %p164, %p165
    %p167 = scmp.ne.s32.totalorder %s155, %s156
    %p168 = scmp.eq.s32.totalorder %s18, 3
    %p169 = por %p167, %p168
    %p171 = scmp.ne.s32.totalorder %s156, %s170
    %p172 = scmp.eq.s32.totalorder %s18, 0
    %p173 = por %p171, %p172
    %s175 = sadd.s32 %s174, 1
    %p178 = scmp.eq.s32.totalorder %s12, 3
    %p179 = scmp.ne.s32.totalorder %s174, %s176
    %p180 = scmp.eq.s32.totalorder %s12, 0
    %p181 = por %p179, %p180
    %p182 = scmp.ne.s32.totalorder %s174, %s176
    %p183 = scmp.eq.s32.totalorder %s17, 3
    %p184 = por %p182, %p183
    %p185 = scmp.ne.s32.totalorder %s176, %s177
    %p186 = scmp.eq.s32.totalorder %s17, 0
    %p187 = por %p185, %p186
    %p188 = scmp.ne.s32.totalorder %s176, %s177
    %p189 = scmp.eq.s32.totalorder %s18, 3
    %p190 = por %p188, %p189
    %p192 = scmp.ne.s32.totalorder %s177, %s191
    %p193 = scmp.eq.s32.totalorder %s18, 0
    %p194 = por %p192, %p193
    %s195 = ssub.s32 %s19, %s31
    %s196 = ssub.s32 %s20, %s27
    %s197 = sor.u32 %s195, %s196
    %p198 = scmp.eq.s32.totalorder %s197, 0
    %s200 = sadd.s32 %s199, 1
    %s201 = scalar_select %p198, %s199, %s200
    %p204 = pneg %p198
    %p205 = scmp.eq.s32.totalorder %s12, 3
    %p206 = por %p204, %p205
    %p207 = scmp.ne.s32.totalorder %s199, %s202
    %p208 = scmp.eq.s32.totalorder %s12, 0
    %p209 = por %p207, %p208
    %p210 = scmp.ne.s32.totalorder %s199, %s202
    %p211 = scmp.eq.s32.totalorder %s17, 3
    %p212 = por %p210, %p211
    %p213 = scmp.ne.s32.totalorder %s202, %s203
    %p214 = scmp.eq.s32.totalorder %s17, 0
    %p215 = por %p213, %p214
    %p216 = scmp.ne.s32.totalorder %s202, %s203
    %p217 = scmp.eq.s32.totalorder %s18, 3
    %p218 = por %p216, %p217
    %p220 = scmp.ne.s32.totalorder %s203, %s219
    %p221 = scmp.eq.s32.totalorder %s18, 0
    %p222 = por %p220, %p221
    %p223 = scmp.le.s32.totalorder 1, %s12
    %p224 = scmp.lt.s32.totalorder %s12, 5
    %p225 = pnand %p223, %p224
    %p226 = pneg %p225
    // Predicated region
    $region9: #{bottleneck_forward.3} parent=5 // pred_check
      _
    $region10: #{bottleneck_forward.3} parent=5 // pred_check_branch
      %228 = sbr.rel (%p225) target = $region12
    $region11: #{bottleneck_forward.3} parent=5 // pred_region
      %s229 = ssub.s32 %s12, 1
      // Predicated region
      $region13: #{bottleneck_forward.3} parent=11 // pred_check
        %p230 = pneg %p145
      $region14: #{bottleneck_forward.3} parent=11 // pred_check_branch
        %232 = sbr.rel (%p230) target = $region16
      $region15: #{bottleneck_forward.3} parent=11 // pred_region
        _
      $region16: #{bottleneck_forward.3} parent=11 // pred_fallthru
        _
      // Predicated region
      $region17: #{bottleneck_forward.3} parent=11 // pred_check
        %p233 = pneg %p166
      $region18: #{bottleneck_forward.3} parent=11 // pred_check_branch
        %235 = sbr.rel (%p233) target = $region20
      $region19: #{bottleneck_forward.3} parent=11 // pred_region
        _
      $region20: #{bottleneck_forward.3} parent=11 // pred_fallthru
        _
      // Predicated region
      $region21: #{bottleneck_forward.3} parent=11 // pred_check
        %p236 = pneg %p187
      $region22: #{bottleneck_forward.3} parent=11 // pred_check_branch
        %238 = sbr.rel (%p236) target = $region24
      $region23: #{bottleneck_forward.3} parent=11 // pred_region
        _
      $region24: #{bottleneck_forward.3} parent=11 // pred_fallthru
        _
    $region12: #{bottleneck_forward.3} parent=5 // pred_fallthru
      _
    %p239 = scmp.lt.s32.totalorder %s12, 4
    // Predicated region
    $region25: #{bottleneck_forward.3} parent=5 // pred_check
      %p240 = pneg %p239
    $region26: #{bottleneck_forward.3} parent=5 // pred_check_branch
      %242 = sbr.rel (%p240) target = $region28
    $region27: #{bottleneck_forward.3} parent=5 // pred_region
      // Predicated region
      $region29: #{bottleneck_forward.3} parent=27 // pred_check
        %p243 = pneg %p46
      $region30: #{bottleneck_forward.3} parent=27 // pred_check_branch
        %245 = sbr.rel (%p243) target = $region32
      $region31: #{bottleneck_forward.3} parent=27 // pred_region
        %s246 = smul.u32 8, %s20
        %p247 = scmp.lt.s32.totalorder %s19, 1
        %s248 = scalar_select %p247, %s19, 1
        %p249 = scmp.lt.s32.totalorder %s246, 15
        %s250 = scalar_select %p249, %s246, 15
        %s251 = smul.addr %s250, 2
        %s252 = smul.addr %s248, 32
        %s253 = sadd.s32 %s251, %s252
        %s254 = smul.addr %s253, 4
        %s255 = scalar_lea.vmem %s0, %s254
        %s256 = smul.u32 8, %s20
      $region32: #{bottleneck_forward.3} parent=27 // pred_fallthru
        _
      // Predicated region
      $region33: #{bottleneck_forward.3} parent=27 // pred_check
        %p257 = pneg %p82
      $region34: #{bottleneck_forward.3} parent=27 // pred_check_branch
        %259 = sbr.rel (%p257) target = $region36
      $region35: #{bottleneck_forward.3} parent=27 // pred_region
        %s260 = smul.u32 %s20, 8
        %s261 = ssub.s32 %s260, 1
        %p262 = scmp.gt.s32.totalorder %s261, 0
        %s263 = scalar_select %p262, %s261, 0
        %p264 = scmp.lt.s32.totalorder %s19, 1
        %s265 = scalar_select %p264, %s19, 1
        %p266 = scmp.lt.s32.totalorder %s263, 15
        %s267 = scalar_select %p266, %s263, 15
        %s268 = smul.addr %s267, 2
        %s269 = smul.addr %s265, 32
        %s270 = sadd.s32 %s268, %s269
        %s271 = smul.addr %s270, 4
        %s272 = scalar_lea.vmem %s1, %s271
        %s273 = smul.u32 %s20, 8
        %s274 = ssub.s32 %s273, 1
        %p275 = scmp.gt.s32.totalorder %s274, 0
        %s276 = scalar_select %p275, %s274, 0
      $region36: #{bottleneck_forward.3} parent=27 // pred_fallthru
        _
      // Predicated region
      $region37: #{bottleneck_forward.3} parent=27 // pred_check
        %p277 = pneg %p118
      $region38: #{bottleneck_forward.3} parent=27 // pred_check_branch
        %279 = sbr.rel (%p277) target = $region40
      $region39: #{bottleneck_forward.3} parent=27 // pred_region
        %s280 = smul.u32 %s20, 8
        %s281 = sadd.s32 %s280, 8
        %p282 = scmp.lt.s32.totalorder %s281, 15
        %s283 = scalar_select %p282, %s281, 15
        %p284 = scmp.lt.s32.totalorder %s19, 1
        %s285 = scalar_select %p284, %s19, 1
        %p286 = scmp.lt.s32.totalorder %s283, 15
        %s287 = scalar_select %p286, %s283, 15
        %s288 = smul.addr %s287, 2
        %s289 = smul.addr %s285, 32
        %s290 = sadd.s32 %s288, %s289
        %s291 = smul.addr %s290, 4
        %s292 = scalar_lea.vmem %s2, %s291
        %s293 = smul.u32 %s20, 8
        %s294 = sadd.s32 %s293, 8
        %p295 = scmp.lt.s32.totalorder %s294, 15
        %s296 = scalar_select %p295, %s294, 15
      $region40: #{bottleneck_forward.3} parent=27 // pred_fallthru
        _
    $region28: #{bottleneck_forward.3} parent=5 // pred_fallthru
      _
    %p297 = scmp.le.s32.totalorder 1, %s12
    %p298 = scmp.lt.s32.totalorder %s12, 5
    %p299 = pnand %p297, %p298
    %p300 = pneg %p299
    // Predicated region
    $region41: #{bottleneck_forward.3} parent=5 // pred_check
      _
    $region42: #{bottleneck_forward.3} parent=5 // pred_check_branch
      %302 = sbr.rel (%p299) target = $region44
    $region43: #{bottleneck_forward.3} parent=5 // pred_region
      %s303 = ssub.s32 %s12, 1
      %s304 = smul.u32 8, %s22
      %p305 = scmp.lt.s32.totalorder %s21, 1
      %s306 = scalar_select %p305, %s21, 1
      %p307 = scmp.lt.s32.totalorder %s304, 15
      %s308 = scalar_select %p307, %s304, 15
      %s309 = smul.addr %s308, 2
      %s310 = smul.addr %s306, 32
      %s311 = sadd.s32 %s309, %s310
      %s312 = smul.addr %s311, 4
      %s313 = scalar_lea.vmem %s0, %s312
      %p314 = pneg %p52
      %p315 = pneg %p49
      %s316 = smul.u32 %s22, 8
      %s317 = ssub.s32 %s316, 1
      %p318 = scmp.gt.s32.totalorder %s317, 0
      %s319 = scalar_select %p318, %s317, 0
      %p320 = scmp.lt.s32.totalorder %s21, 1
      %s321 = scalar_select %p320, %s21, 1
      %p322 = scmp.lt.s32.totalorder %s319, 15
      %s323 = scalar_select %p322, %s319, 15
      %s324 = smul.addr %s323, 2
      %s325 = smul.addr %s321, 32
      %s326 = sadd.s32 %s324, %s325
      %s327 = smul.addr %s326, 4
      %s328 = scalar_lea.vmem %s1, %s327
      %p329 = pneg %p88
      %p330 = pneg %p85
      %s331 = smul.u32 %s22, 8
      %s332 = sadd.s32 %s331, 8
      %p333 = scmp.lt.s32.totalorder %s332, 15
      %s334 = scalar_select %p333, %s332, 15
      %p335 = scmp.lt.s32.totalorder %s21, 1
      %s336 = scalar_select %p335, %s21, 1
      %p337 = scmp.lt.s32.totalorder %s334, 15
      %s338 = scalar_select %p337, %s334, 15
      %s339 = smul.addr %s338, 2
      %s340 = smul.addr %s336, 32
      %s341 = sadd.s32 %s339, %s340
      %s342 = smul.addr %s341, 4
      %s343 = scalar_lea.vmem %s2, %s342
      %p344 = pneg %p124
      %p345 = pneg %p121
      %p346 = pneg %p145
      %p347 = pneg %p142
      %p348 = pneg %p166
      %p349 = pneg %p163
      %p350 = pneg %p187
      %p351 = pneg %p184
      %p352 = pneg %p215
      %p353 = pneg %p212
      %p354 = scmp.lt.s32.totalorder %s21, 1
      %s355 = scalar_select %p354, %s21, 1
      %p356 = scmp.lt.s32.totalorder %s22, 1
      %s357 = scalar_select %p356, %s22, 1
      %s358 = smul.addr %s355, 2
      %s359 = sadd.s32 %s357, %s358
      %s360 = smul.addr %s359, 8
      %s361 = scalar_lea.vmem %s6, %s360
      %s362 = smul.u32 8, %s22
      %p363 = scmp.lt.s32.totalorder %s21, 1
      %s364 = scalar_select %p363, %s21, 1
      %p365 = scmp.lt.s32.totalorder %s362, 15
      %s366 = scalar_select %p365, %s362, 15
      %s367 = smul.addr %s366, 2
      %s368 = smul.addr %s364, 32
      %s369 = sadd.s32 %s367, %s368
      %s370 = smul.addr %s369, 4
      %s371 = scalar_lea.vmem %s0, %s370
      %s372 = smul.u32 8, %s22
      %s373 = smul.u32 %s22, 8
      %s374 = ssub.s32 %s373, 1
      %p375 = scmp.gt.s32.totalorder %s374, 0
      %s376 = scalar_select %p375, %s374, 0
      %p377 = scmp.lt.s32.totalorder %s21, 1
      %s378 = scalar_select %p377, %s21, 1
      %p379 = scmp.lt.s32.totalorder %s376, 15
      %s380 = scalar_select %p379, %s376, 15
      %s381 = smul.addr %s380, 2
      %s382 = smul.addr %s378, 32
      %s383 = sadd.s32 %s381, %s382
      %s384 = smul.addr %s383, 4
      %s385 = scalar_lea.vmem %s1, %s384
      %s386 = smul.u32 %s22, 8
      %s387 = ssub.s32 %s386, 1
      %p388 = scmp.gt.s32.totalorder %s387, 0
      %s389 = scalar_select %p388, %s387, 0
      %s390 = smul.u32 %s22, 8
      %s391 = sadd.s32 %s390, 8
      %p392 = scmp.lt.s32.totalorder %s391, 15
      %s393 = scalar_select %p392, %s391, 15
      %p394 = scmp.lt.s32.totalorder %s21, 1
      %s395 = scalar_select %p394, %s21, 1
      %p396 = scmp.lt.s32.totalorder %s393, 15
      %s397 = scalar_select %p396, %s393, 15
      %s398 = smul.addr %s397, 2
      %s399 = smul.addr %s395, 32
      %s400 = sadd.s32 %s398, %s399
      %s401 = smul.addr %s400, 4
      %s402 = scalar_lea.vmem %s2, %s401
      %s403 = smul.u32 %s22, 8
      %s404 = sadd.s32 %s403, 8
      %p405 = scmp.lt.s32.totalorder %s404, 15
      %s406 = scalar_select %p405, %s404, 15
      %p407 = scmp.lt.s32.totalorder %s21, 1
      %s408 = scalar_select %p407, %s21, 1
      %p409 = scmp.lt.s32.totalorder %s22, 1
      %s410 = scalar_select %p409, %s22, 1
      %s411 = smul.addr %s408, 2
      %s412 = sadd.s32 %s410, %s411
      %s413 = smul.addr %s412, 8
      %s414 = scalar_lea.vmem %s6, %s413
      %v416 = vld [vmem:[%s3] sm:$0x1]
      %v417 = vld [vmem:[%s4] sm:$0x1]
      %v418 = vld [vmem:[%s371] sm:$0xf]
      %v419 = vld [vmem:[%s371 + $0x4] sm:$0xf]
      %v420 = vld [vmem:[%s371 + $0x8] sm:$0xf]
      %v421 = vld [vmem:[%s371 + $0xc] sm:$0xf]
      %v422 = vld [vmem:[%s371 + $0x10] sm:$0xf]
      %v423 = vld [vmem:[%s371 + $0x14] sm:$0xf]
      %v424 = vld [vmem:[%s371 + $0x18] sm:$0xf]
      %v425 = vld [vmem:[%s371 + $0x1c] sm:$0xf]
      %v426 = vld [vmem:[%s371 + $0x20] sm:$0xf]
      %v427 = vld [vmem:[%s371 + $0x24] sm:$0xf]
      %v428 = vld [vmem:[%s371 + $0x28] sm:$0xf]
      %v429 = vld [vmem:[%s371 + $0x2c] sm:$0xf]
      %v430 = vld [vmem:[%s371 + $0x30] sm:$0xf]
      %v431 = vld [vmem:[%s371 + $0x34] sm:$0xf]
      %v432 = vld [vmem:[%s371 + $0x38] sm:$0xf]
      %v433 = vld [vmem:[%s371 + $0x3c] sm:$0xf]
      %v434 = vunpack.c.l.bf16 %v418
      %v435 = vunpack.c.l.bf16 %v419
      %v436 = vunpack.c.l.bf16 %v420
      %v437 = vunpack.c.l.bf16 %v421
      %v438 = vunpack.c.l.bf16 %v422
      %v439 = vunpack.c.l.bf16 %v423
      %v440 = vunpack.c.l.bf16 %v424
      %v441 = vunpack.c.l.bf16 %v425
      %v442 = vunpack.c.l.bf16 %v426
      %v443 = vunpack.c.l.bf16 %v427
      %v444 = vunpack.c.l.bf16 %v428
      %v445 = vunpack.c.l.bf16 %v429
      %v446 = vunpack.c.l.bf16 %v430
      %v447 = vunpack.c.l.bf16 %v431
      %v448 = vunpack.c.l.bf16 %v432
      %v449 = vunpack.c.l.bf16 %v433
      %v451 = vlaneseq
      %v452 = vshrl.u32 %v451, 7
      %v453 = vsub.s32 0, %v452
      %v454 = vrot.slane %v416, %v453
      %v456 = vmul.f32 %v434, %v454
      %v457 = vmul.f32 %v435, %v454
      %v458 = vmul.f32 %v436, %v454
      %v459 = vmul.f32 %v437, %v454
      %v460 = vmul.f32 %v438, %v454
      %v461 = vmul.f32 %v439, %v454
      %v462 = vmul.f32 %v440, %v454
      %v463 = vmul.f32 %v441, %v454
      %v464 = vmul.f32 %v442, %v454
      %v465 = vmul.f32 %v443, %v454
      %v466 = vmul.f32 %v444, %v454
      %v467 = vmul.f32 %v445, %v454
      %v468 = vmul.f32 %v446, %v454
      %v469 = vmul.f32 %v447, %v454
      %v470 = vmul.f32 %v448, %v454
      %v471 = vmul.f32 %v449, %v454
      %v473 = vlaneseq
      %v474 = vshrl.u32 %v473, 7
      %v475 = vsub.s32 0, %v474
      %v476 = vrot.slane %v417, %v475
      %v478 = vadd.f32 %v456, %v476
      %v479 = vadd.f32 %v457, %v476
      %v480 = vadd.f32 %v458, %v476
      %v481 = vadd.f32 %v459, %v476
      %v482 = vadd.f32 %v460, %v476
      %v483 = vadd.f32 %v461, %v476
      %v484 = vadd.f32 %v462, %v476
      %v485 = vadd.f32 %v463, %v476
      %v486 = vadd.f32 %v464, %v476
      %v487 = vadd.f32 %v465, %v476
      %v488 = vadd.f32 %v466, %v476
      %v489 = vadd.f32 %v467, %v476
      %v490 = vadd.f32 %v468, %v476
      %v491 = vadd.f32 %v469, %v476
      %v492 = vadd.f32 %v470, %v476
      %v493 = vadd.f32 %v471, %v476
      %v494 = vmax.f32 %v478, 0.0
      %v495 = vmax.f32 %v479, 0.0
      %v496 = vmax.f32 %v480, 0.0
      %v497 = vmax.f32 %v481, 0.0
      %v498 = vmax.f32 %v482, 0.0
      %v499 = vmax.f32 %v483, 0.0
      %v500 = vmax.f32 %v484, 0.0
      %v501 = vmax.f32 %v485, 0.0
      %v502 = vmax.f32 %v486, 0.0
      %v503 = vmax.f32 %v487, 0.0
      %v504 = vmax.f32 %v488, 0.0
      %v505 = vmax.f32 %v489, 0.0
      %v506 = vmax.f32 %v490, 0.0
      %v507 = vmax.f32 %v491, 0.0
      %v508 = vmax.f32 %v492, 0.0
      %v509 = vmax.f32 %v493, 0.0
      %v510 = vld [vmem:[%s385] sm:$0xf]
      %v511 = vld [vmem:[%s385 + $0x4] sm:$0xf]
      %v512 = vunpack.c.l.bf16 %v510
      %v513 = vunpack.c.l.bf16 %v511
      %v514 = vmul.f32 %v512, %v454
      %v515 = vmul.f32 %v513, %v454
      %v516 = vadd.f32 %v514, %v476
      %v517 = vadd.f32 %v515, %v476
      %v518 = vmax.f32 %v516, 0.0
      %v519 = vmax.f32 %v517, 0.0
      %v520 = vld [vmem:[%s402] sm:$0xf]
      %v521 = vld [vmem:[%s402 + $0x4] sm:$0xf]
      %v522 = vunpack.c.l.bf16 %v520
      %v523 = vunpack.c.l.bf16 %v521
      %v524 = vmul.f32 %v522, %v454
      %v525 = vmul.f32 %v523, %v454
      %v526 = vadd.f32 %v524, %v476
      %v527 = vadd.f32 %v525, %v476
      %v528 = vmax.f32 %v526, 0.0
      %v529 = vmax.f32 %v527, 0.0
      %p530 = scmp.gt.s32.totalorder %s22, 0
      %s531 = scalar_select %p530, 1, 0
      %s532 = scvt.s32.f32 %s531
      %v533 = vstv %s532
      %v534 = vmul.f32 %v518, %v533
      %v535 = vmul.f32 %v519, %v533
      %p536 = scmp.lt.s32.totalorder %s22, 1
      %s537 = scalar_select %p536, 1, 0
      %s538 = scvt.s32.f32 %s537
      %v539 = vstv %s538
      %v540 = vmul.f32 %v528, %v539
      %v541 = vmul.f32 %v529, %v539
      %v542 = vpack.c.bf16 %v535, %v534
      %v544 = vunpack.c.l.b16 %v542
      %v545 = vunpack.c.h.b16 %v542
      %v546 = vpack.c.b16 %v544, %v544
      %v547 = vpack.c.b16 %v545, %v545
      %vm550 = vcmask 257024
      %551 = vst.msk [vmem:[#allocation2] sm:$0xf] %vm550, %v546
      %552 = vst.msk [vmem:[#allocation2 + $0x4] sm:$0xf] %vm550, %v547
      %v553 = vpack.c.bf16 %v495, %v494
      %v554 = vpack.c.bf16 %v497, %v496
      %v555 = vpack.c.bf16 %v499, %v498
      %v556 = vpack.c.bf16 %v501, %v500
      %v557 = vpack.c.bf16 %v503, %v502
      %v558 = vpack.c.bf16 %v505, %v504
      %v559 = vpack.c.bf16 %v507, %v506
      %v560 = vpack.c.bf16 %v509, %v508
      %v569 = vunpack.c.l.b16 %v553
      %v570 = vunpack.c.h.b16 %v553
      %v571 = vunpack.c.l.b16 %v554
      %v572 = vunpack.c.h.b16 %v554
      %v573 = vunpack.c.l.b16 %v555
      %v574 = vunpack.c.h.b16 %v555
      %v575 = vunpack.c.l.b16 %v556
      %v576 = vunpack.c.h.b16 %v556
      %v577 = vunpack.c.l.b16 %v557
      %v578 = vunpack.c.h.b16 %v557
      %v579 = vunpack.c.l.b16 %v558
      %v580 = vunpack.c.h.b16 %v558
      %v581 = vunpack.c.l.b16 %v559
      %v582 = vunpack.c.h.b16 %v559
      %v583 = vunpack.c.l.b16 %v560
      %v584 = vunpack.c.h.b16 %v560
      %v585 = vpack.c.b16 %v569, %v569
      %v586 = vpack.c.b16 %v570, %v570
      %v587 = vpack.c.b16 %v571, %v571
      %v588 = vpack.c.b16 %v572, %v572
      %v589 = vpack.c.b16 %v573, %v573
      %v590 = vpack.c.b16 %v574, %v574
      %v591 = vpack.c.b16 %v575, %v575
      %v592 = vpack.c.b16 %v576, %v576
      %v593 = vpack.c.b16 %v577, %v577
      %v594 = vpack.c.b16 %v578, %v578
      %v595 = vpack.c.b16 %v579, %v579
      %v596 = vpack.c.b16 %v580, %v580
      %v597 = vpack.c.b16 %v581, %v581
      %v598 = vpack.c.b16 %v582, %v582
      %v599 = vpack.c.b16 %v583, %v583
      %v600 = vpack.c.b16 %v584, %v584
      %s617 = scalar_lea.vmem [#allocation2], 8
      %618 = vst.msk [vmem:[%s617] sm:$0xf] %vm550, %v585
      %619 = vst.msk [vmem:[%s617 + $0x4] sm:$0xf] %vm550, %v586
      %620 = vst.msk [vmem:[%s617 + $0x8] sm:$0xf] %vm550, %v587
      %621 = vst.msk [vmem:[%s617 + $0xc] sm:$0xf] %vm550, %v588
      %622 = vst.msk [vmem:[%s617 + $0x10] sm:$0xf] %vm550, %v589
      %623 = vst.msk [vmem:[%s617 + $0x14] sm:$0xf] %vm550, %v590
      %624 = vst.msk [vmem:[%s617 + $0x18] sm:$0xf] %vm550, %v591
      %625 = vst.msk [vmem:[%s617 + $0x1c] sm:$0xf] %vm550, %v592
      %626 = vst.msk [vmem:[%s617 + $0x20] sm:$0xf] %vm550, %v593
      %627 = vst.msk [vmem:[%s617 + $0x24] sm:$0xf] %vm550, %v594
      %628 = vst.msk [vmem:[%s617 + $0x28] sm:$0xf] %vm550, %v595
      %629 = vst.msk [vmem:[%s617 + $0x2c] sm:$0xf] %vm550, %v596
      %630 = vst.msk [vmem:[%s617 + $0x30] sm:$0xf] %vm550, %v597
      %631 = vst.msk [vmem:[%s617 + $0x34] sm:$0xf] %vm550, %v598
      %632 = vst.msk [vmem:[%s617 + $0x38] sm:$0xf] %vm550, %v599
      %633 = vst.msk [vmem:[%s617 + $0x3c] sm:$0xf] %vm550, %v600
      %v634 = vpack.c.bf16 %v541, %v540
      %v636 = vunpack.c.l.b16 %v634
      %v637 = vunpack.c.h.b16 %v634
      %v638 = vpack.c.b16 %v636, %v636
      %v639 = vpack.c.b16 %v637, %v637
      %s642 = scalar_lea.vmem [#allocation2], 72
      %643 = vst.msk [vmem:[%s642] sm:$0xf] %vm550, %v638
      %644 = vst.msk [vmem:[%s642 + $0x4] sm:$0xf] %vm550, %v639
      %v645 = vlaneseq
      %v646 = vand.u32 %v645, 127
      %v647 = vcombine.high %v646, 0
      %v649 = vunpack.c.l.s4 1983009808
      %v650 = vunpack.c.0.s8 %v649
      %v651 = vlaneseq
      %v652 = vshrl.u32 %v651, 7
      %v653 = vsub.s32 %v650, %v652
      %v654 = vrot.slane %v646, %v653
      %v656 = vunpack.c.l.s4 1983009808
      %v657 = vunpack.c.0.s8 %v656
      %v658 = vlaneseq
      %v659 = vshrl.u32 %v658, 7
      %v660 = vsub.s32 %v657, %v659
      %v661 = vrot.slane %v647, %v660
      %v662 = vcombine.high %v654, 0
      %v664 = vunpack.c.l.s4 1934713408
      %v665 = vunpack.c.0.s8 %v664
      %v666 = vlaneseq
      %v667 = vshrl.u32 %v666, 7
      %v668 = vsub.s32 %v665, %v667
      %v669 = vrot.slane %v654, %v668
      %v671 = vunpack.c.l.s4 1934713408
      %v672 = vunpack.c.0.s8 %v671
      %v673 = vlaneseq
      %v674 = vshrl.u32 %v673, 7
      %v675 = vsub.s32 %v672, %v674
      %v676 = vrot.slane %v662, %v675
      %v677 = vcombine.high %v661, 0
      %v679 = vunpack.c.l.s4 1934713408
      %v680 = vunpack.c.0.s8 %v679
      %v681 = vlaneseq
      %v682 = vshrl.u32 %v681, 7
      %v683 = vsub.s32 %v680, %v682
      %v684 = vrot.slane %v661, %v683
      %v686 = vunpack.c.l.s4 1934713408
      %v687 = vunpack.c.0.s8 %v686
      %v688 = vlaneseq
      %v689 = vshrl.u32 %v688, 7
      %v690 = vsub.s32 %v687, %v689
      %v691 = vrot.slane %v677, %v690
      %v692 = vcombine.high %v669, 0
      %v693 = vcombine.high %v676, 0
      %v694 = vcombine.high %v684, 0
      %v695 = vcombine.high %v691, 0
      %696 = vrot.lane.b32.xlu0 %v692, 16
      %v697 = vpop.permute.xlu0 %696
      %698 = vrot.lane.b32.xlu0 %v676, 32
      %v699 = vpop.permute.xlu0 %698
      %700 = vrot.lane.b32.xlu0 %v693, 48
      %v701 = vpop.permute.xlu0 %700
      %702 = vrot.lane.b32.xlu0 %v684, 64
      %v703 = vpop.permute.xlu0 %702
      %704 = vrot.lane.b32.xlu0 %v694, 80
      %v705 = vpop.permute.xlu0 %704
      %706 = vrot.lane.b32.xlu0 %v691, 96
      %v707 = vpop.permute.xlu0 %706
      %708 = vrot.lane.b32.xlu0 %v695, 112
      %v709 = vpop.permute.xlu0 %708
      %vm710 = vcmask 130048
      %v711 = vsel %vm710, %v669, %v697
      %vm712 = vcmask 261120
      %v713 = vsel %vm712, %v711, %v699
      %vm714 = vcmask 392192
      %v715 = vsel %vm714, %v713, %v701
      %vm716 = vcmask 523264
      %v717 = vsel %vm716, %v715, %v703
      %vm718 = vcmask 654336
      %v719 = vsel %vm718, %v717, %v705
      %vm720 = vcmask 785408
      %v721 = vsel %vm720, %v719, %v707
      %vm722 = vcmask 916480
      %v723 = vsel %vm722, %v721, %v709
      %vm724 = vcmp.ne.s32.totalorder %v723, 0
      %vm725 = vcmp.ne.s32.totalorder %v723, 15
      %v726 = vld [vmem:[#allocation2] sm:$0xf]
      %v727 = vld [vmem:[#allocation2 + $0x4] sm:$0xf]
      %v728 = vld [vmem:[#allocation2 + $0x8] sm:$0xf]
      %v729 = vld [vmem:[#allocation2 + $0xc] sm:$0xf]
      %v730 = vld [vmem:[#allocation2 + $0x10] sm:$0xf]
      %v731 = vld [vmem:[#allocation2 + $0x14] sm:$0xf]
      %v732 = vld [vmem:[#allocation2 + $0x18] sm:$0xf]
      %v733 = vld [vmem:[#allocation2 + $0x1c] sm:$0xf]
      %v734 = vld [vmem:[#allocation2 + $0x20] sm:$0xf]
      %v735 = vld [vmem:[#allocation2 + $0x24] sm:$0xf]
      %v736 = vld [vmem:[#allocation2 + $0x28] sm:$0xf]
      %v737 = vld [vmem:[#allocation2 + $0x2c] sm:$0xf]
      %v738 = vld [vmem:[#allocation2 + $0x30] sm:$0xf]
      %v739 = vld [vmem:[#allocation2 + $0x34] sm:$0xf]
      %v740 = vld [vmem:[#allocation2 + $0x38] sm:$0xf]
      %v741 = vld [vmem:[#allocation2 + $0x3c] sm:$0xf]
      %v742 = vld [vmem:[%s5] sm:$0xf]
      %v759 = vunpack.c.l.b16 %v726
      %v760 = vunpack.c.l.b16 %v727
      %v761 = vunpack.c.l.b16 %v728
      %v762 = vunpack.c.l.b16 %v729
      %v763 = vunpack.c.l.b16 %v730
      %v764 = vunpack.c.l.b16 %v731
      %v765 = vunpack.c.l.b16 %v732
      %v766 = vunpack.c.l.b16 %v733
      %v767 = vunpack.c.l.b16 %v734
      %v768 = vunpack.c.l.b16 %v735
      %v769 = vunpack.c.l.b16 %v736
      %v770 = vunpack.c.l.b16 %v737
      %v771 = vunpack.c.l.b16 %v738
      %v772 = vunpack.c.l.b16 %v739
      %v773 = vunpack.c.l.b16 %v740
      %v774 = vunpack.c.l.b16 %v741
      %v775 = vpack.c.b16 %v760, %v759
      %v776 = vpack.c.b16 %v762, %v761
      %v777 = vpack.c.b16 %v764, %v763
      %v778 = vpack.c.b16 %v766, %v765
      %v779 = vpack.c.b16 %v768, %v767
      %v780 = vpack.c.b16 %v770, %v769
      %v781 = vpack.c.b16 %v772, %v771
      %v782 = vpack.c.b16 %v774, %v773
      %v784 = vsel %vm712, %v742, 0
      %v787 = vsel %vm712, %v775, 0
      %v790 = vsel %vm712, %v776, 0
      %v793 = vsel %vm712, %v777, 0
      %v796 = vsel %vm712, %v778, 0
      %v799 = vsel %vm712, %v779, 0
      %v802 = vsel %vm712, %v780, 0
      %v805 = vsel %vm712, %v781, 0
      %v808 = vsel %vm712, %v782, 0
      %810 = vmatprep.subr.bf16.mxu0 0
      %811 = vmatpush1.bf16.xpose.msra.mxu0 %v808
      %812 = vmatprep.subr.bf16.mxu0 0
      %813 = vmatpush1.bf16.xpose.msra.mxu0 %v805
      %814 = vmatprep.subr.bf16.mxu0 0
      %815 = vmatpush1.bf16.xpose.msra.mxu0 %v802
      %816 = vmatprep.subr.bf16.mxu0 0
      %817 = vmatpush1.bf16.xpose.msra.mxu0 %v799
      %818 = vmatprep.subr.bf16.mxu0 0
      %819 = vmatpush1.bf16.xpose.msra.mxu0 %v796
      %820 = vmatprep.subr.bf16.mxu0 0
      %821 = vmatpush1.bf16.xpose.msra.mxu0 %v793
      %822 = vmatprep.subr.bf16.mxu0 0
      %823 = vmatpush1.bf16.xpose.msra.mxu0 %v790
      %824 = vmatprep.subr.bf16.mxu0 0
      %825 = vmatpush1.bf16.xpose.msra.mxu0 %v787
      %826 = vmatprep.subr.bf16.mxu0 0
      %827 = vmatpush2.bf16.xpose.msra.mxu0 0
      %828 = vmatprep.subr.bf16.mxu0 0
      %829 = vmatpush2.bf16.xpose.msra.mxu0 0
      %830 = vmatprep.subr.bf16.mxu0 0
      %831 = vmatpush2.bf16.xpose.msra.mxu0 0
      %832 = vmatprep.subr.bf16.mxu0 0
      %833 = vmatpush2.bf16.xpose.msra.mxu0 0
      %834 = vmatprep.subr.bf16.mxu0 0
      %835 = vmatpush2.bf16.xpose.msra.mxu0 0
      %836 = vmatprep.subr.bf16.mxu0 0
      %837 = vmatpush2.bf16.xpose.msra.mxu0 0
      %838 = vmatprep.subr.bf16.mxu0 0
      %839 = vmatpush2.bf16.xpose.msra.mxu0 0
      %840 = vmatprep.subr.bf16.mxu0 0
      %841 = vmatpush2.bf16.xpose.msra.mxu0 0
      %842 = vmatprep.mubr.bf16.mxu0 0
      %843 = vmatmul.mubr.bf16.gmra.mxu0 %v784
      %v844 = vpop.f32.mrf.mxu0
      %v845 = vadd.f32 0.0, %v844
      %v846 = vpop.f32.mrf.mxu0
      %v847 = vpop.f32.mrf.mxu0
      %v848 = vpop.f32.mrf.mxu0
      %849 = vdwg.mxu0
      %850 = vrot.lane.b32.xlu0 %v845, 1
      %v851 = vpop.permute.xlu0 %850
      %v852 = vsel %vm724, 1, 0
      %v853 = vlaneseq
      %v854 = vshrl.u32 %v853, 7
      %v855 = vsub.s32 0, %v854
      %v856 = vrot.slane %v852, %v855
      %vm857 = vcmp.eq.s32.totalorder %v856, 1
      %v858 = vsel %vm857, %v851, 0.0
      %v859 = vadd.f32 %v858, 0.0
      %s860 = scalar_lea.vmem %s5, 4
      %v861 = vld [vmem:[%s860] sm:$0xf]
      %v863 = vsel %vm712, %v861, 0
      %865 = vmatprep.subr.bf16.mxu0 0
      %866 = vmatpush1.bf16.xpose.msra.mxu0 %v808
      %867 = vmatprep.subr.bf16.mxu0 0
      %868 = vmatpush1.bf16.xpose.msra.mxu0 %v805
      %869 = vmatprep.subr.bf16.mxu0 0
      %870 = vmatpush1.bf16.xpose.msra.mxu0 %v802
      %871 = vmatprep.subr.bf16.mxu0 0
      %872 = vmatpush1.bf16.xpose.msra.mxu0 %v799
      %873 = vmatprep.subr.bf16.mxu0 0
      %874 = vmatpush1.bf16.xpose.msra.mxu0 %v796
      %875 = vmatprep.subr.bf16.mxu0 0
      %876 = vmatpush1.bf16.xpose.msra.mxu0 %v793
      %877 = vmatprep.subr.bf16.mxu0 0
      %878 = vmatpush1.bf16.xpose.msra.mxu0 %v790
      %879 = vmatprep.subr.bf16.mxu0 0
      %880 = vmatpush1.bf16.xpose.msra.mxu0 %v787
      %881 = vmatprep.subr.bf16.mxu0 0
      %882 = vmatpush2.bf16.xpose.msra.mxu0 0
      %883 = vmatprep.subr.bf16.mxu0 0
      %884 = vmatpush2.bf16.xpose.msra.mxu0 0
      %885 = vmatprep.subr.bf16.mxu0 0
      %886 = vmatpush2.bf16.xpose.msra.mxu0 0
      %887 = vmatprep.subr.bf16.mxu0 0
      %888 = vmatpush2.bf16.xpose.msra.mxu0 0
      %889 = vmatprep.subr.bf16.mxu0 0
      %890 = vmatpush2.bf16.xpose.msra.mxu0 0
      %891 = vmatprep.subr.bf16.mxu0 0
      %892 = vmatpush2.bf16.xpose.msra.mxu0 0
      %893 = vmatprep.subr.bf16.mxu0 0
      %894 = vmatpush2.bf16.xpose.msra.mxu0 0
      %895 = vmatprep.subr.bf16.mxu0 0
      %896 = vmatpush2.bf16.xpose.msra.mxu0 0
      %897 = vmatprep.mubr.bf16.mxu0 0
      %898 = vmatmul.mubr.bf16.gmra.mxu0 %v863
      %v899 = vpop.f32.mrf.mxu0
      %v900 = vadd.f32 0.0, %v899
      %v901 = vpop.f32.mrf.mxu0
      %v902 = vpop.f32.mrf.mxu0
      %v903 = vpop.f32.mrf.mxu0
      %904 = vdwg.mxu0
      %v905 = vadd.f32 %v859, %v900
      %s906 = scalar_lea.vmem %s5, 8
      %v907 = vld [vmem:[%s906] sm:$0xf]
      %v909 = vsel %vm712, %v907, 0
      %911 = vmatprep.subr.bf16.mxu0 0
      %912 = vmatpush1.bf16.xpose.msra.mxu0 %v808
      %913 = vmatprep.subr.bf16.mxu0 0
      %914 = vmatpush1.bf16.xpose.msra.mxu0 %v805
      %915 = vmatprep.subr.bf16.mxu0 0
      %916 = vmatpush1.bf16.xpose.msra.mxu0 %v802
      %917 = vmatprep.subr.bf16.mxu0 0
      %918 = vmatpush1.bf16.xpose.msra.mxu0 %v799
      %919 = vmatprep.subr.bf16.mxu0 0
      %920 = vmatpush1.bf16.xpose.msra.mxu0 %v796
      %921 = vmatprep.subr.bf16.mxu0 0
      %922 = vmatpush1.bf16.xpose.msra.mxu0 %v793
      %923 = vmatprep.subr.bf16.mxu0 0
      %924 = vmatpush1.bf16.xpose.msra.mxu0 %v790
      %925 = vmatprep.subr.bf16.mxu0 0
      %926 = vmatpush1.bf16.xpose.msra.mxu0 %v787
      %927 = vmatprep.subr.bf16.mxu0 0
      %928 = vmatpush2.bf16.xpose.msra.mxu0 0
      %929 = vmatprep.subr.bf16.mxu0 0
      %930 = vmatpush2.bf16.xpose.msra.mxu0 0
      %931 = vmatprep.subr.bf16.mxu0 0
      %932 = vmatpush2.bf16.xpose.msra.mxu0 0
      %933 = vmatprep.subr.bf16.mxu0 0
      %934 = vmatpush2.bf16.xpose.msra.mxu0 0
      %935 = vmatprep.subr.bf16.mxu0 0
      %936 = vmatpush2.bf16.xpose.msra.mxu0 0
      %937 = vmatprep.subr.bf16.mxu0 0
      %938 = vmatpush2.bf16.xpose.msra.mxu0 0
      %939 = vmatprep.subr.bf16.mxu0 0
      %940 = vmatpush2.bf16.xpose.msra.mxu0 0
      %941 = vmatprep.subr.bf16.mxu0 0
      %942 = vmatpush2.bf16.xpose.msra.mxu0 0
      %943 = vmatprep.mubr.bf16.mxu0 0
      %944 = vmatmul.mubr.bf16.gmra.mxu0 %v909
      %v945 = vpop.f32.mrf.mxu0
      %v946 = vadd.f32 0.0, %v945
      %v947 = vpop.f32.mrf.mxu0
      %v948 = vpop.f32.mrf.mxu0
      %v949 = vpop.f32.mrf.mxu0
      %950 = vdwg.mxu0
      %951 = vrot.lane.b32.xlu0 %v946, 127
      %v952 = vpop.permute.xlu0 %951
      %v953 = vsel %vm725, 1, 0
      %v954 = vlaneseq
      %v955 = vshrl.u32 %v954, 7
      %v956 = vsub.s32 0, %v955
      %v957 = vrot.slane %v953, %v956
      %vm958 = vcmp.eq.s32.totalorder %v957, 1
      %v959 = vsel %vm958, %v952, 0.0
      %v960 = vadd.f32 %v905, %v959
      %v961 = vld [vmem:[%s617] sm:$0xf]
      %v962 = vld [vmem:[%s617 + $0x4] sm:$0xf]
      %v963 = vld [vmem:[%s617 + $0x8] sm:$0xf]
      %v964 = vld [vmem:[%s617 + $0xc] sm:$0xf]
      %v965 = vld [vmem:[%s617 + $0x10] sm:$0xf]
      %v966 = vld [vmem:[%s617 + $0x14] sm:$0xf]
      %v967 = vld [vmem:[%s617 + $0x18] sm:$0xf]
      %v968 = vld [vmem:[%s617 + $0x1c] sm:$0xf]
      %v969 = vld [vmem:[%s617 + $0x20] sm:$0xf]
      %v970 = vld [vmem:[%s617 + $0x24] sm:$0xf]
      %v971 = vld [vmem:[%s617 + $0x28] sm:$0xf]
      %v972 = vld [vmem:[%s617 + $0x2c] sm:$0xf]
      %v973 = vld [vmem:[%s617 + $0x30] sm:$0xf]
      %v974 = vld [vmem:[%s617 + $0x34] sm:$0xf]
      %v975 = vld [vmem:[%s617 + $0x38] sm:$0xf]
      %v976 = vld [vmem:[%s617 + $0x3c] sm:$0xf]
      %s977 = scalar_lea.vmem %s5, 12
      %v978 = vld [vmem:[%s977] sm:$0xf]
      %v995 = vunpack.c.l.b16 %v961
      %v996 = vunpack.c.l.b16 %v962
      %v997 = vunpack.c.l.b16 %v963
      %v998 = vunpack.c.l.b16 %v964
      %v999 = vunpack.c.l.b16 %v965
      %v1000 = vunpack.c.l.b16 %v966
      %v1001 = vunpack.c.l.b16 %v967
      %v1002 = vunpack.c.l.b16 %v968
      %v1003 = vunpack.c.l.b16 %v969
      %v1004 = vunpack.c.l.b16 %v970
      %v1005 = vunpack.c.l.b16 %v971
      %v1006 = vunpack.c.l.b16 %v972
      %v1007 = vunpack.c.l.b16 %v973
      %v1008 = vunpack.c.l.b16 %v974
      %v1009 = vunpack.c.l.b16 %v975
      %v1010 = vunpack.c.l.b16 %v976
      %v1011 = vpack.c.b16 %v996, %v995
      %v1012 = vpack.c.b16 %v998, %v997
      %v1013 = vpack.c.b16 %v1000, %v999
      %v1014 = vpack.c.b16 %v1002, %v1001
      %v1015 = vpack.c.b16 %v1004, %v1003
      %v1016 = vpack.c.b16 %v1006, %v1005
      %v1017 = vpack.c.b16 %v1008, %v1007
      %v1018 = vpack.c.b16 %v1010, %v1009
      %v1020 = vsel %vm712, %v978, 0
      %v1023 = vsel %vm712, %v1011, 0
      %v1026 = vsel %vm712, %v1012, 0
      %v1029 = vsel %vm712, %v1013, 0
      %v1032 = vsel %vm712, %v1014, 0
      %v1035 = vsel %vm712, %v1015, 0
      %v1038 = vsel %vm712, %v1016, 0
      %v1041 = vsel %vm712, %v1017, 0
      %v1044 = vsel %vm712, %v1018, 0
      %1046 = vmatprep.subr.bf16.mxu0 0
      %1047 = vmatpush1.bf16.xpose.msra.mxu0 %v1044
      %1048 = vmatprep.subr.bf16.mxu0 0
      %1049 = vmatpush1.bf16.xpose.msra.mxu0 %v1041
      %1050 = vmatprep.subr.bf16.mxu0 0
      %1051 = vmatpush1.bf16.xpose.msra.mxu0 %v1038
      %1052 = vmatprep.subr.bf16.mxu0 0
      %1053 = vmatpush1.bf16.xpose.msra.mxu0 %v1035
      %1054 = vmatprep.subr.bf16.mxu0 0
      %1055 = vmatpush1.bf16.xpose.msra.mxu0 %v1032
      %1056 = vmatprep.subr.bf16.mxu0 0
      %1057 = vmatpush1.bf16.xpose.msra.mxu0 %v1029
      %1058 = vmatprep.subr.bf16.mxu0 0
      %1059 = vmatpush1.bf16.xpose.msra.mxu0 %v1026
      %1060 = vmatprep.subr.bf16.mxu0 0
      %1061 = vmatpush1.bf16.xpose.msra.mxu0 %v1023
      %1062 = vmatprep.subr.bf16.mxu0 0
      %1063 = vmatpush2.bf16.xpose.msra.mxu0 0
      %1064 = vmatprep.subr.bf16.mxu0 0
      %1065 = vmatpush2.bf16.xpose.msra.mxu0 0
      %1066 = vmatprep.subr.bf16.mxu0 0
      %1067 = vmatpush2.bf16.xpose.msra.mxu0 0
      %1068 = vmatprep.subr.bf16.mxu0 0
      %1069 = vmatpush2.bf16.xpose.msra.mxu0 0
      %1070 = vmatprep.subr.bf16.mxu0 0
      %1071 = vmatpush2.bf16.xpose.msra.mxu0 0
      %1072 = vmatprep.subr.bf16.mxu0 0
      %1073 = vmatpush2.bf16.xpose.msra.mxu0 0
      %1074 = vmatprep.subr.bf16.mxu0 0
      %1075 = vmatpush2.bf16.xpose.msra.mxu0 0
      %1076 = vmatprep.subr.bf16.mxu0 0
      %1077 = vmatpush2.bf16.xpose.msra.mxu0 0
      %1078 = vmatprep.mubr.bf16.mxu0 0
      %1079 = vmatmul.mubr.bf16.gmra.mxu0 %v1020
      %v1080 = vpop.f32.mrf.mxu0
      %v1081 = vadd.f32 0.0, %v1080
      %v1082 = vpop.f32.mrf.mxu0
      %v1083 = vpop.f32.mrf.mxu0
      %v1084 = vpop.f32.mrf.mxu0
      %1085 = vdwg.mxu0
      %1086 = vrot.lane.b32.xlu0 %v1081, 1
      %v1087 = vpop.permute.xlu0 %1086
      %v1088 = vsel %vm857, %v1087, 0.0
      %v1089 = vadd.f32 %v960, %v1088
      %s1090 = scalar_lea.vmem %s5, 16
      %v1091 = vld [vmem:[%s1090] sm:$0xf]
      %v1093 = vsel %vm712, %v1091, 0
      %1095 = vmatprep.subr.bf16.mxu0 0
      %1096 = vmatpush1.bf16.xpose.msra.mxu0 %v1044
      %1097 = vmatprep.subr.bf16.mxu0 0
      %1098 = vmatpush1.bf16.xpose.msra.mxu0 %v1041
      %1099 = vmatprep.subr.bf16.mxu0 0
      %1100 = vmatpush1.bf16.xpose.msra.mxu0 %v1038
      %1101 = vmatprep.subr.bf16.mxu0 0
      %1102 = vmatpush1.bf16.xpose.msra.mxu0 %v1035
      %1103 = vmatprep.subr.bf16.mxu0 0
      %1104 = vmatpush1.bf16.xpose.msra.mxu0 %v1032
      %1105 = vmatprep.subr.bf16.mxu0 0
      %1106 = vmatpush1.bf16.xpose.msra.mxu0 %v1029
      %1107 = vmatprep.subr.bf16.mxu0 0
      %1108 = vmatpush1.bf16.xpose.msra.mxu0 %v1026
      %1109 = vmatprep.subr.bf16.mxu0 0
      %1110 = vmatpush1.bf16.xpose.msra.mxu0 %v1023
      %1111 = vmatprep.subr.bf16.mxu0 0
      %1112 = vmatpush2.bf16.xpose.msra.mxu0 0
      %1113 = vmatprep.subr.bf16.mxu0 0
      %1114 = vmatpush2.bf16.xpose.msra.mxu0 0
      %1115 = vmatprep.subr.bf16.mxu0 0
      %1116 = vmatpush2.bf16.xpose.msra.mxu0 0
      %1117 = vmatprep.subr.bf16.mxu0 0
      %1118 = vmatpush2.bf16.xpose.msra.mxu0 0
      %1119 = vmatprep.subr.bf16.mxu0 0
      %1120 = vmatpush2.bf16.xpose.msra.mxu0 0
      %1121 = vmatprep.subr.bf16.mxu0 0
      %1122 = vmatpush2.bf16.xpose.msra.mxu0 0
      %1123 = vmatprep.subr.bf16.mxu0 0
      %1124 = vmatpush2.bf16.xpose.msra.mxu0 0
      %1125 = vmatprep.subr.bf16.mxu0 0
      %1126 = vmatpush2.bf16.xpose.msra.mxu0 0
      %1127 = vmatprep.mubr.bf16.mxu0 0
      %1128 = vmatmul.mubr.bf16.gmra.mxu0 %v1093
      %v1129 = vpop.f32.mrf.mxu0
      %v1130 = vadd.f32 0.0, %v1129
      %v1131 = vpop.f32.mrf.mxu0
      %v1132 = vpop.f32.mrf.mxu0
      %v1133 = vpop.f32.mrf.mxu0
      %1134 = vdwg.mxu0
      %v1135 = vadd.f32 %v1089, %v1130
      %s1136 = scalar_lea.vmem %s5, 20
      %v1137 = vld [vmem:[%s1136] sm:$0xf]
      %v1139 = vsel %vm712, %v1137, 0
      %1141 = vmatprep.subr.bf16.mxu0 0
      %1142 = vmatpush1.bf16.xpose.msra.mxu0 %v1044
      %1143 = vmatprep.subr.bf16.mxu0 0
      %1144 = vmatpush1.bf16.xpose.msra.mxu0 %v1041
      %1145 = vmatprep.subr.bf16.mxu0 0
      %1146 = vmatpush1.bf16.xpose.msra.mxu0 %v1038
      %1147 = vmatprep.subr.bf16.mxu0 0
      %1148 = vmatpush1.bf16.xpose.msra.mxu0 %v1035
      %1149 = vmatprep.subr.bf16.mxu0 0
      %1150 = vmatpush1.bf16.xpose.msra.mxu0 %v1032
      %1151 = vmatprep.subr.bf16.mxu0 0
      %1152 = vmatpush1.bf16.xpose.msra.mxu0 %v1029
      %1153 = vmatprep.subr.bf16.mxu0 0
      %1154 = vmatpush1.bf16.xpose.msra.mxu0 %v1026
      %1155 = vmatprep.subr.bf16.mxu0 0
      %1156 = vmatpush1.bf16.xpose.msra.mxu0 %v1023
      %1157 = vmatprep.subr.bf16.mxu0 0
      %1158 = vmatpush2.bf16.xpose.msra.mxu0 0
      %1159 = vmatprep.subr.bf16.mxu0 0
      %1160 = vmatpush2.bf16.xpose.msra.mxu0 0
      %1161 = vmatprep.subr.bf16.mxu0 0
      %1162 = vmatpush2.bf16.xpose.msra.mxu0 0
      %1163 = vmatprep.subr.bf16.mxu0 0
      %1164 = vmatpush2.bf16.xpose.msra.mxu0 0
      %1165 = vmatprep.subr.bf16.mxu0 0
      %1166 = vmatpush2.bf16.xpose.msra.mxu0 0
      %1167 = vmatprep.subr.bf16.mxu0 0
      %1168 = vmatpush2.bf16.xpose.msra.mxu0 0
      %1169 = vmatprep.subr.bf16.mxu0 0
      %1170 = vmatpush2.bf16.xpose.msra.mxu0 0
      %1171 = vmatprep.subr.bf16.mxu0 0
      %1172 = vmatpush2.bf16.xpose.msra.mxu0 0
      %1173 = vmatprep.mubr.bf16.mxu0 0
      %1174 = vmatmul.mubr.bf16.gmra.mxu0 %v1139
      %v1175 = vpop.f32.mrf.mxu0
      %v1176 = vadd.f32 0.0, %v1175
      %v1177 = vpop.f32.mrf.mxu0
      %v1178 = vpop.f32.mrf.mxu0
      %v1179 = vpop.f32.mrf.mxu0
      %1180 = vdwg.mxu0
      %1181 = vrot.lane.b32.xlu0 %v1176, 127
      %v1182 = vpop.permute.xlu0 %1181
      %v1183 = vsel %vm958, %v1182, 0.0
      %v1184 = vadd.f32 %v1135, %v1183
      %s1185 = scalar_lea.vmem [#allocation2], 16
      %v1186 = vld [vmem:[%s1185] sm:$0xf]
      %v1187 = vld [vmem:[%s1185 + $0x4] sm:$0xf]
      %v1188 = vld [vmem:[%s1185 + $0x8] sm:$0xf]
      %v1189 = vld [vmem:[%s1185 + $0xc] sm:$0xf]
      %v1190 = vld [vmem:[%s1185 + $0x10] sm:$0xf]
      %v1191 = vld [vmem:[%s1185 + $0x14] sm:$0xf]
      %v1192 = vld [vmem:[%s1185 + $0x18] sm:$0xf]
      %v1193 = vld [vmem:[%s1185 + $0x1c] sm:$0xf]
      %v1194 = vld [vmem:[%s1185 + $0x20] sm:$0xf]
      %v1195 = vld [vmem:[%s1185 + $0x24] sm:$0xf]
      %v1196 = vld [vmem:[%s1185 + $0x28] sm:$0xf]
      %v1197 = vld [vmem:[%s1185 + $0x2c] sm:$0xf]
      %v1198 = vld [vmem:[%s1185 + $0x30] sm:$0xf]
      %v1199 = vld [vmem:[%s1185 + $0x34] sm:$0xf]
      %v1200 = vld [vmem:[%s1185 + $0x38] sm:$0xf]
      %v1201 = vld [vmem:[%s1185 + $0x3c] sm:$0xf]
      %s1202 = scalar_lea.vmem %s5, 24
      %v1203 = vld [vmem:[%s1202] sm:$0xf]
      %v1220 = vunpack.c.l.b16 %v1186
      %v1221 = vunpack.c.l.b16 %v1187
      %v1222 = vunpack.c.l.b16 %v1188
      %v1223 = vunpack.c.l.b16 %v1189
      %v1224 = vunpack.c.l.b16 %v1190
      %v1225 = vunpack.c.l.b16 %v1191
      %v1226 = vunpack.c.l.b16 %v1192
      %v1227 = vunpack.c.l.b16 %v1193
      %v1228 = vunpack.c.l.b16 %v1194
      %v1229 = vunpack.c.l.b16 %v1195
      %v1230 = vunpack.c.l.b16 %v1196
      %v1231 = vunpack.c.l.b16 %v1197
      %v1232 = vunpack.c.l.b16 %v1198
      %v1233 = vunpack.c.l.b16 %v1199
      %v1234 = vunpack.c.l.b16 %v1200
      %v1235 = vunpack.c.l.b16 %v1201
      %v1236 = vpack.c.b16 %v1221, %v1220
      %v1237 = vpack.c.b16 %v1223, %v1222
      %v1238 = vpack.c.b16 %v1225, %v1224
      %v1239 = vpack.c.b16 %v1227, %v1226
      %v1240 = vpack.c.b16 %v1229, %v1228
      %v1241 = vpack.c.b16 %v1231, %v1230
      %v1242 = vpack.c.b16 %v1233, %v1232
      %v1243 = vpack.c.b16 %v1235, %v1234
      %v1245 = vsel %vm712, %v1203, 0
      %v1248 = vsel %vm712, %v1236, 0
      %v1251 = vsel %vm712, %v1237, 0
      %v1254 = vsel %vm712, %v1238, 0
      %v1257 = vsel %vm712, %v1239, 0
      %v1260 = vsel %vm712, %v1240, 0
      %v1263 = vsel %vm712, %v1241, 0
      %v1266 = vsel %vm712, %v1242, 0
      %v1269 = vsel %vm712, %v1243, 0
      %1271 = vmatprep.subr.bf16.mxu0 0
      %1272 = vmatpush1.bf16.xpose.msra.mxu0 %v1269
      %1273 = vmatprep.subr.bf16.mxu0 0
      %1274 = vmatpush1.bf16.xpose.msra.mxu0 %v1266
      %1275 = vmatprep.subr.bf16.mxu0 0
      %1276 = vmatpush1.bf16.xpose.msra.mxu0 %v1263
      %1277 = vmatprep.subr.bf16.mxu0 0
      %1278 = vmatpush1.bf16.xpose.msra.mxu0 %v1260
      %1279 = vmatprep.subr.bf16.mxu0 0
      %1280 = vmatpush1.bf16.xpose.msra.mxu0 %v1257
      %1281 = vmatprep.subr.bf16.mxu0 0
      %1282 = vmatpush1.bf16.xpose.msra.mxu0 %v1254
      %1283 = vmatprep.subr.bf16.mxu0 0
      %1284 = vmatpush1.bf16.xpose.msra.mxu0 %v1251
      %1285 = vmatprep.subr.bf16.mxu0 0
      %1286 = vmatpush1.bf16.xpose.msra.mxu0 %v1248
      %1287 = vmatprep.subr.bf16.mxu0 0
      %1288 = vmatpush2.bf16.xpose.msra.mxu0 0
      %1289 = vmatprep.subr.bf16.mxu0 0
      %1290 = vmatpush2.bf16.xpose.msra.mxu0 0
      %1291 = vmatprep.subr.bf16.mxu0 0
      %1292 = vmatpush2.bf16.xpose.msra.mxu0 0
      %1293 = vmatprep.subr.bf16.mxu0 0
      %1294 = vmatpush2.bf16.xpose.msra.mxu0 0
      %1295 = vmatprep.subr.bf16.mxu0 0
      %1296 = vmatpush2.bf16.xpose.msra.mxu0 0
      %1297 = vmatprep.subr.bf16.mxu0 0
      %1298 = vmatpush2.bf16.xpose.msra.mxu0 0
      %1299 = vmatprep.subr.bf16.mxu0 0
      %1300 = vmatpush2.bf16.xpose.msra.mxu0 0
      %1301 = vmatprep.subr.bf16.mxu0 0
      %1302 = vmatpush2.bf16.xpose.msra.mxu0 0
      %1303 = vmatprep.mubr.bf16.mxu0 0
      %1304 = vmatmul.mubr.bf16.gmra.mxu0 %v1245
      %v1305 = vpop.f32.mrf.mxu0
      %v1306 = vadd.f32 0.0, %v1305
      %v1307 = vpop.f32.mrf.mxu0
      %v1308 = vpop.f32.mrf.mxu0
      %v1309 = vpop.f32.mrf.mxu0
      %1310 = vdwg.mxu0
      %1311 = vrot.lane.b32.xlu0 %v1306, 1
      %v1312 = vpop.permute.xlu0 %1311
      %v1313 = vsel %vm857, %v1312, 0.0
      %v1314 = vadd.f32 %v1184, %v1313
      %s1315 = scalar_lea.vmem %s5, 28
      %v1316 = vld [vmem:[%s1315] sm:$0xf]
      %v1318 = vsel %vm712, %v1316, 0
      %1320 = vmatprep.subr.bf16.mxu0 0
      %1321 = vmatpush1.bf16.xpose.msra.mxu0 %v1269
      %1322 = vmatprep.subr.bf16.mxu0 0
      %1323 = vmatpush1.bf16.xpose.msra.mxu0 %v1266
      %1324 = vmatprep.subr.bf16.mxu0 0
      %1325 = vmatpush1.bf16.xpose.msra.mxu0 %v1263
      %1326 = vmatprep.subr.bf16.mxu0 0
      %1327 = vmatpush1.bf16.xpose.msra.mxu0 %v1260
      %1328 = vmatprep.subr.bf16.mxu0 0
      %1329 = vmatpush1.bf16.xpose.msra.mxu0 %v1257
      %1330 = vmatprep.subr.bf16.mxu0 0
      %1331 = vmatpush1.bf16.xpose.msra.mxu0 %v1254
      %1332 = vmatprep.subr.bf16.mxu0 0
      %1333 = vmatpush1.bf16.xpose.msra.mxu0 %v1251
      %1334 = vmatprep.subr.bf16.mxu0 0
      %1335 = vmatpush1.bf16.xpose.msra.mxu0 %v1248
      %1336 = vmatprep.subr.bf16.mxu0 0
      %1337 = vmatpush2.bf16.xpose.msra.mxu0 0
      %1338 = vmatprep.subr.bf16.mxu0 0
      %1339 = vmatpush2.bf16.xpose.msra.mxu0 0
      %1340 = vmatprep.subr.bf16.mxu0 0
      %1341 = vmatpush2.bf16.xpose.msra.mxu0 0
      %1342 = vmatprep.subr.bf16.mxu0 0
      %1343 = vmatpush2.bf16.xpose.msra.mxu0 0
      %1344 = vmatprep.subr.bf16.mxu0 0
      %1345 = vmatpush2.bf16.xpose.msra.mxu0 0
      %1346 = vmatprep.subr.bf16.mxu0 0
      %1347 = vmatpush2.bf16.xpose.msra.mxu0 0
      %1348 = vmatprep.subr.bf16.mxu0 0
      %1349 = vmatpush2.bf16.xpose.msra.mxu0 0
      %1350 = vmatprep.subr.bf16.mxu0 0
      %1351 = vmatpush2.bf16.xpose.msra.mxu0 0
      %1352 = vmatprep.mubr.bf16.mxu0 0
      %1353 = vmatmul.mubr.bf16.gmra.mxu0 %v1318
      %v1354 = vpop.f32.mrf.mxu0
      %v1355 = vadd.f32 0.0, %v1354
      %v1356 = vpop.f32.mrf.mxu0
      %v1357 = vpop.f32.mrf.mxu0
      %v1358 = vpop.f32.mrf.mxu0
      %1359 = vdwg.mxu0
      %v1360 = vadd.f32 %v1314, %v1355
      %s1361 = scalar_lea.vmem %s5, 32
      %v1362 = vld [vmem:[%s1361] sm:$0xf]
      %v1364 = vsel %vm712, %v1362, 0
      %1366 = vmatprep.subr.bf16.mxu0 0
      %1367 = vmatpush1.bf16.xpose.msra.mxu0 %v1269
      %1368 = vmatprep.subr.bf16.mxu0 0
      %1369 = vmatpush1.bf16.xpose.msra.mxu0 %v1266
      %1370 = vmatprep.subr.bf16.mxu0 0
      %1371 = vmatpush1.bf16.xpose.msra.mxu0 %v1263
      %1372 = vmatprep.subr.bf16.mxu0 0
      %1373 = vmatpush1.bf16.xpose.msra.mxu0 %v1260
      %1374 = vmatprep.subr.bf16.mxu0 0
      %1375 = vmatpush1.bf16.xpose.msra.mxu0 %v1257
      %1376 = vmatprep.subr.bf16.mxu0 0
      %1377 = vmatpush1.bf16.xpose.msra.mxu0 %v1254
      %1378 = vmatprep.subr.bf16.mxu0 0
      %1379 = vmatpush1.bf16.xpose.msra.mxu0 %v1251
      %1380 = vmatprep.subr.bf16.mxu0 0
      %1381 = vmatpush1.bf16.xpose.msra.mxu0 %v1248
      %1382 = vmatprep.subr.bf16.mxu0 0
      %1383 = vmatpush2.bf16.xpose.msra.mxu0 0
      %1384 = vmatprep.subr.bf16.mxu0 0
      %1385 = vmatpush2.bf16.xpose.msra.mxu0 0
      %1386 = vmatprep.subr.bf16.mxu0 0
      %1387 = vmatpush2.bf16.xpose.msra.mxu0 0
      %1388 = vmatprep.subr.bf16.mxu0 0
      %1389 = vmatpush2.bf16.xpose.msra.mxu0 0
      %1390 = vmatprep.subr.bf16.mxu0 0
      %1391 = vmatpush2.bf16.xpose.msra.mxu0 0
      %1392 = vmatprep.subr.bf16.mxu0 0
      %1393 = vmatpush2.bf16.xpose.msra.mxu0 0
      %1394 = vmatprep.subr.bf16.mxu0 0
      %1395 = vmatpush2.bf16.xpose.msra.mxu0 0
      %1396 = vmatprep.subr.bf16.mxu0 0
      %1397 = vmatpush2.bf16.xpose.msra.mxu0 0
      %1398 = vmatprep.mubr.bf16.mxu0 0
      %1399 = vmatmul.mubr.bf16.gmra.mxu0 %v1364
      %v1400 = vpop.f32.mrf.mxu0
      %v1401 = vadd.f32 0.0, %v1400
      %v1402 = vpop.f32.mrf.mxu0
      %v1403 = vpop.f32.mrf.mxu0
      %v1404 = vpop.f32.mrf.mxu0
      %1405 = vdwg.mxu0
      %1406 = vrot.lane.b32.xlu0 %v1401, 127
      %v1407 = vpop.permute.xlu0 %1406
      %v1408 = vsel %vm958, %v1407, 0.0
      %v1409 = vadd.f32 %v1360, %v1408
      %1410 = vst [vmem:[%s414] sm:$0xff] %v1409
      %p1411 = scmp.lt.s32.totalorder %s21, 1
      %s1412 = scalar_select %p1411, %s21, 1
      %p1413 = scmp.lt.s32.totalorder %s22, 1
      %s1414 = scalar_select %p1413, %s22, 1
      %s1415 = smul.addr %s1412, 2
      %s1416 = sadd.s32 %s1414, %s1415
      %s1417 = smul.addr %s1416, 8
      %s1418 = scalar_lea.vmem %s6, %s1417
      // Predicated region
      $region45: #{bottleneck_forward.3} parent=43 // pred_check
        %p1419 = pneg %p212
      $region46: #{bottleneck_forward.3} parent=43 // pred_check_branch
        %1421 = sbr.rel (%p1419) target = $region48
      $region47: #{bottleneck_forward.3} parent=43 // pred_region
        _
      $region48: #{bottleneck_forward.3} parent=43 // pred_fallthru
        _
    $region44: #{bottleneck_forward.3} parent=5 // pred_fallthru
      _
    %p1422 = scmp.le.s32.totalorder 2, %s12
    // Predicated region
    $region49: #{bottleneck_forward.3} parent=5 // pred_check
      %p1423 = pneg %p1422
    $region50: #{bottleneck_forward.3} parent=5 // pred_check_branch
      %1425 = sbr.rel (%p1423) target = $region52
    $region51: #{bottleneck_forward.3} parent=5 // pred_region
      %s1426 = ssub.s32 %s12, 2
      // Predicated region
      $region53: #{bottleneck_forward.3} parent=51 // pred_check
        %p1427 = pneg %p218
      $region54: #{bottleneck_forward.3} parent=51 // pred_check_branch
        %1429 = sbr.rel (%p1427) target = $region56
      $region55: #{bottleneck_forward.3} parent=51 // pred_region
        %p1430 = scmp.lt.s32.totalorder %s23, 1
        %s1431 = scalar_select %p1430, %s23, 1
        %p1432 = scmp.lt.s32.totalorder %s24, 1
        %s1433 = scalar_select %p1432, %s24, 1
        %s1434 = smul.addr %s1431, 2
        %s1435 = sadd.s32 %s1433, %s1434
        %s1436 = smul.addr %s1435, 8
        %s1437 = scalar_lea.vmem %s6, %s1436
      $region56: #{bottleneck_forward.3} parent=51 // pred_fallthru
        _
    $region52: #{bottleneck_forward.3} parent=5 // pred_fallthru
      _
  $region6: #{bottleneck_forward.3} parent=0 // loop_footer
    %s16 = sadd.s32 1, %s12
  $region7: #{bottleneck_forward.3} parent=0 // loop_footer_branch
    %11 = sbr.rel target = $region3
  $region8: #{bottleneck_forward.3} parent=0 // loop_exit
    _

</llo_original>
